<compile_context>
chip_gen: v7x
topology: tpu7x:2x2x1
jax: 0.10.0
libtpu: 0.0.40
codegen_flags: <defaults>
</compile_context>

<pallas_src>
import math

import jax
import jax.numpy as jnp
from jax import lax
from jax.experimental import pallas as pl
from jax.experimental.pallas import tpu as pltpu

# ---------------- scaled-down model config ----------------
BATCH = 2
IMG = 16            # spatial size (stand-in for 224)
PATCH = 4           # patch size (stand-in for 16)
CHANNELS = 3
GRID = IMG // PATCH
NPATCH = GRID * GRID
SEQ = NPATCH + 1    # +CLS
WIDTH = 64          # transformer width (stand-in for 768)
HEADS = 4
HEAD_DIM = WIDTH // HEADS
LAYERS = 2          # stand-in for 12
MLP = 4 * WIDTH
EMBED = 32          # visual.proj output dim (stand-in for 512)
RED = EMBED // 2
NUM_CLASSES = 12
OUT_PAD = 128       # classifier logits padded to a full 128-lane row (dense vst)
CPP = CHANNELS * PATCH * PATCH
LN_EPS = 1e-5
ATTN_SCALE = 1.0 / math.sqrt(HEAD_DIM)

# Batch tile folded into the matmul M dimension.  On v7x keep >=2 batch tiles so
# both TensorCores get work on the 'parallel' axis; on v5e/v6e (1 TC) one big
# tile is best.  At B=2 we fold everything.
BTILE = BATCH
NB = BATCH // BTILE
ROWS = BTILE * SEQ          # M dimension of all token matmuls

BF16 = jnp.bfloat16
F32 = jnp.float32


# ---------------- in-kernel helpers ----------------
def _ln(x, g, b):
    mu = jnp.mean(x, axis=-1, keepdims=True)
    xc = x - mu
    var = jnp.mean(xc * xc, axis=-1, keepdims=True)
    return xc * lax.rsqrt(var + LN_EPS) * g + b


# ---------------- fused forward kernel ----------------
def _vit_kernel(patches_ref, conv1_w_ref, cls_ref, pos_ref, lnpre_g_ref, lnpre_b_ref,
                ln1_g_ref, ln1_b_ref, wq_ref, wk_ref, wv_ref, bq_ref, bk_ref, bv_ref,
                out_w_ref, out_b_ref, ln2_g_ref, ln2_b_ref,
                fc_w_ref, fc_b_ref, cp_w_ref, cp_b_ref,
                lnpost_g_ref, lnpost_b_ref, vproj_ref,
                c1_w_ref, c1_b_ref, c2_w_ref, c2_b_ref,
                o_ref, resid_ref, attn_ref):
    l = pl.program_id(1)

    # ---- layer 0: patch-embed matmul + CLS + positional add + ln_pre -> VMEM ----
    @pl.when(l == 0)
    def _embed():
        tok = jnp.dot(patches_ref[...].astype(BF16), conv1_w_ref[...],
                      preferred_element_type=F32)               # (BTILE*NPATCH, WIDTH)
        pos = pos_ref[...]
        g, b = lnpre_g_ref[...], lnpre_b_ref[...]
        cls_n = _ln(cls_ref[...] + pos[0:1, :], g, b)           # (1, WIDTH)
        for bi in range(BTILE):                                 # direct stores, no concat
            resid_ref[bi * SEQ: bi * SEQ + 1, :] = cls_n
            resid_ref[bi * SEQ + 1: (bi + 1) * SEQ, :] = _ln(
                tok[bi * NPATCH:(bi + 1) * NPATCH, :] + pos[1:, :], g, b)

    x = resid_ref[...]                                          # (ROWS, WIDTH) f32

    # ---- attention branch: ln1 -> Q/K/V -> per-(image,head) softmax -> out-proj ----
    h = _ln(x, ln1_g_ref[0], ln1_b_ref[0]).astype(BF16)
    q = (jnp.dot(h, wq_ref[0], preferred_element_type=F32) + bq_ref[0]) * ATTN_SCALE
    k = jnp.dot(h, wk_ref[0], preferred_element_type=F32) + bk_ref[0]
    v = jnp.dot(h, wv_ref[0], preferred_element_type=F32) + bv_ref[0]
    qb, kb, vb = q.astype(BF16), k.astype(BF16), v.astype(BF16)

    for bi in range(BTILE):                 # static unroll: attention is per-image
        r0, r1 = bi * SEQ, (bi + 1) * SEQ
        for hd in range(HEADS):
            c0, c1 = hd * HEAD_DIM, (hd + 1) * HEAD_DIM
            qh, kh, vh = qb[r0:r1, c0:c1], kb[r0:r1, c0:c1], vb[r0:r1, c0:c1]
            # contract q,k on their last dims: no explicit K transpose (no XLU work)
            s = lax.dot_general(qh, kh, (((1,), (1,)), ((), ())),
                                preferred_element_type=F32)     # (SEQ, SEQ)
            s = s - jnp.max(s, axis=-1, keepdims=True)
            p = jnp.exp(s)
            p = p * pl.reciprocal(jnp.sum(p, axis=-1, keepdims=True), approx=True)
            oh = jnp.dot(p.astype(BF16), vh, preferred_element_type=F32)
            attn_ref[r0:r1, c0:c1] = oh                         # gather heads in VMEM

    # single K=WIDTH out-projection over all heads and all images
    attn_out = jnp.dot(attn_ref[...].astype(BF16), out_w_ref[0],
                       preferred_element_type=F32)
    x = x + attn_out + out_b_ref[0]                             # residual + bias fused

    # ---- MLP branch: ln2 -> fc (QuickGELU, bf16) -> c_proj, residual fused ----
    h2 = _ln(x, ln2_g_ref[0], ln2_b_ref[0]).astype(BF16)
    f = (jnp.dot(h2, fc_w_ref[0], preferred_element_type=F32) + fc_b_ref[0]).astype(BF16)
    f = f * jax.nn.sigmoid(1.702 * f)                           # QuickGELU (bf16 EUP path)
    x = x + jnp.dot(f, cp_w_ref[0], preferred_element_type=F32) + cp_b_ref[0]
    resid_ref[...] = x                                          # carry to next layer

    # ---- last layer: ln_post(CLS) + visual proj + classifier (f32, == .float()) ----
    @pl.when(l == LAYERS - 1)
    def _head():
        cls2d = jnp.concatenate(
            [x[bi * SEQ: bi * SEQ + 1, :] for bi in range(BTILE)], axis=0)  # tiny (BTILE,WIDTH)
        hh = _ln(cls2d, lnpost_g_ref[...], lnpost_b_ref[...])
        emb = jnp.dot(hh.astype(BF16), vproj_ref[...], preferred_element_type=F32)
        h1 = jnp.maximum(
            jnp.dot(emb, c1_w_ref[...], preferred_element_type=F32) + c1_b_ref[...], 0.0)
        # TODO(synk): Dropout(p=0.5) is identity in eval mode; training-mode mask
        # (pltpu.prng_random_bits) not implemented.
        o_ref[...] = jnp.dot(h1, c2_w_ref[...], preferred_element_type=F32) + c2_b_ref[...]


def vit_forward(prep, patches_flat):
    inv = lambda shape: pl.BlockSpec(shape, lambda b, l: (0,) * len(shape))   # grid-invariant
    lay = lambda m, n: pl.BlockSpec((1, m, n), lambda b, l: (l, 0, 0))        # layer-streamed

    out_pad = pl.pallas_call(
        _vit_kernel,
        out_shape=jax.ShapeDtypeStruct((BATCH, OUT_PAD), F32),
        grid=(NB, LAYERS),
        in_specs=[
            pl.BlockSpec((BTILE * NPATCH, CPP), lambda b, l: (b, 0)),   # patches
            inv((CPP, WIDTH)),                                          # conv1_w
            inv((1, WIDTH)),                                            # cls token
            inv((SEQ, WIDTH)),                                          # positional emb
            inv((1, WIDTH)), inv((1, WIDTH)),                           # ln_pre g/b
            lay(1, WIDTH), lay(1, WIDTH),                               # ln1 g/b
            lay(WIDTH, WIDTH), lay(WIDTH, WIDTH), lay(WIDTH, WIDTH),    # Wq / Wk / Wv
            lay(1, WIDTH), lay(1, WIDTH), lay(1, WIDTH),                # bq / bk / bv
            lay(WIDTH, WIDTH), lay(1, WIDTH),                           # out-proj w/b
            lay(1, WIDTH), lay(1, WIDTH),                               # ln2 g/b
            lay(WIDTH, MLP), lay(1, MLP),                               # fc w/b
            lay(MLP, WIDTH), lay(1, WIDTH),                             # c_proj w/b
            inv((1, WIDTH)), inv((1, WIDTH)),                           # ln_post g/b
            inv((WIDTH, EMBED)),                                        # visual proj
            inv((EMBED, RED)), inv((1, RED)),                           # classifier L1
            inv((RED, OUT_PAD)), inv((1, OUT_PAD)),                     # classifier L2 (padded)
        ],
        out_specs=pl.BlockSpec((BTILE, OUT_PAD), lambda b, l: (b, 0)),
        scratch_shapes=[
            pltpu.VMEM((ROWS, WIDTH), F32),   # residual stream (resident across layer axis)
            pltpu.VMEM((ROWS, WIDTH), F32),   # per-head attention output slab
        ],
        compiler_params=pltpu.CompilerParams(
            dimension_semantics=("parallel", "arbitrary")),
    )(patches_flat,
      prep["conv1_w"], prep["cls"], prep["pos"], prep["ln_pre_g"], prep["ln_pre_b"],
      prep["ln1_g"], prep["ln1_b"], prep["wq"], prep["wk"], prep["wv"],
      prep["bq"], prep["bk"], prep["bv"], prep["out_w"], prep["out_b"],
      prep["ln2_g"], prep["ln2_b"], prep["fc_w"], prep["fc_b"],
      prep["cproj_w"], prep["cproj_b"],
      prep["ln_post_g"], prep["ln_post_b"], prep["vproj_w"],
      prep["c1_w"], prep["c1_b"], prep["c2_w"], prep["c2_b"])
    return out_pad[:, :NUM_CLASSES]


# ---------------- model glue ----------------
def patchify(x, patch):
    # NCHW image -> [B*num_patches, C*patch*patch]; channel-major flattening
    # matching the conv1 weight's fan-in ordering.
    # TODO(synk): at production 224x224 scale, fuse this gather into the embed
    # step (BlockSpec over patch-grid rows) to avoid the extra HBM transpose pass.
    B, C, H, W = x.shape
    gh, gw = H // patch, W // patch
    x = x.reshape(B, C, gh, patch, gw, patch)
    x = x.transpose(0, 2, 4, 1, 3, 5)                           # [B, gh, gw, C, p, p]
    return x.reshape(B * gh * gw, C * patch * patch)


def forward(prep, img):
    patches = patchify(img, PATCH)                              # [B*NP, CPP]
    return vit_forward(prep, patches)                           # [B, NUM_CLASSES]


# ---------------- deterministic parameter init & prep ----------------
def _xavier_uniform(key, fan_in, fan_out):
    limit = math.sqrt(6.0 / (fan_in + fan_out))
    return jax.random.uniform(key, (fan_in, fan_out), F32, -limit, limit)


def init_params(key):
    def nrm(k, shape, scale=0.02):
        return scale * jax.random.normal(k, shape, dtype=F32)

    keys = iter(jax.random.split(key, 6 + LAYERS * 4))
    p = {
        "conv1_w": nrm(next(keys), (CPP, WIDTH)),               # bias-free conv patch embed
        "cls": nrm(next(keys), (WIDTH,)),
        "pos": nrm(next(keys), (SEQ, WIDTH)),
        "ln_pre_g": jnp.ones((WIDTH,), F32),
        "ln_pre_b": jnp.zeros((WIDTH,), F32),
        "ln_post_g": jnp.ones((WIDTH,), F32),
        "ln_post_b": jnp.zeros((WIDTH,), F32),
        "vproj_w": nrm(next(keys), (WIDTH, EMBED)),             # bias-free CLIP proj
        # classifier == 0 branch: Linear(E, E//2) xavier / zero-bias, ReLU, Dropout, Linear
        "c1_w": _xavier_uniform(next(keys), EMBED, RED),
        "c1_b": jnp.zeros((RED,), F32),
        "c2_w": _xavier_uniform(next(keys), RED, NUM_CLASSES),
        "c2_b": jnp.zeros((NUM_CLASSES,), F32),
        "layers": [],
    }
    for _ in range(LAYERS):
        p["layers"].append({
            "ln1_g": jnp.ones((WIDTH,), F32),
            "ln1_b": jnp.zeros((WIDTH,), F32),
            "qkv_w": nrm(next(keys), (WIDTH, 3 * WIDTH)),
            "qkv_b": jnp.zeros((3 * WIDTH,), F32),
            "out_w": nrm(next(keys), (WIDTH, WIDTH)),
            "out_b": jnp.zeros((WIDTH,), F32),
            "ln2_g": jnp.ones((WIDTH,), F32),
            "ln2_b": jnp.zeros((WIDTH,), F32),
            "fc_w": nrm(next(keys), (WIDTH, MLP)),
            "fc_b": jnp.zeros((MLP,), F32),
            "cproj_w": nrm(next(keys), (MLP, WIDTH)),
            "cproj_b": jnp.zeros((WIDTH,), F32),
        })
    return p


def prepare_params(p):
    """Stack per-layer weights to [LAYERS, ...], split fused qkv into Wq/Wk/Wv,
    pre-cast MXU weights to bf16 once, reshape 1-D vectors to (1, N) lane rows,
    and pad the classifier logits to 128 lanes (sliced off outside the kernel)."""
    row = lambda a: a.reshape(1, -1)
    bf = lambda a: a.astype(BF16)
    L = p["layers"]

    def stack_row(name, sl=slice(None)):
        return jnp.stack([row(lp[name][sl]) for lp in L])       # (LAYERS, 1, N) f32

    def stack_mat(name, sl=slice(None)):
        return jnp.stack([bf(lp[name][:, sl]) for lp in L])     # (LAYERS, M, N) bf16

    c2_w = jnp.zeros((RED, OUT_PAD), F32).at[:, :NUM_CLASSES].set(p["c2_w"])
    c2_b = jnp.zeros((1, OUT_PAD), F32).at[:, :NUM_CLASSES].set(row(p["c2_b"]))

    return {
        "conv1_w": bf(p["conv1_w"]),
        "cls": row(p["cls"]),
        "pos": p["pos"],
        "ln_pre_g": row(p["ln_pre_g"]), "ln_pre_b": row(p["ln_pre_b"]),
        "ln_post_g": row(p["ln_post_g"]), "ln_post_b": row(p["ln_post_b"]),
        "vproj_w": bf(p["vproj_w"]),
        "c1_w": p["c1_w"], "c1_b": row(p["c1_b"]),    # classifier kept f32 (.float())
        "c2_w": c2_w, "c2_b": c2_b,
        "ln1_g": stack_row("ln1_g"), "ln1_b": stack_row("ln1_b"),
        "wq": stack_mat("qkv_w", slice(0, WIDTH)),
        "wk": stack_mat("qkv_w", slice(WIDTH, 2 * WIDTH)),
        "wv": stack_mat("qkv_w", slice(2 * WIDTH, 3 * WIDTH)),
        "bq": stack_row("qkv_b", slice(0, WIDTH)),
        "bk": stack_row("qkv_b", slice(WIDTH, 2 * WIDTH)),
        "bv": stack_row("qkv_b", slice(2 * WIDTH, 3 * WIDTH)),
        "out_w": stack_mat("out_w"), "out_b": stack_row("out_b"),
        "ln2_g": stack_row("ln2_g"), "ln2_b": stack_row("ln2_b"),
        "fc_w": stack_mat("fc_w"), "fc_b": stack_row("fc_b"),
        "cproj_w": stack_mat("cproj_w"), "cproj_b": stack_row("cproj_b"),
    }


if __name__ == "__main__":
    key = jax.random.PRNGKey(0)
    pkey, xkey = jax.random.split(key)
    params = prepare_params(init_params(pkey))
    x = jax.random.normal(xkey, (BATCH, CHANNELS, IMG, IMG), dtype=F32)  # NCHW

    logits = jax.jit(forward)(params, x)
    logits = jax.block_until_ready(logits)

    assert logits.shape == (BATCH, NUM_CLASSES), logits.shape
    assert logits.dtype == F32
    assert bool(jnp.all(jnp.isfinite(logits)))
    print("KERNEL_OK")
</pallas_src>

<mosaic_0001>
module attributes {stable_mosaic.version = 11 : i64} {
  func.func @_vit_kernel(%arg0: i32, %arg1: i32, %arg2: memref<32x48xf32, #tpu.memory_space<vmem>>, %arg3: memref<48x64xbf16, #tpu.memory_space<vmem>>, %arg4: memref<1x64xf32, #tpu.memory_space<vmem>>, %arg5: memref<17x64xf32, #tpu.memory_space<vmem>>, %arg6: memref<1x64xf32, #tpu.memory_space<vmem>>, %arg7: memref<1x64xf32, #tpu.memory_space<vmem>>, %arg8: memref<1x1x64xf32, #tpu.memory_space<vmem>>, %arg9: memref<1x1x64xf32, #tpu.memory_space<vmem>>, %arg10: memref<1x64x64xbf16, #tpu.memory_space<vmem>>, %arg11: memref<1x64x64xbf16, #tpu.memory_space<vmem>>, %arg12: memref<1x64x64xbf16, #tpu.memory_space<vmem>>, %arg13: memref<1x1x64xf32, #tpu.memory_space<vmem>>, %arg14: memref<1x1x64xf32, #tpu.memory_space<vmem>>, %arg15: memref<1x1x64xf32, #tpu.memory_space<vmem>>, %arg16: memref<1x64x64xbf16, #tpu.memory_space<vmem>>, %arg17: memref<1x1x64xf32, #tpu.memory_space<vmem>>, %arg18: memref<1x1x64xf32, #tpu.memory_space<vmem>>, %arg19: memref<1x1x64xf32, #tpu.memory_space<vmem>>, %arg20: memref<1x64x256xbf16, #tpu.memory_space<vmem>>, %arg21: memref<1x1x256xf32, #tpu.memory_space<vmem>>, %arg22: memref<1x256x64xbf16, #tpu.memory_space<vmem>>, %arg23: memref<1x1x64xf32, #tpu.memory_space<vmem>>, %arg24: memref<1x64xf32, #tpu.memory_space<vmem>>, %arg25: memref<1x64xf32, #tpu.memory_space<vmem>>, %arg26: memref<64x32xbf16, #tpu.memory_space<vmem>>, %arg27: memref<32x16xf32, #tpu.memory_space<vmem>>, %arg28: memref<1x16xf32, #tpu.memory_space<vmem>>, %arg29: memref<16x128xf32, #tpu.memory_space<vmem>>, %arg30: memref<1x128xf32, #tpu.memory_space<vmem>>, %arg31: memref<2x128xf32, #tpu.memory_space<vmem>>, %arg32: memref<34x64xf32, #tpu.memory_space<vmem>>, %arg33: memref<34x64xf32, #tpu.memory_space<vmem>>) attributes {dimension_semantics = [#tpu.dimension_semantics<parallel>, #tpu.dimension_semantics<arbitrary>], iteration_bounds = array<i64: 1, 2>, scalar_prefetch = 0 : i64, scratch_operands = 2 : i64, tpu.core_type = #tpu.core_type<tc>, window_params = [{transform_indices = @transform_0, window_bounds = array<i64: 32, 48>}, {pipeline_mode = #tpu.pipeline_mode<synchronous>, transform_indices = @transform_1, window_bounds = array<i64: 48, 64>}, {pipeline_mode = #tpu.pipeline_mode<synchronous>, transform_indices = @transform_2, window_bounds = array<i64: 1, 64>}, {pipeline_mode = #tpu.pipeline_mode<synchronous>, transform_indices = @transform_3, window_bounds = array<i64: 17, 64>}, {pipeline_mode = #tpu.pipeline_mode<synchronous>, transform_indices = @transform_4, window_bounds = array<i64: 1, 64>}, {pipeline_mode = #tpu.pipeline_mode<synchronous>, transform_indices = @transform_5, window_bounds = array<i64: 1, 64>}, {transform_indices = @transform_6, window_bounds = array<i64: 1, 1, 64>}, {transform_indices = @transform_7, window_bounds = array<i64: 1, 1, 64>}, {transform_indices = @transform_8, window_bounds = array<i64: 1, 64, 64>}, {transform_indices = @transform_9, window_bounds = array<i64: 1, 64, 64>}, {transform_indices = @transform_10, window_bounds = array<i64: 1, 64, 64>}, {transform_indices = @transform_11, window_bounds = array<i64: 1, 1, 64>}, {transform_indices = @transform_12, window_bounds = array<i64: 1, 1, 64>}, {transform_indices = @transform_13, window_bounds = array<i64: 1, 1, 64>}, {transform_indices = @transform_14, window_bounds = array<i64: 1, 64, 64>}, {transform_indices = @transform_15, window_bounds = array<i64: 1, 1, 64>}, {transform_indices = @transform_16, window_bounds = array<i64: 1, 1, 64>}, {transform_indices = @transform_17, window_bounds = array<i64: 1, 1, 64>}, {transform_indices = @transform_18, window_bounds = array<i64: 1, 64, 256>}, {transform_indices = @transform_19, window_bounds = array<i64: 1, 1, 256>}, {transform_indices = @transform_20, window_bounds = array<i64: 1, 256, 64>}, {transform_indices = @transform_21, window_bounds = array<i64: 1, 1, 64>}, {pipeline_mode = #tpu.pipeline_mode<synchronous>, transform_indices = @transform_22, window_bounds = array<i64: 1, 64>}, {pipeline_mode = #tpu.pipeline_mode<synchronous>, transform_indices = @transform_23, window_bounds = array<i64: 1, 64>}, {pipeline_mode = #tpu.pipeline_mode<synchronous>, transform_indices = @transform_24, window_bounds = array<i64: 64, 32>}, {pipeline_mode = #tpu.pipeline_mode<synchronous>, transform_indices = @transform_25, window_bounds = array<i64: 32, 16>}, {pipeline_mode = #tpu.pipeline_mode<synchronous>, transform_indices = @transform_26, window_bounds = array<i64: 1, 16>}, {pipeline_mode = #tpu.pipeline_mode<synchronous>, transform_indices = @transform_27, window_bounds = array<i64: 16, 128>}, {pipeline_mode = #tpu.pipeline_mode<synchronous>, transform_indices = @transform_28, window_bounds = array<i64: 1, 128>}, {transform_indices = @transform_29, window_bounds = array<i64: 2, 128>}]} {
    %c0_i32 = arith.constant 0 : i32
    %0 = arith.cmpi eq, %arg1, %c0_i32 : i32
    %1 = arith.extui %0 : i1 to i32
    %c0_i32_0 = arith.constant 0 : i32
    %2 = arith.cmpi ne, %1, %c0_i32_0 : i32
    scf.if %2 {
      %c0_117 = arith.constant 0 : index
      %c0_118 = arith.constant 0 : index
      %254 = vector.load %arg2[%c0_117, %c0_118] : memref<32x48xf32, #tpu.memory_space<vmem>>, vector<32x48xf32>
      %255 = arith.truncf %254 : vector<32x48xf32> to vector<32x48xbf16>
      %c0_119 = arith.constant 0 : index
      %c0_120 = arith.constant 0 : index
      %256 = vector.load %arg3[%c0_119, %c0_120] : memref<48x64xbf16, #tpu.memory_space<vmem>>, vector<48x64xbf16>
      %cst_121 = arith.constant dense<0.000000e+00> : vector<32x64xf32>
      %257 = tpu.matmul %255, %256, %cst_121 {dimension_numbers = #tpu.dot_dimension_numbers<[1], [0], [0], [1], [0, 0, 1, 1], [], []>} : vector<32x48xbf16>, vector<48x64xbf16>, vector<32x64xf32> -> vector<32x64xf32>
      %c0_122 = arith.constant 0 : index
      %c0_123 = arith.constant 0 : index
      %258 = vector.load %arg5[%c0_122, %c0_123] : memref<17x64xf32, #tpu.memory_space<vmem>>, vector<17x64xf32>
      %c0_124 = arith.constant 0 : index
      %c0_125 = arith.constant 0 : index
      %259 = vector.load %arg6[%c0_124, %c0_125] : memref<1x64xf32, #tpu.memory_space<vmem>>, vector<1x64xf32>
      %c0_126 = arith.constant 0 : index
      %c0_127 = arith.constant 0 : index
      %260 = vector.load %arg7[%c0_126, %c0_127] : memref<1x64xf32, #tpu.memory_space<vmem>>, vector<1x64xf32>
      %c0_128 = arith.constant 0 : index
      %c0_129 = arith.constant 0 : index
      %261 = vector.load %arg4[%c0_128, %c0_129] : memref<1x64xf32, #tpu.memory_space<vmem>>, vector<1x64xf32>
      %262 = vector.extract_strided_slice %258 {offsets = [0, 0], sizes = [1, 64], strides = [1, 1]} : vector<17x64xf32> to vector<1x64xf32>
      %263 = arith.addf %261, %262 : vector<1x64xf32>
      %cst_130 = arith.constant dense<0.000000e+00> : vector<1xf32>
      %264 = vector.multi_reduction <add>, %263, %cst_130 [1] : vector<1x64xf32> to vector<1xf32>
      %265 = vector.shape_cast %264 : vector<1xf32> to vector<1x1xf32>
      %cst_131 = arith.constant 6.400000e+01 : f32
      %266 = vector.broadcast %cst_131 : f32 to vector<1x1xf32>
      %267 = arith.divf %265, %266 : vector<1x1xf32>
      %268 = vector.broadcast %267 : vector<1x1xf32> to vector<1x64xf32>
      %269 = arith.subf %263, %268 : vector<1x64xf32>
      %270 = arith.mulf %269, %269 : vector<1x64xf32>
      %cst_132 = arith.constant dense<0.000000e+00> : vector<1xf32>
      %271 = vector.multi_reduction <add>, %270, %cst_132 [1] : vector<1x64xf32> to vector<1xf32>
      %272 = vector.shape_cast %271 : vector<1xf32> to vector<1x1xf32>
      %cst_133 = arith.constant 6.400000e+01 : f32
      %273 = vector.broadcast %cst_133 : f32 to vector<1x1xf32>
      %274 = arith.divf %272, %273 : vector<1x1xf32>
      %cst_134 = arith.constant 9.99999974E-6 : f32
      %275 = vector.broadcast %cst_134 : f32 to vector<1x1xf32>
      %276 = arith.addf %274, %275 : vector<1x1xf32>
      %277 = math.rsqrt %276 : vector<1x1xf32>
      %278 = vector.broadcast %277 : vector<1x1xf32> to vector<1x64xf32>
      %279 = arith.mulf %269, %278 : vector<1x64xf32>
      %280 = arith.mulf %279, %259 : vector<1x64xf32>
      %281 = arith.addf %280, %260 : vector<1x64xf32>
      %c0_135 = arith.constant 0 : index
      %c0_136 = arith.constant 0 : index
      %282 = vector.load %arg32[%c0_135, %c0_136] : memref<34x64xf32, #tpu.memory_space<vmem>>, vector<1x64xf32>
      tpu.vector_store %arg32[%c0_135, %c0_136], %281 {strides = array<i32>} : memref<34x64xf32, #tpu.memory_space<vmem>>, vector<1x64xf32>,
      %283 = vector.extract_strided_slice %257 {offsets = [0, 0], sizes = [16, 64], strides = [1, 1]} : vector<32x64xf32> to vector<16x64xf32>
      %284 = vector.extract_strided_slice %258 {offsets = [1, 0], sizes = [16, 64], strides = [1, 1]} : vector<17x64xf32> to vector<16x64xf32>
      %285 = arith.addf %283, %284 : vector<16x64xf32>
      %cst_137 = arith.constant dense<0.000000e+00> : vector<16xf32>
      %286 = vector.multi_reduction <add>, %285, %cst_137 [1] : vector<16x64xf32> to vector<16xf32>
      %287 = vector.shape_cast %286 : vector<16xf32> to vector<16x1xf32>
      %cst_138 = arith.constant 6.400000e+01 : f32
      %288 = vector.broadcast %cst_138 : f32 to vector<16x1xf32>
      %289 = arith.divf %287, %288 : vector<16x1xf32>
      %290 = vector.broadcast %289 : vector<16x1xf32> to vector<16x64xf32>
      %291 = arith.subf %285, %290 : vector<16x64xf32>
      %292 = arith.mulf %291, %291 : vector<16x64xf32>
      %cst_139 = arith.constant dense<0.000000e+00> : vector<16xf32>
      %293 = vector.multi_reduction <add>, %292, %cst_139 [1] : vector<16x64xf32> to vector<16xf32>
      %294 = vector.shape_cast %293 : vector<16xf32> to vector<16x1xf32>
      %cst_140 = arith.constant 6.400000e+01 : f32
      %295 = vector.broadcast %cst_140 : f32 to vector<16x1xf32>
      %296 = arith.divf %294, %295 : vector<16x1xf32>
      %cst_141 = arith.constant 9.99999974E-6 : f32
      %297 = vector.broadcast %cst_141 : f32 to vector<16x1xf32>
      %298 = arith.addf %296, %297 : vector<16x1xf32>
      %299 = math.rsqrt %298 : vector<16x1xf32>
      %300 = vector.broadcast %299 : vector<16x1xf32> to vector<16x64xf32>
      %301 = arith.mulf %291, %300 : vector<16x64xf32>
      %302 = vector.broadcast %259 : vector<1x64xf32> to vector<16x64xf32>
      %303 = arith.mulf %301, %302 : vector<16x64xf32>
      %304 = vector.broadcast %260 : vector<1x64xf32> to vector<16x64xf32>
      %305 = arith.addf %303, %304 : vector<16x64xf32>
      %c1 = arith.constant 1 : index
      %c0_142 = arith.constant 0 : index
      %306 = vector.load %arg32[%c1, %c0_142] : memref<34x64xf32, #tpu.memory_space<vmem>>, vector<16x64xf32>
      tpu.vector_store %arg32[%c1, %c0_142], %305 {strides = array<i32>} : memref<34x64xf32, #tpu.memory_space<vmem>>, vector<16x64xf32>,
      %c17_143 = arith.constant 17 : index
      %c0_144 = arith.constant 0 : index
      %307 = vector.load %arg32[%c17_143, %c0_144] : memref<34x64xf32, #tpu.memory_space<vmem>>, vector<1x64xf32>
      tpu.vector_store %arg32[%c17_143, %c0_144], %281 {strides = array<i32>} : memref<34x64xf32, #tpu.memory_space<vmem>>, vector<1x64xf32>,
      %308 = vector.extract_strided_slice %257 {offsets = [16, 0], sizes = [16, 64], strides = [1, 1]} : vector<32x64xf32> to vector<16x64xf32>
      %309 = vector.extract_strided_slice %258 {offsets = [1, 0], sizes = [16, 64], strides = [1, 1]} : vector<17x64xf32> to vector<16x64xf32>
      %310 = arith.addf %308, %309 : vector<16x64xf32>
      %cst_145 = arith.constant dense<0.000000e+00> : vector<16xf32>
      %311 = vector.multi_reduction <add>, %310, %cst_145 [1] : vector<16x64xf32> to vector<16xf32>
      %312 = vector.shape_cast %311 : vector<16xf32> to vector<16x1xf32>
      %cst_146 = arith.constant 6.400000e+01 : f32
      %313 = vector.broadcast %cst_146 : f32 to vector<16x1xf32>
      %314 = arith.divf %312, %313 : vector<16x1xf32>
      %315 = vector.broadcast %314 : vector<16x1xf32> to vector<16x64xf32>
      %316 = arith.subf %310, %315 : vector<16x64xf32>
      %317 = arith.mulf %316, %316 : vector<16x64xf32>
      %cst_147 = arith.constant dense<0.000000e+00> : vector<16xf32>
      %318 = vector.multi_reduction <add>, %317, %cst_147 [1] : vector<16x64xf32> to vector<16xf32>
      %319 = vector.shape_cast %318 : vector<16xf32> to vector<16x1xf32>
      %cst_148 = arith.constant 6.400000e+01 : f32
      %320 = vector.broadcast %cst_148 : f32 to vector<16x1xf32>
      %321 = arith.divf %319, %320 : vector<16x1xf32>
      %cst_149 = arith.constant 9.99999974E-6 : f32
      %322 = vector.broadcast %cst_149 : f32 to vector<16x1xf32>
      %323 = arith.addf %321, %322 : vector<16x1xf32>
      %324 = math.rsqrt %323 : vector<16x1xf32>
      %325 = vector.broadcast %324 : vector<16x1xf32> to vector<16x64xf32>
      %326 = arith.mulf %316, %325 : vector<16x64xf32>
      %327 = vector.broadcast %259 : vector<1x64xf32> to vector<16x64xf32>
      %328 = arith.mulf %326, %327 : vector<16x64xf32>
      %329 = vector.broadcast %260 : vector<1x64xf32> to vector<16x64xf32>
      %330 = arith.addf %328, %329 : vector<16x64xf32>
      %c18 = arith.constant 18 : index
      %c0_150 = arith.constant 0 : index
      %331 = vector.load %arg32[%c18, %c0_150] : memref<34x64xf32, #tpu.memory_space<vmem>>, vector<16x64xf32>
      tpu.vector_store %arg32[%c18, %c0_150], %330 {strides = array<i32>} : memref<34x64xf32, #tpu.memory_space<vmem>>, vector<16x64xf32>,
    } else {
    }
    %c0 = arith.constant 0 : index
    %c0_1 = arith.constant 0 : index
    %3 = vector.load %arg32[%c0, %c0_1] : memref<34x64xf32, #tpu.memory_space<vmem>>, vector<34x64xf32>
    %c0_2 = arith.constant 0 : index
    %c0_3 = arith.constant 0 : index
    %c0_4 = arith.constant 0 : index
    %4 = vector.load %arg8[%c0_2, %c0_3, %c0_4] : memref<1x1x64xf32, #tpu.memory_space<vmem>>, vector<1x1x64xf32>
    %5 = vector.shape_cast %4 : vector<1x1x64xf32> to vector<1x64xf32>
    %c0_5 = arith.constant 0 : index
    %c0_6 = arith.constant 0 : index
    %c0_7 = arith.constant 0 : index
    %6 = vector.load %arg9[%c0_5, %c0_6, %c0_7] : memref<1x1x64xf32, #tpu.memory_space<vmem>>, vector<1x1x64xf32>
    %7 = vector.shape_cast %6 : vector<1x1x64xf32> to vector<1x64xf32>
    %cst = arith.constant dense<0.000000e+00> : vector<34xf32>
    %8 = vector.multi_reduction <add>, %3, %cst [1] : vector<34x64xf32> to vector<34xf32>
    %9 = vector.shape_cast %8 : vector<34xf32> to vector<34x1xf32>
    %cst_8 = arith.constant 6.400000e+01 : f32
    %10 = vector.broadcast %cst_8 : f32 to vector<34x1xf32>
    %11 = arith.divf %9, %10 : vector<34x1xf32>
    %12 = vector.broadcast %11 : vector<34x1xf32> to vector<34x64xf32>
    %13 = arith.subf %3, %12 : vector<34x64xf32>
    %14 = arith.mulf %13, %13 : vector<34x64xf32>
    %cst_9 = arith.constant dense<0.000000e+00> : vector<34xf32>
    %15 = vector.multi_reduction <add>, %14, %cst_9 [1] : vector<34x64xf32> to vector<34xf32>
    %16 = vector.shape_cast %15 : vector<34xf32> to vector<34x1xf32>
    %cst_10 = arith.constant 6.400000e+01 : f32
    %17 = vector.broadcast %cst_10 : f32 to vector<34x1xf32>
    %18 = arith.divf %16, %17 : vector<34x1xf32>
    %cst_11 = arith.constant 9.99999974E-6 : f32
    %19 = vector.broadcast %cst_11 : f32 to vector<34x1xf32>
    %20 = arith.addf %18, %19 : vector<34x1xf32>
    %21 = math.rsqrt %20 : vector<34x1xf32>
    %22 = vector.broadcast %21 : vector<34x1xf32> to vector<34x64xf32>
    %23 = arith.mulf %13, %22 : vector<34x64xf32>
    %24 = vector.broadcast %5 : vector<1x64xf32> to vector<34x64xf32>
    %25 = arith.mulf %23, %24 : vector<34x64xf32>
    %26 = vector.broadcast %7 : vector<1x64xf32> to vector<34x64xf32>
    %27 = arith.addf %25, %26 : vector<34x64xf32>
    %28 = arith.truncf %27 : vector<34x64xf32> to vector<34x64xbf16>
    %c0_12 = arith.constant 0 : index
    %c0_13 = arith.constant 0 : index
    %c0_14 = arith.constant 0 : index
    %29 = vector.load %arg10[%c0_12, %c0_13, %c0_14] : memref<1x64x64xbf16, #tpu.memory_space<vmem>>, vector<1x64x64xbf16>
    %30 = vector.shape_cast %29 : vector<1x64x64xbf16> to vector<64x64xbf16>
    %cst_15 = arith.constant dense<0.000000e+00> : vector<34x64xf32>
    %31 = tpu.matmul %28, %30, %cst_15 {dimension_numbers = #tpu.dot_dimension_numbers<[1], [0], [0], [1], [0, 0, 1, 1], [], []>} : vector<34x64xbf16>, vector<64x64xbf16>, vector<34x64xf32> -> vector<34x64xf32>
    %c0_16 = arith.constant 0 : index
    %c0_17 = arith.constant 0 : index
    %c0_18 = arith.constant 0 : index
    %32 = vector.load %arg13[%c0_16, %c0_17, %c0_18] : memref<1x1x64xf32, #tpu.memory_space<vmem>>, vector<1x1x64xf32>
    %33 = vector.shape_cast %32 : vector<1x1x64xf32> to vector<1x64xf32>
    %34 = vector.broadcast %33 : vector<1x64xf32> to vector<34x64xf32>
    %35 = arith.addf %31, %34 : vector<34x64xf32>
    %cst_19 = arith.constant 2.500000e-01 : f32
    %36 = vector.broadcast %cst_19 : f32 to vector<34x64xf32>
    %37 = arith.mulf %35, %36 : vector<34x64xf32>
    %c0_20 = arith.constant 0 : index
    %c0_21 = arith.constant 0 : index
    %c0_22 = arith.constant 0 : index
    %38 = vector.load %arg11[%c0_20, %c0_21, %c0_22] : memref<1x64x64xbf16, #tpu.memory_space<vmem>>, vector<1x64x64xbf16>
    %39 = vector.shape_cast %38 : vector<1x64x64xbf16> to vector<64x64xbf16>
    %cst_23 = arith.constant dense<0.000000e+00> : vector<34x64xf32>
    %40 = tpu.matmul %28, %39, %cst_23 {dimension_numbers = #tpu.dot_dimension_numbers<[1], [0], [0], [1], [0, 0, 1, 1], [], []>} : vector<34x64xbf16>, vector<64x64xbf16>, vector<34x64xf32> -> vector<34x64xf32>
    %c0_24 = arith.constant 0 : index
    %c0_25 = arith.constant 0 : index
    %c0_26 = arith.constant 0 : index
    %41 = vector.load %arg14[%c0_24, %c0_25, %c0_26] : memref<1x1x64xf32, #tpu.memory_space<vmem>>, vector<1x1x64xf32>
    %42 = vector.shape_cast %41 : vector<1x1x64xf32> to vector<1x64xf32>
    %43 = vector.broadcast %42 : vector<1x64xf32> to vector<34x64xf32>
    %44 = arith.addf %40, %43 : vector<34x64xf32>
    %c0_27 = arith.constant 0 : index
    %c0_28 = arith.constant 0 : index
    %c0_29 = arith.constant 0 : index
    %45 = vector.load %arg12[%c0_27, %c0_28, %c0_29] : memref<1x64x64xbf16, #tpu.memory_space<vmem>>, vector<1x64x64xbf16>
    %46 = vector.shape_cast %45 : vector<1x64x64xbf16> to vector<64x64xbf16>
    %cst_30 = arith.constant dense<0.000000e+00> : vector<34x64xf32>
    %47 = tpu.matmul %28, %46, %cst_30 {dimension_numbers = #tpu.dot_dimension_numbers<[1], [0], [0], [1], [0, 0, 1, 1], [], []>} : vector<34x64xbf16>, vector<64x64xbf16>, vector<34x64xf32> -> vector<34x64xf32>
    %c0_31 = arith.constant 0 : index
    %c0_32 = arith.constant 0 : index
    %c0_33 = arith.constant 0 : index
    %48 = vector.load %arg15[%c0_31, %c0_32, %c0_33] : memref<1x1x64xf32, #tpu.memory_space<vmem>>, vector<1x1x64xf32>
    %49 = vector.shape_cast %48 : vector<1x1x64xf32> to vector<1x64xf32>
    %50 = vector.broadcast %49 : vector<1x64xf32> to vector<34x64xf32>
    %51 = arith.addf %47, %50 : vector<34x64xf32>
    %52 = arith.truncf %37 : vector<34x64xf32> to vector<34x64xbf16>
    %53 = arith.truncf %44 : vector<34x64xf32> to vector<34x64xbf16>
    %54 = arith.truncf %51 : vector<34x64xf32> to vector<34x64xbf16>
    %55 = vector.extract_strided_slice %52 {offsets = [0, 0], sizes = [17, 16], strides = [1, 1]} : vector<34x64xbf16> to vector<17x16xbf16>
    %56 = vector.extract_strided_slice %53 {offsets = [0, 0], sizes = [17, 16], strides = [1, 1]} : vector<34x64xbf16> to vector<17x16xbf16>
    %57 = vector.extract_strided_slice %54 {offsets = [0, 0], sizes = [17, 16], strides = [1, 1]} : vector<34x64xbf16> to vector<17x16xbf16>
    %cst_34 = arith.constant dense<0.000000e+00> : vector<17x17xf32>
    %58 = tpu.matmul %55, %56, %cst_34 {dimension_numbers = #tpu.dot_dimension_numbers<[1], [1], [0], [0], [0, 0, 1, 0], [], []>} : vector<17x16xbf16>, vector<17x16xbf16>, vector<17x17xf32> -> vector<17x17xf32>
    %cst_35 = arith.constant dense<0xFF800000> : vector<17xf32>
    %59 = vector.multi_reduction <maximumf>, %58, %cst_35 [1] : vector<17x17xf32> to vector<17xf32>
    %60 = vector.shape_cast %59 : vector<17xf32> to vector<17x1xf32>
    %61 = vector.broadcast %60 : vector<17x1xf32> to vector<17x17xf32>
    %62 = arith.subf %58, %61 : vector<17x17xf32>
    %63 = math.exp %62 : vector<17x17xf32>
    %cst_36 = arith.constant dense<0.000000e+00> : vector<17xf32>
    %64 = vector.multi_reduction <add>, %63, %cst_36 [1] : vector<17x17xf32> to vector<17xf32>
    %65 = vector.shape_cast %64 : vector<17xf32> to vector<17x1xf32>
    %66 = tpu.reciprocal %65 {approx = true} : vector<17x1xf32> -> vector<17x1xf32>
    %67 = vector.broadcast %66 : vector<17x1xf32> to vector<17x17xf32>
    %68 = arith.mulf %63, %67 : vector<17x17xf32>
    %69 = arith.truncf %68 : vector<17x17xf32> to vector<17x17xbf16>
    %cst_37 = arith.constant dense<0.000000e+00> : vector<17x16xf32>
    %70 = tpu.matmul %69, %57, %cst_37 {dimension_numbers = #tpu.dot_dimension_numbers<[1], [0], [0], [1], [0, 0, 1, 1], [], []>} : vector<17x17xbf16>, vector<17x16xbf16>, vector<17x16xf32> -> vector<17x16xf32>
    %c0_38 = arith.constant 0 : index
    %c0_39 = arith.constant 0 : index
    %71 = vector.load %arg33[%c0_38, %c0_39] : memref<34x64xf32, #tpu.memory_space<vmem>>, vector<17x16xf32>
    tpu.vector_store %arg33[%c0_38, %c0_39], %70 {strides = array<i32>} : memref<34x64xf32, #tpu.memory_space<vmem>>, vector<17x16xf32>,
    %72 = vector.extract_strided_slice %52 {offsets = [0, 16], sizes = [17, 16], strides = [1, 1]} : vector<34x64xbf16> to vector<17x16xbf16>
    %73 = vector.extract_strided_slice %53 {offsets = [0, 16], sizes = [17, 16], strides = [1, 1]} : vector<34x64xbf16> to vector<17x16xbf16>
    %74 = vector.extract_strided_slice %54 {offsets = [0, 16], sizes = [17, 16], strides = [1, 1]} : vector<34x64xbf16> to vector<17x16xbf16>
    %cst_40 = arith.constant dense<0.000000e+00> : vector<17x17xf32>
    %75 = tpu.matmul %72, %73, %cst_40 {dimension_numbers = #tpu.dot_dimension_numbers<[1], [1], [0], [0], [0, 0, 1, 0], [], []>} : vector<17x16xbf16>, vector<17x16xbf16>, vector<17x17xf32> -> vector<17x17xf32>
    %cst_41 = arith.constant dense<0xFF800000> : vector<17xf32>
    %76 = vector.multi_reduction <maximumf>, %75, %cst_41 [1] : vector<17x17xf32> to vector<17xf32>
    %77 = vector.shape_cast %76 : vector<17xf32> to vector<17x1xf32>
    %78 = vector.broadcast %77 : vector<17x1xf32> to vector<17x17xf32>
    %79 = arith.subf %75, %78 : vector<17x17xf32>
    %80 = math.exp %79 : vector<17x17xf32>
    %cst_42 = arith.constant dense<0.000000e+00> : vector<17xf32>
    %81 = vector.multi_reduction <add>, %80, %cst_42 [1] : vector<17x17xf32> to vector<17xf32>
    %82 = vector.shape_cast %81 : vector<17xf32> to vector<17x1xf32>
    %83 = tpu.reciprocal %82 {approx = true} : vector<17x1xf32> -> vector<17x1xf32>
    %84 = vector.broadcast %83 : vector<17x1xf32> to vector<17x17xf32>
    %85 = arith.mulf %80, %84 : vector<17x17xf32>
    %86 = arith.truncf %85 : vector<17x17xf32> to vector<17x17xbf16>
    %cst_43 = arith.constant dense<0.000000e+00> : vector<17x16xf32>
    %87 = tpu.matmul %86, %74, %cst_43 {dimension_numbers = #tpu.dot_dimension_numbers<[1], [0], [0], [1], [0, 0, 1, 1], [], []>} : vector<17x17xbf16>, vector<17x16xbf16>, vector<17x16xf32> -> vector<17x16xf32>
    %c0_44 = arith.constant 0 : index
    %c16 = arith.constant 16 : index
    %88 = vector.load %arg33[%c0_44, %c16] : memref<34x64xf32, #tpu.memory_space<vmem>>, vector<17x16xf32>
    tpu.vector_store %arg33[%c0_44, %c16], %87 {strides = array<i32>} : memref<34x64xf32, #tpu.memory_space<vmem>>, vector<17x16xf32>,
    %89 = vector.extract_strided_slice %52 {offsets = [0, 32], sizes = [17, 16], strides = [1, 1]} : vector<34x64xbf16> to vector<17x16xbf16>
    %90 = vector.extract_strided_slice %53 {offsets = [0, 32], sizes = [17, 16], strides = [1, 1]} : vector<34x64xbf16> to vector<17x16xbf16>
    %91 = vector.extract_strided_slice %54 {offsets = [0, 32], sizes = [17, 16], strides = [1, 1]} : vector<34x64xbf16> to vector<17x16xbf16>
    %cst_45 = arith.constant dense<0.000000e+00> : vector<17x17xf32>
    %92 = tpu.matmul %89, %90, %cst_45 {dimension_numbers = #tpu.dot_dimension_numbers<[1], [1], [0], [0], [0, 0, 1, 0], [], []>} : vector<17x16xbf16>, vector<17x16xbf16>, vector<17x17xf32> -> vector<17x17xf32>
    %cst_46 = arith.constant dense<0xFF800000> : vector<17xf32>
    %93 = vector.multi_reduction <maximumf>, %92, %cst_46 [1] : vector<17x17xf32> to vector<17xf32>
    %94 = vector.shape_cast %93 : vector<17xf32> to vector<17x1xf32>
    %95 = vector.broadcast %94 : vector<17x1xf32> to vector<17x17xf32>
    %96 = arith.subf %92, %95 : vector<17x17xf32>
    %97 = math.exp %96 : vector<17x17xf32>
    %cst_47 = arith.constant dense<0.000000e+00> : vector<17xf32>
    %98 = vector.multi_reduction <add>, %97, %cst_47 [1] : vector<17x17xf32> to vector<17xf32>
    %99 = vector.shape_cast %98 : vector<17xf32> to vector<17x1xf32>
    %100 = tpu.reciprocal %99 {approx = true} : vector<17x1xf32> -> vector<17x1xf32>
    %101 = vector.broadcast %100 : vector<17x1xf32> to vector<17x17xf32>
    %102 = arith.mulf %97, %101 : vector<17x17xf32>
    %103 = arith.truncf %102 : vector<17x17xf32> to vector<17x17xbf16>
    %cst_48 = arith.constant dense<0.000000e+00> : vector<17x16xf32>
    %104 = tpu.matmul %103, %91, %cst_48 {dimension_numbers = #tpu.dot_dimension_numbers<[1], [0], [0], [1], [0, 0, 1, 1], [], []>} : vector<17x17xbf16>, vector<17x16xbf16>, vector<17x16xf32> -> vector<17x16xf32>
    %c0_49 = arith.constant 0 : index
    %c32 = arith.constant 32 : index
    %105 = vector.load %arg33[%c0_49, %c32] : memref<34x64xf32, #tpu.memory_space<vmem>>, vector<17x16xf32>
    tpu.vector_store %arg33[%c0_49, %c32], %104 {strides = array<i32>} : memref<34x64xf32, #tpu.memory_space<vmem>>, vector<17x16xf32>,
    %106 = vector.extract_strided_slice %52 {offsets = [0, 48], sizes = [17, 16], strides = [1, 1]} : vector<34x64xbf16> to vector<17x16xbf16>
    %107 = vector.extract_strided_slice %53 {offsets = [0, 48], sizes = [17, 16], strides = [1, 1]} : vector<34x64xbf16> to vector<17x16xbf16>
    %108 = vector.extract_strided_slice %54 {offsets = [0, 48], sizes = [17, 16], strides = [1, 1]} : vector<34x64xbf16> to vector<17x16xbf16>
    %cst_50 = arith.constant dense<0.000000e+00> : vector<17x17xf32>
    %109 = tpu.matmul %106, %107, %cst_50 {dimension_numbers = #tpu.dot_dimension_numbers<[1], [1], [0], [0], [0, 0, 1, 0], [], []>} : vector<17x16xbf16>, vector<17x16xbf16>, vector<17x17xf32> -> vector<17x17xf32>
    %cst_51 = arith.constant dense<0xFF800000> : vector<17xf32>
    %110 = vector.multi_reduction <maximumf>, %109, %cst_51 [1] : vector<17x17xf32> to vector<17xf32>
    %111 = vector.shape_cast %110 : vector<17xf32> to vector<17x1xf32>
    %112 = vector.broadcast %111 : vector<17x1xf32> to vector<17x17xf32>
    %113 = arith.subf %109, %112 : vector<17x17xf32>
    %114 = math.exp %113 : vector<17x17xf32>
    %cst_52 = arith.constant dense<0.000000e+00> : vector<17xf32>
    %115 = vector.multi_reduction <add>, %114, %cst_52 [1] : vector<17x17xf32> to vector<17xf32>
    %116 = vector.shape_cast %115 : vector<17xf32> to vector<17x1xf32>
    %117 = tpu.reciprocal %116 {approx = true} : vector<17x1xf32> -> vector<17x1xf32>
    %118 = vector.broadcast %117 : vector<17x1xf32> to vector<17x17xf32>
    %119 = arith.mulf %114, %118 : vector<17x17xf32>
    %120 = arith.truncf %119 : vector<17x17xf32> to vector<17x17xbf16>
    %cst_53 = arith.constant dense<0.000000e+00> : vector<17x16xf32>
    %121 = tpu.matmul %120, %108, %cst_53 {dimension_numbers = #tpu.dot_dimension_numbers<[1], [0], [0], [1], [0, 0, 1, 1], [], []>} : vector<17x17xbf16>, vector<17x16xbf16>, vector<17x16xf32> -> vector<17x16xf32>
    %c0_54 = arith.constant 0 : index
    %c48 = arith.constant 48 : index
    %122 = vector.load %arg33[%c0_54, %c48] : memref<34x64xf32, #tpu.memory_space<vmem>>, vector<17x16xf32>
    tpu.vector_store %arg33[%c0_54, %c48], %121 {strides = array<i32>} : memref<34x64xf32, #tpu.memory_space<vmem>>, vector<17x16xf32>,
    %123 = vector.extract_strided_slice %52 {offsets = [17, 0], sizes = [17, 16], strides = [1, 1]} : vector<34x64xbf16> to vector<17x16xbf16>
    %124 = vector.extract_strided_slice %53 {offsets = [17, 0], sizes = [17, 16], strides = [1, 1]} : vector<34x64xbf16> to vector<17x16xbf16>
    %125 = vector.extract_strided_slice %54 {offsets = [17, 0], sizes = [17, 16], strides = [1, 1]} : vector<34x64xbf16> to vector<17x16xbf16>
    %cst_55 = arith.constant dense<0.000000e+00> : vector<17x17xf32>
    %126 = tpu.matmul %123, %124, %cst_55 {dimension_numbers = #tpu.dot_dimension_numbers<[1], [1], [0], [0], [0, 0, 1, 0], [], []>} : vector<17x16xbf16>, vector<17x16xbf16>, vector<17x17xf32> -> vector<17x17xf32>
    %cst_56 = arith.constant dense<0xFF800000> : vector<17xf32>
    %127 = vector.multi_reduction <maximumf>, %126, %cst_56 [1] : vector<17x17xf32> to vector<17xf32>
    %128 = vector.shape_cast %127 : vector<17xf32> to vector<17x1xf32>
    %129 = vector.broadcast %128 : vector<17x1xf32> to vector<17x17xf32>
    %130 = arith.subf %126, %129 : vector<17x17xf32>
    %131 = math.exp %130 : vector<17x17xf32>
    %cst_57 = arith.constant dense<0.000000e+00> : vector<17xf32>
    %132 = vector.multi_reduction <add>, %131, %cst_57 [1] : vector<17x17xf32> to vector<17xf32>
    %133 = vector.shape_cast %132 : vector<17xf32> to vector<17x1xf32>
    %134 = tpu.reciprocal %133 {approx = true} : vector<17x1xf32> -> vector<17x1xf32>
    %135 = vector.broadcast %134 : vector<17x1xf32> to vector<17x17xf32>
    %136 = arith.mulf %131, %135 : vector<17x17xf32>
    %137 = arith.truncf %136 : vector<17x17xf32> to vector<17x17xbf16>
    %cst_58 = arith.constant dense<0.000000e+00> : vector<17x16xf32>
    %138 = tpu.matmul %137, %125, %cst_58 {dimension_numbers = #tpu.dot_dimension_numbers<[1], [0], [0], [1], [0, 0, 1, 1], [], []>} : vector<17x17xbf16>, vector<17x16xbf16>, vector<17x16xf32> -> vector<17x16xf32>
    %c17 = arith.constant 17 : index
    %c0_59 = arith.constant 0 : index
    %139 = vector.load %arg33[%c17, %c0_59] : memref<34x64xf32, #tpu.memory_space<vmem>>, vector<17x16xf32>
    tpu.vector_store %arg33[%c17, %c0_59], %138 {strides = array<i32>} : memref<34x64xf32, #tpu.memory_space<vmem>>, vector<17x16xf32>,
    %140 = vector.extract_strided_slice %52 {offsets = [17, 16], sizes = [17, 16], strides = [1, 1]} : vector<34x64xbf16> to vector<17x16xbf16>
    %141 = vector.extract_strided_slice %53 {offsets = [17, 16], sizes = [17, 16], strides = [1, 1]} : vector<34x64xbf16> to vector<17x16xbf16>
    %142 = vector.extract_strided_slice %54 {offsets = [17, 16], sizes = [17, 16], strides = [1, 1]} : vector<34x64xbf16> to vector<17x16xbf16>
    %cst_60 = arith.constant dense<0.000000e+00> : vector<17x17xf32>
    %143 = tpu.matmul %140, %141, %cst_60 {dimension_numbers = #tpu.dot_dimension_numbers<[1], [1], [0], [0], [0, 0, 1, 0], [], []>} : vector<17x16xbf16>, vector<17x16xbf16>, vector<17x17xf32> -> vector<17x17xf32>
    %cst_61 = arith.constant dense<0xFF800000> : vector<17xf32>
    %144 = vector.multi_reduction <maximumf>, %143, %cst_61 [1] : vector<17x17xf32> to vector<17xf32>
    %145 = vector.shape_cast %144 : vector<17xf32> to vector<17x1xf32>
    %146 = vector.broadcast %145 : vector<17x1xf32> to vector<17x17xf32>
    %147 = arith.subf %143, %146 : vector<17x17xf32>
    %148 = math.exp %147 : vector<17x17xf32>
    %cst_62 = arith.constant dense<0.000000e+00> : vector<17xf32>
    %149 = vector.multi_reduction <add>, %148, %cst_62 [1] : vector<17x17xf32> to vector<17xf32>
    %150 = vector.shape_cast %149 : vector<17xf32> to vector<17x1xf32>
    %151 = tpu.reciprocal %150 {approx = true} : vector<17x1xf32> -> vector<17x1xf32>
    %152 = vector.broadcast %151 : vector<17x1xf32> to vector<17x17xf32>
    %153 = arith.mulf %148, %152 : vector<17x17xf32>
    %154 = arith.truncf %153 : vector<17x17xf32> to vector<17x17xbf16>
    %cst_63 = arith.constant dense<0.000000e+00> : vector<17x16xf32>
    %155 = tpu.matmul %154, %142, %cst_63 {dimension_numbers = #tpu.dot_dimension_numbers<[1], [0], [0], [1], [0, 0, 1, 1], [], []>} : vector<17x17xbf16>, vector<17x16xbf16>, vector<17x16xf32> -> vector<17x16xf32>
    %c17_64 = arith.constant 17 : index
    %c16_65 = arith.constant 16 : index
    %156 = vector.load %arg33[%c17_64, %c16_65] : memref<34x64xf32, #tpu.memory_space<vmem>>, vector<17x16xf32>
    tpu.vector_store %arg33[%c17_64, %c16_65], %155 {strides = array<i32>} : memref<34x64xf32, #tpu.memory_space<vmem>>, vector<17x16xf32>,
    %157 = vector.extract_strided_slice %52 {offsets = [17, 32], sizes = [17, 16], strides = [1, 1]} : vector<34x64xbf16> to vector<17x16xbf16>
    %158 = vector.extract_strided_slice %53 {offsets = [17, 32], sizes = [17, 16], strides = [1, 1]} : vector<34x64xbf16> to vector<17x16xbf16>
    %159 = vector.extract_strided_slice %54 {offsets = [17, 32], sizes = [17, 16], strides = [1, 1]} : vector<34x64xbf16> to vector<17x16xbf16>
    %cst_66 = arith.constant dense<0.000000e+00> : vector<17x17xf32>
    %160 = tpu.matmul %157, %158, %cst_66 {dimension_numbers = #tpu.dot_dimension_numbers<[1], [1], [0], [0], [0, 0, 1, 0], [], []>} : vector<17x16xbf16>, vector<17x16xbf16>, vector<17x17xf32> -> vector<17x17xf32>
    %cst_67 = arith.constant dense<0xFF800000> : vector<17xf32>
    %161 = vector.multi_reduction <maximumf>, %160, %cst_67 [1] : vector<17x17xf32> to vector<17xf32>
    %162 = vector.shape_cast %161 : vector<17xf32> to vector<17x1xf32>
    %163 = vector.broadcast %162 : vector<17x1xf32> to vector<17x17xf32>
    %164 = arith.subf %160, %163 : vector<17x17xf32>
    %165 = math.exp %164 : vector<17x17xf32>
    %cst_68 = arith.constant dense<0.000000e+00> : vector<17xf32>
    %166 = vector.multi_reduction <add>, %165, %cst_68 [1] : vector<17x17xf32> to vector<17xf32>
    %167 = vector.shape_cast %166 : vector<17xf32> to vector<17x1xf32>
    %168 = tpu.reciprocal %167 {approx = true} : vector<17x1xf32> -> vector<17x1xf32>
    %169 = vector.broadcast %168 : vector<17x1xf32> to vector<17x17xf32>
    %170 = arith.mulf %165, %169 : vector<17x17xf32>
    %171 = arith.truncf %170 : vector<17x17xf32> to vector<17x17xbf16>
    %cst_69 = arith.constant dense<0.000000e+00> : vector<17x16xf32>
    %172 = tpu.matmul %171, %159, %cst_69 {dimension_numbers = #tpu.dot_dimension_numbers<[1], [0], [0], [1], [0, 0, 1, 1], [], []>} : vector<17x17xbf16>, vector<17x16xbf16>, vector<17x16xf32> -> vector<17x16xf32>
    %c17_70 = arith.constant 17 : index
    %c32_71 = arith.constant 32 : index
    %173 = vector.load %arg33[%c17_70, %c32_71] : memref<34x64xf32, #tpu.memory_space<vmem>>, vector<17x16xf32>
    tpu.vector_store %arg33[%c17_70, %c32_71], %172 {strides = array<i32>} : memref<34x64xf32, #tpu.memory_space<vmem>>, vector<17x16xf32>,
    %174 = vector.extract_strided_slice %52 {offsets = [17, 48], sizes = [17, 16], strides = [1, 1]} : vector<34x64xbf16> to vector<17x16xbf16>
    %175 = vector.extract_strided_slice %53 {offsets = [17, 48], sizes = [17, 16], strides = [1, 1]} : vector<34x64xbf16> to vector<17x16xbf16>
    %176 = vector.extract_strided_slice %54 {offsets = [17, 48], sizes = [17, 16], strides = [1, 1]} : vector<34x64xbf16> to vector<17x16xbf16>
    %cst_72 = arith.constant dense<0.000000e+00> : vector<17x17xf32>
    %177 = tpu.matmul %174, %175, %cst_72 {dimension_numbers = #tpu.dot_dimension_numbers<[1], [1], [0], [0], [0, 0, 1, 0], [], []>} : vector<17x16xbf16>, vector<17x16xbf16>, vector<17x17xf32> -> vector<17x17xf32>
    %cst_73 = arith.constant dense<0xFF800000> : vector<17xf32>
    %178 = vector.multi_reduction <maximumf>, %177, %cst_73 [1] : vector<17x17xf32> to vector<17xf32>
    %179 = vector.shape_cast %178 : vector<17xf32> to vector<17x1xf32>
    %180 = vector.broadcast %179 : vector<17x1xf32> to vector<17x17xf32>
    %181 = arith.subf %177, %180 : vector<17x17xf32>
    %182 = math.exp %181 : vector<17x17xf32>
    %cst_74 = arith.constant dense<0.000000e+00> : vector<17xf32>
    %183 = vector.multi_reduction <add>, %182, %cst_74 [1] : vector<17x17xf32> to vector<17xf32>
    %184 = vector.shape_cast %183 : vector<17xf32> to vector<17x1xf32>
    %185 = tpu.reciprocal %184 {approx = true} : vector<17x1xf32> -> vector<17x1xf32>
    %186 = vector.broadcast %185 : vector<17x1xf32> to vector<17x17xf32>
    %187 = arith.mulf %182, %186 : vector<17x17xf32>
    %188 = arith.truncf %187 : vector<17x17xf32> to vector<17x17xbf16>
    %cst_75 = arith.constant dense<0.000000e+00> : vector<17x16xf32>
    %189 = tpu.matmul %188, %176, %cst_75 {dimension_numbers = #tpu.dot_dimension_numbers<[1], [0], [0], [1], [0, 0, 1, 1], [], []>} : vector<17x17xbf16>, vector<17x16xbf16>, vector<17x16xf32> -> vector<17x16xf32>
    %c17_76 = arith.constant 17 : index
    %c48_77 = arith.constant 48 : index
    %190 = vector.load %arg33[%c17_76, %c48_77] : memref<34x64xf32, #tpu.memory_space<vmem>>, vector<17x16xf32>
    tpu.vector_store %arg33[%c17_76, %c48_77], %189 {strides = array<i32>} : memref<34x64xf32, #tpu.memory_space<vmem>>, vector<17x16xf32>,
    %c0_78 = arith.constant 0 : index
    %c0_79 = arith.constant 0 : index
    %191 = vector.load %arg33[%c0_78, %c0_79] : memref<34x64xf32, #tpu.memory_space<vmem>>, vector<34x64xf32>
    %192 = arith.truncf %191 : vector<34x64xf32> to vector<34x64xbf16>
    %c0_80 = arith.constant 0 : index
    %c0_81 = arith.constant 0 : index
    %c0_82 = arith.constant 0 : index
    %193 = vector.load %arg16[%c0_80, %c0_81, %c0_82] : memref<1x64x64xbf16, #tpu.memory_space<vmem>>, vector<1x64x64xbf16>
    %194 = vector.shape_cast %193 : vector<1x64x64xbf16> to vector<64x64xbf16>
    %cst_83 = arith.constant dense<0.000000e+00> : vector<34x64xf32>
    %195 = tpu.matmul %192, %194, %cst_83 {dimension_numbers = #tpu.dot_dimension_numbers<[1], [0], [0], [1], [0, 0, 1, 1], [], []>} : vector<34x64xbf16>, vector<64x64xbf16>, vector<34x64xf32> -> vector<34x64xf32>
    %196 = arith.addf %3, %195 : vector<34x64xf32>
    %c0_84 = arith.constant 0 : index
    %c0_85 = arith.constant 0 : index
    %c0_86 = arith.constant 0 : index
    %197 = vector.load %arg17[%c0_84, %c0_85, %c0_86] : memref<1x1x64xf32, #tpu.memory_space<vmem>>, vector<1x1x64xf32>
    %198 = vector.shape_cast %197 : vector<1x1x64xf32> to vector<1x64xf32>
    %199 = vector.broadcast %198 : vector<1x64xf32> to vector<34x64xf32>
    %200 = arith.addf %196, %199 : vector<34x64xf32>
    %c0_87 = arith.constant 0 : index
    %c0_88 = arith.constant 0 : index
    %c0_89 = arith.constant 0 : index
    %201 = vector.load %arg18[%c0_87, %c0_88, %c0_89] : memref<1x1x64xf32, #tpu.memory_space<vmem>>, vector<1x1x64xf32>
    %202 = vector.shape_cast %201 : vector<1x1x64xf32> to vector<1x64xf32>
    %c0_90 = arith.constant 0 : index
    %c0_91 = arith.constant 0 : index
    %c0_92 = arith.constant 0 : index
    %203 = vector.load %arg19[%c0_90, %c0_91, %c0_92] : memref<1x1x64xf32, #tpu.memory_space<vmem>>, vector<1x1x64xf32>
    %204 = vector.shape_cast %203 : vector<1x1x64xf32> to vector<1x64xf32>
    %cst_93 = arith.constant dense<0.000000e+00> : vector<34xf32>
    %205 = vector.multi_reduction <add>, %200, %cst_93 [1] : vector<34x64xf32> to vector<34xf32>
    %206 = vector.shape_cast %205 : vector<34xf32> to vector<34x1xf32>
    %cst_94 = arith.constant 6.400000e+01 : f32
    %207 = vector.broadcast %cst_94 : f32 to vector<34x1xf32>
    %208 = arith.divf %206, %207 : vector<34x1xf32>
    %209 = vector.broadcast %208 : vector<34x1xf32> to vector<34x64xf32>
    %210 = arith.subf %200, %209 : vector<34x64xf32>
    %211 = arith.mulf %210, %210 : vector<34x64xf32>
    %cst_95 = arith.constant dense<0.000000e+00> : vector<34xf32>
    %212 = vector.multi_reduction <add>, %211, %cst_95 [1] : vector<34x64xf32> to vector<34xf32>
    %213 = vector.shape_cast %212 : vector<34xf32> to vector<34x1xf32>
    %cst_96 = arith.constant 6.400000e+01 : f32
    %214 = vector.broadcast %cst_96 : f32 to vector<34x1xf32>
    %215 = arith.divf %213, %214 : vector<34x1xf32>
    %cst_97 = arith.constant 9.99999974E-6 : f32
    %216 = vector.broadcast %cst_97 : f32 to vector<34x1xf32>
    %217 = arith.addf %215, %216 : vector<34x1xf32>
    %218 = math.rsqrt %217 : vector<34x1xf32>
    %219 = vector.broadcast %218 : vector<34x1xf32> to vector<34x64xf32>
    %220 = arith.mulf %210, %219 : vector<34x64xf32>
    %221 = vector.broadcast %202 : vector<1x64xf32> to vector<34x64xf32>
    %222 = arith.mulf %220, %221 : vector<34x64xf32>
    %223 = vector.broadcast %204 : vector<1x64xf32> to vector<34x64xf32>
    %224 = arith.addf %222, %223 : vector<34x64xf32>
    %225 = arith.truncf %224 : vector<34x64xf32> to vector<34x64xbf16>
    %c0_98 = arith.constant 0 : index
    %c0_99 = arith.constant 0 : index
    %c0_100 = arith.constant 0 : index
    %226 = vector.load %arg20[%c0_98, %c0_99, %c0_100] : memref<1x64x256xbf16, #tpu.memory_space<vmem>>, vector<1x64x256xbf16>
    %227 = vector.shape_cast %226 : vector<1x64x256xbf16> to vector<64x256xbf16>
    %cst_101 = arith.constant dense<0.000000e+00> : vector<34x256xf32>
    %228 = tpu.matmul %225, %227, %cst_101 {dimension_numbers = #tpu.dot_dimension_numbers<[1], [0], [0], [1], [0, 0, 1, 1], [], []>} : vector<34x64xbf16>, vector<64x256xbf16>, vector<34x256xf32> -> vector<34x256xf32>
    %c0_102 = arith.constant 0 : index
    %c0_103 = arith.constant 0 : index
    %c0_104 = arith.constant 0 : index
    %229 = vector.load %arg21[%c0_102, %c0_103, %c0_104] : memref<1x1x256xf32, #tpu.memory_space<vmem>>, vector<1x1x256xf32>
    %230 = vector.shape_cast %229 : vector<1x1x256xf32> to vector<1x256xf32>
    %231 = vector.broadcast %230 : vector<1x256xf32> to vector<34x256xf32>
    %232 = arith.addf %228, %231 : vector<34x256xf32>
    %233 = arith.truncf %232 : vector<34x256xf32> to vector<34x256xbf16>
    %cst_105 = arith.constant 1.703130e+00 : bf16
    %234 = vector.broadcast %cst_105 : bf16 to vector<34x256xbf16>
    %235 = arith.mulf %234, %233 : vector<34x256xbf16>
    %236 = arith.negf %235 : vector<34x256xbf16>
    %237 = math.exp %236 : vector<34x256xbf16>
    %cst_106 = arith.constant 1.000000e+00 : bf16
    %238 = vector.broadcast %cst_106 : bf16 to vector<34x256xbf16>
    %239 = arith.addf %238, %237 : vector<34x256xbf16>
    %240 = arith.divf %238, %239 : vector<34x256xbf16>
    %241 = arith.mulf %233, %240 : vector<34x256xbf16>
    %c0_107 = arith.constant 0 : index
    %c0_108 = arith.constant 0 : index
    %c0_109 = arith.constant 0 : index
    %242 = vector.load %arg22[%c0_107, %c0_108, %c0_109] : memref<1x256x64xbf16, #tpu.memory_space<vmem>>, vector<1x256x64xbf16>
    %243 = vector.shape_cast %242 : vector<1x256x64xbf16> to vector<256x64xbf16>
    %cst_110 = arith.constant dense<0.000000e+00> : vector<34x64xf32>
    %244 = tpu.matmul %241, %243, %cst_110 {dimension_numbers = #tpu.dot_dimension_numbers<[1], [0], [0], [1], [0, 0, 1, 1], [], []>} : vector<34x256xbf16>, vector<256x64xbf16>, vector<34x64xf32> -> vector<34x64xf32>
    %245 = arith.addf %200, %244 : vector<34x64xf32>
    %c0_111 = arith.constant 0 : index
    %c0_112 = arith.constant 0 : index
    %c0_113 = arith.constant 0 : index
    %246 = vector.load %arg23[%c0_111, %c0_112, %c0_113] : memref<1x1x64xf32, #tpu.memory_space<vmem>>, vector<1x1x64xf32>
    %247 = vector.shape_cast %246 : vector<1x1x64xf32> to vector<1x64xf32>
    %248 = vector.broadcast %247 : vector<1x64xf32> to vector<34x64xf32>
    %249 = arith.addf %245, %248 : vector<34x64xf32>
    %c0_114 = arith.constant 0 : index
    %c0_115 = arith.constant 0 : index
    %250 = vector.load %arg32[%c0_114, %c0_115] : memref<34x64xf32, #tpu.memory_space<vmem>>, vector<34x64xf32>
    tpu.vector_store %arg32[%c0_114, %c0_115], %249 {strides = array<i32>} : memref<34x64xf32, #tpu.memory_space<vmem>>, vector<34x64xf32>,
    %c1_i32 = arith.constant 1 : i32
    %251 = arith.cmpi eq, %arg1, %c1_i32 : i32
    %252 = arith.extui %251 : i1 to i32
    %c0_i32_116 = arith.constant 0 : i32
    %253 = arith.cmpi ne, %252, %c0_i32_116 : i32
    scf.if %253 {
      %254 = vector.extract_strided_slice %249 {offsets = [0, 0], sizes = [1, 64], strides = [1, 1]} : vector<34x64xf32> to vector<1x64xf32>
      %255 = vector.extract_strided_slice %249 {offsets = [17, 0], sizes = [1, 64], strides = [1, 1]} : vector<34x64xf32> to vector<1x64xf32>
      %256 = tpu.concatenate %254, %255 in 0 : vector<1x64xf32>, vector<1x64xf32> -> vector<2x64xf32>
      %c0_117 = arith.constant 0 : index
      %c0_118 = arith.constant 0 : index
      %257 = vector.load %arg24[%c0_117, %c0_118] : memref<1x64xf32, #tpu.memory_space<vmem>>, vector<1x64xf32>
      %c0_119 = arith.constant 0 : index
      %c0_120 = arith.constant 0 : index
      %258 = vector.load %arg25[%c0_119, %c0_120] : memref<1x64xf32, #tpu.memory_space<vmem>>, vector<1x64xf32>
      %cst_121 = arith.constant dense<0.000000e+00> : vector<2xf32>
      %259 = vector.multi_reduction <add>, %256, %cst_121 [1] : vector<2x64xf32> to vector<2xf32>
      %260 = vector.shape_cast %259 : vector<2xf32> to vector<2x1xf32>
      %cst_122 = arith.constant 6.400000e+01 : f32
      %261 = vector.broadcast %cst_122 : f32 to vector<2x1xf32>
      %262 = arith.divf %260, %261 : vector<2x1xf32>
      %263 = vector.broadcast %262 : vector<2x1xf32> to vector<2x64xf32>
      %264 = arith.subf %256, %263 : vector<2x64xf32>
      %265 = arith.mulf %264, %264 : vector<2x64xf32>
      %cst_123 = arith.constant dense<0.000000e+00> : vector<2xf32>
      %266 = vector.multi_reduction <add>, %265, %cst_123 [1] : vector<2x64xf32> to vector<2xf32>
      %267 = vector.shape_cast %266 : vector<2xf32> to vector<2x1xf32>
      %cst_124 = arith.constant 6.400000e+01 : f32
      %268 = vector.broadcast %cst_124 : f32 to vector<2x1xf32>
      %269 = arith.divf %267, %268 : vector<2x1xf32>
      %cst_125 = arith.constant 9.99999974E-6 : f32
      %270 = vector.broadcast %cst_125 : f32 to vector<2x1xf32>
      %271 = arith.addf %269, %270 : vector<2x1xf32>
      %272 = math.rsqrt %271 : vector<2x1xf32>
      %273 = vector.broadcast %272 : vector<2x1xf32> to vector<2x64xf32>
      %274 = arith.mulf %264, %273 : vector<2x64xf32>
      %275 = vector.broadcast %257 : vector<1x64xf32> to vector<2x64xf32>
      %276 = arith.mulf %274, %275 : vector<2x64xf32>
      %277 = vector.broadcast %258 : vector<1x64xf32> to vector<2x64xf32>
      %278 = arith.addf %276, %277 : vector<2x64xf32>
      %279 = arith.truncf %278 : vector<2x64xf32> to vector<2x64xbf16>
      %c0_126 = arith.constant 0 : index
      %c0_127 = arith.constant 0 : index
      %280 = vector.load %arg26[%c0_126, %c0_127] : memref<64x32xbf16, #tpu.memory_space<vmem>>, vector<64x32xbf16>
      %cst_128 = arith.constant dense<0.000000e+00> : vector<2x32xf32>
      %281 = tpu.matmul %279, %280, %cst_128 {dimension_numbers = #tpu.dot_dimension_numbers<[1], [0], [0], [1], [0, 0, 1, 1], [], []>} : vector<2x64xbf16>, vector<64x32xbf16>, vector<2x32xf32> -> vector<2x32xf32>
      %c0_129 = arith.constant 0 : index
      %c0_130 = arith.constant 0 : index
      %282 = vector.load %arg27[%c0_129, %c0_130] : memref<32x16xf32, #tpu.memory_space<vmem>>, vector<32x16xf32>
      %cst_131 = arith.constant dense<0.000000e+00> : vector<2x16xf32>
      %283 = tpu.matmul %281, %282, %cst_131 {dimension_numbers = #tpu.dot_dimension_numbers<[1], [0], [0], [1], [0, 0, 1, 1], [], []>} : vector<2x32xf32>, vector<32x16xf32>, vector<2x16xf32> -> vector<2x16xf32>
      %c0_132 = arith.constant 0 : index
      %c0_133 = arith.constant 0 : index
      %284 = vector.load %arg28[%c0_132, %c0_133] : memref<1x16xf32, #tpu.memory_space<vmem>>, vector<1x16xf32>
      %285 = vector.broadcast %284 : vector<1x16xf32> to vector<2x16xf32>
      %286 = arith.addf %283, %285 : vector<2x16xf32>
      %cst_134 = arith.constant 0.000000e+00 : f32
      %287 = vector.broadcast %cst_134 : f32 to vector<2x16xf32>
      %288 = arith.maximumf %286, %287 : vector<2x16xf32>
      %c0_135 = arith.constant 0 : index
      %c0_136 = arith.constant 0 : index
      %289 = vector.load %arg29[%c0_135, %c0_136] : memref<16x128xf32, #tpu.memory_space<vmem>>, vector<16x128xf32>
      %cst_137 = arith.constant dense<0.000000e+00> : vector<2x128xf32>
      %290 = tpu.matmul %288, %289, %cst_137 {dimension_numbers = #tpu.dot_dimension_numbers<[1], [0], [0], [1], [0, 0, 1, 1], [], []>} : vector<2x16xf32>, vector<16x128xf32>, vector<2x128xf32> -> vector<2x128xf32>
      %c0_138 = arith.constant 0 : index
      %c0_139 = arith.constant 0 : index
      %291 = vector.load %arg30[%c0_138, %c0_139] : memref<1x128xf32, #tpu.memory_space<vmem>>, vector<1x128xf32>
      %292 = vector.broadcast %291 : vector<1x128xf32> to vector<2x128xf32>
      %293 = arith.addf %290, %292 : vector<2x128xf32>
      %c0_140 = arith.constant 0 : index
      %c0_141 = arith.constant 0 : index
      %294 = vector.load %arg31[%c0_140, %c0_141] : memref<2x128xf32, #tpu.memory_space<vmem>>, vector<2x128xf32>
      tpu.vector_store %arg31[%c0_140, %c0_141], %293 {strides = array<i32>} : memref<2x128xf32, #tpu.memory_space<vmem>>, vector<2x128xf32>,
    } else {
    }
    return
  }
  func.func @transform_0(%arg0: i32, %arg1: i32) -> (i32, i32) {
    %c0_i32 = arith.constant 0 : i32
    %c0_i32_0 = arith.constant 0 : i32
    return %arg0, %c0_i32 : i32, i32
  }
  func.func @transform_1(%arg0: i32, %arg1: i32) -> (i32, i32) {
    %c0_i32 = arith.constant 0 : i32
    %c0_i32_0 = arith.constant 0 : i32
    %c0_i32_1 = arith.constant 0 : i32
    return %c0_i32, %c0_i32_0 : i32, i32
  }
  func.func @transform_2(%arg0: i32, %arg1: i32) -> (i32, i32) {
    %c0_i32 = arith.constant 0 : i32
    %c0_i32_0 = arith.constant 0 : i32
    %c0_i32_1 = arith.constant 0 : i32
    return %c0_i32, %c0_i32_0 : i32, i32
  }
  func.func @transform_3(%arg0: i32, %arg1: i32) -> (i32, i32) {
    %c0_i32 = arith.constant 0 : i32
    %c0_i32_0 = arith.constant 0 : i32
    %c0_i32_1 = arith.constant 0 : i32
    return %c0_i32, %c0_i32_0 : i32, i32
  }
  func.func @transform_4(%arg0: i32, %arg1: i32) -> (i32, i32) {
    %c0_i32 = arith.constant 0 : i32
    %c0_i32_0 = arith.constant 0 : i32
    %c0_i32_1 = arith.constant 0 : i32
    return %c0_i32, %c0_i32_0 : i32, i32
  }
  func.func @transform_5(%arg0: i32, %arg1: i32) -> (i32, i32) {
    %c0_i32 = arith.constant 0 : i32
    %c0_i32_0 = arith.constant 0 : i32
    %c0_i32_1 = arith.constant 0 : i32
    return %c0_i32, %c0_i32_0 : i32, i32
  }
  func.func @transform_6(%arg0: i32, %arg1: i32) -> (i32, i32, i32) {
    %c0_i32 = arith.constant 0 : i32
    %c0_i32_0 = arith.constant 0 : i32
    %c0_i32_1 = arith.constant 0 : i32
    return %arg1, %c0_i32, %c0_i32_0 : i32, i32, i32
  }
  func.func @transform_7(%arg0: i32, %arg1: i32) -> (i32, i32, i32) {
    %c0_i32 = arith.constant 0 : i32
    %c0_i32_0 = arith.constant 0 : i32
    %c0_i32_1 = arith.constant 0 : i32
    return %arg1, %c0_i32, %c0_i32_0 : i32, i32, i32
  }
  func.func @transform_8(%arg0: i32, %arg1: i32) -> (i32, i32, i32) {
    %c0_i32 = arith.constant 0 : i32
    %c0_i32_0 = arith.constant 0 : i32
    %c0_i32_1 = arith.constant 0 : i32
    return %arg1, %c0_i32, %c0_i32_0 : i32, i32, i32
  }
  func.func @transform_9(%arg0: i32, %arg1: i32) -> (i32, i32, i32) {
    %c0_i32 = arith.constant 0 : i32
    %c0_i32_0 = arith.constant 0 : i32
    %c0_i32_1 = arith.constant 0 : i32
    return %arg1, %c0_i32, %c0_i32_0 : i32, i32, i32
  }
  func.func @transform_10(%arg0: i32, %arg1: i32) -> (i32, i32, i32) {
    %c0_i32 = arith.constant 0 : i32
    %c0_i32_0 = arith.constant 0 : i32
    %c0_i32_1 = arith.constant 0 : i32
    return %arg1, %c0_i32, %c0_i32_0 : i32, i32, i32
  }
  func.func @transform_11(%arg0: i32, %arg1: i32) -> (i32, i32, i32) {
    %c0_i32 = arith.constant 0 : i32
    %c0_i32_0 = arith.constant 0 : i32
    %c0_i32_1 = arith.constant 0 : i32
    return %arg1, %c0_i32, %c0_i32_0 : i32, i32, i32
  }
  func.func @transform_12(%arg0: i32, %arg1: i32) -> (i32, i32, i32) {
    %c0_i32 = arith.constant 0 : i32
    %c0_i32_0 = arith.constant 0 : i32
    %c0_i32_1 = arith.constant 0 : i32
    return %arg1, %c0_i32, %c0_i32_0 : i32, i32, i32
  }
  func.func @transform_13(%arg0: i32, %arg1: i32) -> (i32, i32, i32) {
    %c0_i32 = arith.constant 0 : i32
    %c0_i32_0 = arith.constant 0 : i32
    %c0_i32_1 = arith.constant 0 : i32
    return %arg1, %c0_i32, %c0_i32_0 : i32, i32, i32
  }
  func.func @transform_14(%arg0: i32, %arg1: i32) -> (i32, i32, i32) {
    %c0_i32 = arith.constant 0 : i32
    %c0_i32_0 = arith.constant 0 : i32
    %c0_i32_1 = arith.constant 0 : i32
    return %arg1, %c0_i32, %c0_i32_0 : i32, i32, i32
  }
  func.func @transform_15(%arg0: i32, %arg1: i32) -> (i32, i32, i32) {
    %c0_i32 = arith.constant 0 : i32
    %c0_i32_0 = arith.constant 0 : i32
    %c0_i32_1 = arith.constant 0 : i32
    return %arg1, %c0_i32, %c0_i32_0 : i32, i32, i32
  }
  func.func @transform_16(%arg0: i32, %arg1: i32) -> (i32, i32, i32) {
    %c0_i32 = arith.constant 0 : i32
    %c0_i32_0 = arith.constant 0 : i32
    %c0_i32_1 = arith.constant 0 : i32
    return %arg1, %c0_i32, %c0_i32_0 : i32, i32, i32
  }
  func.func @transform_17(%arg0: i32, %arg1: i32) -> (i32, i32, i32) {
    %c0_i32 = arith.constant 0 : i32
    %c0_i32_0 = arith.constant 0 : i32
    %c0_i32_1 = arith.constant 0 : i32
    return %arg1, %c0_i32, %c0_i32_0 : i32, i32, i32
  }
  func.func @transform_18(%arg0: i32, %arg1: i32) -> (i32, i32, i32) {
    %c0_i32 = arith.constant 0 : i32
    %c0_i32_0 = arith.constant 0 : i32
    %c0_i32_1 = arith.constant 0 : i32
    return %arg1, %c0_i32, %c0_i32_0 : i32, i32, i32
  }
  func.func @transform_19(%arg0: i32, %arg1: i32) -> (i32, i32, i32) {
    %c0_i32 = arith.constant 0 : i32
    %c0_i32_0 = arith.constant 0 : i32
    %c0_i32_1 = arith.constant 0 : i32
    return %arg1, %c0_i32, %c0_i32_0 : i32, i32, i32
  }
  func.func @transform_20(%arg0: i32, %arg1: i32) -> (i32, i32, i32) {
    %c0_i32 = arith.constant 0 : i32
    %c0_i32_0 = arith.constant 0 : i32
    %c0_i32_1 = arith.constant 0 : i32
    return %arg1, %c0_i32, %c0_i32_0 : i32, i32, i32
  }
  func.func @transform_21(%arg0: i32, %arg1: i32) -> (i32, i32, i32) {
    %c0_i32 = arith.constant 0 : i32
    %c0_i32_0 = arith.constant 0 : i32
    %c0_i32_1 = arith.constant 0 : i32
    return %arg1, %c0_i32, %c0_i32_0 : i32, i32, i32
  }
  func.func @transform_22(%arg0: i32, %arg1: i32) -> (i32, i32) {
    %c0_i32 = arith.constant 0 : i32
    %c0_i32_0 = arith.constant 0 : i32
    %c0_i32_1 = arith.constant 0 : i32
    return %c0_i32, %c0_i32_0 : i32, i32
  }
  func.func @transform_23(%arg0: i32, %arg1: i32) -> (i32, i32) {
    %c0_i32 = arith.constant 0 : i32
    %c0_i32_0 = arith.constant 0 : i32
    %c0_i32_1 = arith.constant 0 : i32
    return %c0_i32, %c0_i32_0 : i32, i32
  }
  func.func @transform_24(%arg0: i32, %arg1: i32) -> (i32, i32) {
    %c0_i32 = arith.constant 0 : i32
    %c0_i32_0 = arith.constant 0 : i32
    %c0_i32_1 = arith.constant 0 : i32
    return %c0_i32, %c0_i32_0 : i32, i32
  }
  func.func @transform_25(%arg0: i32, %arg1: i32) -> (i32, i32) {
    %c0_i32 = arith.constant 0 : i32
    %c0_i32_0 = arith.constant 0 : i32
    %c0_i32_1 = arith.constant 0 : i32
    return %c0_i32, %c0_i32_0 : i32, i32
  }
  func.func @transform_26(%arg0: i32, %arg1: i32) -> (i32, i32) {
    %c0_i32 = arith.constant 0 : i32
    %c0_i32_0 = arith.constant 0 : i32
    %c0_i32_1 = arith.constant 0 : i32
    return %c0_i32, %c0_i32_0 : i32, i32
  }
  func.func @transform_27(%arg0: i32, %arg1: i32) -> (i32, i32) {
    %c0_i32 = arith.constant 0 : i32
    %c0_i32_0 = arith.constant 0 : i32
    %c0_i32_1 = arith.constant 0 : i32
    return %c0_i32, %c0_i32_0 : i32, i32
  }
  func.func @transform_28(%arg0: i32, %arg1: i32) -> (i32, i32) {
    %c0_i32 = arith.constant 0 : i32
    %c0_i32_0 = arith.constant 0 : i32
    %c0_i32_1 = arith.constant 0 : i32
    return %c0_i32, %c0_i32_0 : i32, i32
  }
  func.func @transform_29(%arg0: i32, %arg1: i32) -> (i32, i32) {
    %c0_i32 = arith.constant 0 : i32
    %c0_i32_0 = arith.constant 0 : i32
    return %arg0, %c0_i32 : i32, i32
  }
}

</mosaic_0001>

<llo_original>
// kernel: forward.1
$region0: #{forward.1}
  #allocation0 [shape = 'u32[]', space=smem, size = 0x4, offset = 0x4, fixed_abs, tag = 'smem constant byte address 0x4 - core index']
  #allocation1 [shape = 'u32[144,128]{1,0:T(1,128)}', space=vmem, size = 0x12000, scoped, tag = 'internal scratch']
  #allocation2 [shape = 'f32[34,64]{1,0:T(8,128)}', space=vmem, size = 0x5000, scoped, tag = 'scratch operand']
  #allocation3 [shape = 'f32[34,64]{1,0:T(8,128)}', space=vmem, size = 0x5000, scoped, tag = 'scratch operand']
  %s0 = inlined_call_operand.smem [shape: u32[30], index: -1, kind: input, shape index: {}]
  %s1 = sld [smem:[%s0]]
  %s2 = scalar_lea.smem %s0, 1
  %s3 = sld [smem:[%s2]]
  %s4 = scalar_lea.smem %s0, 2
  %s5 = sld [smem:[%s4]]
  %s6 = scalar_lea.smem %s0, 3
  %s7 = sld [smem:[%s6]]
  %s8 = scalar_lea.smem %s0, 4
  %s9 = sld [smem:[%s8]]
  %s10 = scalar_lea.smem %s0, 5
  %s11 = sld [smem:[%s10]]
  %s12 = scalar_lea.smem %s0, 6
  %s13 = sld [smem:[%s12]]
  %s14 = scalar_lea.smem %s0, 7
  %s15 = sld [smem:[%s14]]
  %s16 = scalar_lea.smem %s0, 8
  %s17 = sld [smem:[%s16]]
  %s18 = scalar_lea.smem %s0, 9
  %s19 = sld [smem:[%s18]]
  %s20 = scalar_lea.smem %s0, 10
  %s21 = sld [smem:[%s20]]
  %s22 = scalar_lea.smem %s0, 11
  %s23 = sld [smem:[%s22]]
  %s24 = scalar_lea.smem %s0, 12
  %s25 = sld [smem:[%s24]]
  %s26 = scalar_lea.smem %s0, 13
  %s27 = sld [smem:[%s26]]
  %s28 = scalar_lea.smem %s0, 14
  %s29 = sld [smem:[%s28]]
  %s30 = scalar_lea.smem %s0, 15
  %s31 = sld [smem:[%s30]]
  %s32 = scalar_lea.smem %s0, 16
  %s33 = sld [smem:[%s32]]
  %s34 = scalar_lea.smem %s0, 17
  %s35 = sld [smem:[%s34]]
  %s36 = scalar_lea.smem %s0, 18
  %s37 = sld [smem:[%s36]]
  %s38 = scalar_lea.smem %s0, 19
  %s39 = sld [smem:[%s38]]
  %s40 = scalar_lea.smem %s0, 20
  %s41 = sld [smem:[%s40]]
  %s42 = scalar_lea.smem %s0, 21
  %s43 = sld [smem:[%s42]]
  %s44 = scalar_lea.smem %s0, 22
  %s45 = sld [smem:[%s44]]
  %s46 = scalar_lea.smem %s0, 23
  %s47 = sld [smem:[%s46]]
  %s48 = scalar_lea.smem %s0, 24
  %s49 = sld [smem:[%s48]]
  %s50 = scalar_lea.smem %s0, 25
  %s51 = sld [smem:[%s50]]
  %s52 = scalar_lea.smem %s0, 26
  %s53 = sld [smem:[%s52]]
  %s54 = scalar_lea.smem %s0, 27
  %s55 = sld [smem:[%s54]]
  %s56 = scalar_lea.smem %s0, 28
  %s57 = sld [smem:[%s56]]
  %s58 = scalar_lea.smem %s0, 29
  %s59 = sld [smem:[%s58]]
  %s60 = sld [smem:[#allocation0]]
  $region157: #{forward.1} parent=0
    _
  %s62 = ssub.s32 1, %s60
  %s63 = scalar_select 0, %s62, %s60
  $region1: #{forward.1} parent=0
    #allocation4 [shape = 'u8[1024]{0}', space=vmem, size = 0x400, scoped, tag = 'output window, operand 0, single buffered']
    #allocation5 [shape = 's32[2]{0}', space=sflag, size = 0x8, scoped, tag = 'scoped memory for forward.1']
    %64 = vsyncpa [#allocation5], 0
    loop: start=0, step=1, limit=4
    $region2: #{forward.1} parent=1 // loop_pre_header
      _
    $region3: #{forward.1} parent=1 // loop_header
      %s66 = sphi 0, %s70
      %p67 = scmp.ge.s32.totalorder %s66, 4
      %s73 = sphi 0, %s85
      %s74 = sphi 0, %s81
      %s75 = sphi 0, %s73
      %s76 = sphi 0, %s74
      %s77 = sphi 0, %s75
      %s78 = sphi 0, %s76
      %s88 = sphi 0, %s90
      %s91 = sphi 0, %s88
      %s92 = sphi 0, %s91
      %s108 = sphi 0, %s92
      %s112 = sphi 0, %s112
      %s114 = sphi 0, %s112
      %s115 = sphi 0, %s114
      %s129 = sphi 0, %s115
      %s133 = sphi 0, %s133
      %s135 = sphi 0, %s133
      %s136 = sphi 0, %s135
      %s150 = sphi 0, %s136
      %s154 = sphi 0, %s154
      %s156 = sphi 0, %s154
      %s157 = sphi 0, %s156
      %s171 = sphi 0, %s157
      %s175 = sphi 0, %s175
      %s177 = sphi 0, %s175
      %s178 = sphi 0, %s177
      %s192 = sphi 0, %s178
      %s196 = sphi 0, %s196
      %s198 = sphi 0, %s196
      %s199 = sphi 0, %s198
      %s213 = sphi 0, %s199
      %s219 = sphi 0, %s221
      %s222 = sphi 0, %s219
      %s223 = sphi 0, %s222
      %s239 = sphi 0, %s223
      %s245 = sphi 0, %s247
      %s248 = sphi 0, %s245
      %s249 = sphi 0, %s248
      %s265 = sphi 0, %s249
      %s271 = sphi 0, %s273
      %s274 = sphi 0, %s271
      %s275 = sphi 0, %s274
      %s291 = sphi 0, %s275
      %s297 = sphi 0, %s299
      %s300 = sphi 0, %s297
      %s301 = sphi 0, %s300
      %s317 = sphi 0, %s301
      %s323 = sphi 0, %s325
      %s326 = sphi 0, %s323
      %s327 = sphi 0, %s326
      %s343 = sphi 0, %s327
      %s349 = sphi 0, %s351
      %s352 = sphi 0, %s349
      %s353 = sphi 0, %s352
      %s369 = sphi 0, %s353
      %s375 = sphi 0, %s377
      %s378 = sphi 0, %s375
      %s379 = sphi 0, %s378
      %s395 = sphi 0, %s379
      %s401 = sphi 0, %s403
      %s404 = sphi 0, %s401
      %s405 = sphi 0, %s404
      %s421 = sphi 0, %s405
      %s427 = sphi 0, %s429
      %s430 = sphi 0, %s427
      %s431 = sphi 0, %s430
      %s447 = sphi 0, %s431
      %s453 = sphi 0, %s455
      %s456 = sphi 0, %s453
      %s457 = sphi 0, %s456
      %s473 = sphi 0, %s457
      %s479 = sphi 0, %s481
      %s482 = sphi 0, %s479
      %s483 = sphi 0, %s482
      %s499 = sphi 0, %s483
      %s505 = sphi 0, %s507
      %s508 = sphi 0, %s505
      %s509 = sphi 0, %s508
      %s525 = sphi 0, %s509
      %s531 = sphi 0, %s533
      %s534 = sphi 0, %s531
      %s535 = sphi 0, %s534
      %s551 = sphi 0, %s535
      %s557 = sphi 0, %s559
      %s560 = sphi 0, %s557
      %s561 = sphi 0, %s560
      %s577 = sphi 0, %s561
      %s583 = sphi 0, %s585
      %s586 = sphi 0, %s583
      %s587 = sphi 0, %s586
      %s603 = sphi 0, %s587
      %s609 = sphi 0, %s611
      %s612 = sphi 0, %s609
      %s613 = sphi 0, %s612
      %s629 = sphi 0, %s613
      %s633 = sphi 0, %s633
      %s635 = sphi 0, %s633
      %s636 = sphi 0, %s635
      %s650 = sphi 0, %s636
      %s654 = sphi 0, %s654
      %s656 = sphi 0, %s654
      %s657 = sphi 0, %s656
      %s671 = sphi 0, %s657
      %s675 = sphi 0, %s675
      %s677 = sphi 0, %s675
      %s678 = sphi 0, %s677
      %s692 = sphi 0, %s678
      %s696 = sphi 0, %s696
      %s698 = sphi 0, %s696
      %s699 = sphi 0, %s698
      %s713 = sphi 0, %s699
      %s717 = sphi 0, %s717
      %s719 = sphi 0, %s717
      %s720 = sphi 0, %s719
      %s734 = sphi 0, %s720
      %s738 = sphi 0, %s738
      %s740 = sphi 0, %s738
      %s741 = sphi 0, %s740
      %s755 = sphi 0, %s741
      %s759 = sphi 0, %s759
      %s761 = sphi 0, %s759
      %s762 = sphi 0, %s761
      %s776 = sphi 0, %s762
      %s782 = sphi 0, %s784
      %s785 = sphi 0, %s782
      %s786 = sphi 0, %s785
      %s802 = sphi 0, %s786
    $region4: #{forward.1} parent=1 // loop_header_branch
      %69 = sbr.rel (%p67) target = $region8
    $region5: #{forward.1} parent=1 // loop_body
      %s71 = ssub.s32 %s66, 1
      %s72 = ssub.s32 %s66, 2
      %s79 = sadd.s32 1, %s74
      %p80 = scmp.ge.s32.totalorder %s79, 2
      %s81 = scalar_select %p80, 0, %s79
      %s82 = sadd.s32 1, %s73
      %s83 = scalar_select %p80, %s82, %s73
      %p84 = scmp.ge.s32.totalorder %s83, 1
      %s85 = scalar_select %p84, 0, %s83
      %s86 = ssub.s32 %s73, %s85
      %p87 = scmp.eq.s32.totalorder %s86, 0
      %s89 = sadd.s32 %s88, 1
      %s90 = scalar_select %p87, %s88, %s89
      %p93 = pneg %p87
      %p94 = scmp.eq.s32.totalorder %s66, 1
      %p95 = por %p93, %p94
      %p96 = scmp.ne.s32.totalorder %s88, %s91
      %p97 = scmp.eq.s32.totalorder %s66, 0
      %p98 = por %p96, %p97
      %p99 = scmp.ne.s32.totalorder %s88, %s91
      %p100 = scmp.eq.s32.totalorder %s71, 1
      %p101 = por %p99, %p100
      %p102 = scmp.ne.s32.totalorder %s91, %s92
      %p103 = scmp.eq.s32.totalorder %s71, 0
      %p104 = por %p102, %p103
      %p105 = scmp.ne.s32.totalorder %s91, %s92
      %p106 = scmp.eq.s32.totalorder %s72, 1
      %p107 = por %p105, %p106
      %p109 = scmp.ne.s32.totalorder %s92, %s108
      %p110 = scmp.eq.s32.totalorder %s72, 0
      %p111 = por %p109, %p110
      %s113 = sadd.s32 %s112, 1
      %p116 = scmp.eq.s32.totalorder %s66, 1
      %p117 = scmp.ne.s32.totalorder %s112, %s114
      %p118 = scmp.eq.s32.totalorder %s66, 0
      %p119 = por %p117, %p118
      %p120 = scmp.ne.s32.totalorder %s112, %s114
      %p121 = scmp.eq.s32.totalorder %s71, 1
      %p122 = por %p120, %p121
      %p123 = scmp.ne.s32.totalorder %s114, %s115
      %p124 = scmp.eq.s32.totalorder %s71, 0
      %p125 = por %p123, %p124
      %p126 = scmp.ne.s32.totalorder %s114, %s115
      %p127 = scmp.eq.s32.totalorder %s72, 1
      %p128 = por %p126, %p127
      %p130 = scmp.ne.s32.totalorder %s115, %s129
      %p131 = scmp.eq.s32.totalorder %s72, 0
      %p132 = por %p130, %p131
      %s134 = sadd.s32 %s133, 1
      %p137 = scmp.eq.s32.totalorder %s66, 1
      %p138 = scmp.ne.s32.totalorder %s133, %s135
      %p139 = scmp.eq.s32.totalorder %s66, 0
      %p140 = por %p138, %p139
      %p141 = scmp.ne.s32.totalorder %s133, %s135
      %p142 = scmp.eq.s32.totalorder %s71, 1
      %p143 = por %p141, %p142
      %p144 = scmp.ne.s32.totalorder %s135, %s136
      %p145 = scmp.eq.s32.totalorder %s71, 0
      %p146 = por %p144, %p145
      %p147 = scmp.ne.s32.totalorder %s135, %s136
      %p148 = scmp.eq.s32.totalorder %s72, 1
      %p149 = por %p147, %p148
      %p151 = scmp.ne.s32.totalorder %s136, %s150
      %p152 = scmp.eq.s32.totalorder %s72, 0
      %p153 = por %p151, %p152
      %s155 = sadd.s32 %s154, 1
      %p158 = scmp.eq.s32.totalorder %s66, 1
      %p159 = scmp.ne.s32.totalorder %s154, %s156
      %p160 = scmp.eq.s32.totalorder %s66, 0
      %p161 = por %p159, %p160
      %p162 = scmp.ne.s32.totalorder %s154, %s156
      %p163 = scmp.eq.s32.totalorder %s71, 1
      %p164 = por %p162, %p163
      %p165 = scmp.ne.s32.totalorder %s156, %s157
      %p166 = scmp.eq.s32.totalorder %s71, 0
      %p167 = por %p165, %p166
      %p168 = scmp.ne.s32.totalorder %s156, %s157
      %p169 = scmp.eq.s32.totalorder %s72, 1
      %p170 = por %p168, %p169
      %p172 = scmp.ne.s32.totalorder %s157, %s171
      %p173 = scmp.eq.s32.totalorder %s72, 0
      %p174 = por %p172, %p173
      %s176 = sadd.s32 %s175, 1
      %p179 = scmp.eq.s32.totalorder %s66, 1
      %p180 = scmp.ne.s32.totalorder %s175, %s177
      %p181 = scmp.eq.s32.totalorder %s66, 0
      %p182 = por %p180, %p181
      %p183 = scmp.ne.s32.totalorder %s175, %s177
      %p184 = scmp.eq.s32.totalorder %s71, 1
      %p185 = por %p183, %p184
      %p186 = scmp.ne.s32.totalorder %s177, %s178
      %p187 = scmp.eq.s32.totalorder %s71, 0
      %p188 = por %p186, %p187
      %p189 = scmp.ne.s32.totalorder %s177, %s178
      %p190 = scmp.eq.s32.totalorder %s72, 1
      %p191 = por %p189, %p190
      %p193 = scmp.ne.s32.totalorder %s178, %s192
      %p194 = scmp.eq.s32.totalorder %s72, 0
      %p195 = por %p193, %p194
      %s197 = sadd.s32 %s196, 1
      %p200 = scmp.eq.s32.totalorder %s66, 1
      %p201 = scmp.ne.s32.totalorder %s196, %s198
      %p202 = scmp.eq.s32.totalorder %s66, 0
      %p203 = por %p201, %p202
      %p204 = scmp.ne.s32.totalorder %s196, %s198
      %p205 = scmp.eq.s32.totalorder %s71, 1
      %p206 = por %p204, %p205
      %p207 = scmp.ne.s32.totalorder %s198, %s199
      %p208 = scmp.eq.s32.totalorder %s71, 0
      %p209 = por %p207, %p208
      %p210 = scmp.ne.s32.totalorder %s198, %s199
      %p211 = scmp.eq.s32.totalorder %s72, 1
      %p212 = por %p210, %p211
      %p214 = scmp.ne.s32.totalorder %s199, %s213
      %p215 = scmp.eq.s32.totalorder %s72, 0
      %p216 = por %p214, %p215
      %s217 = ssub.s32 %s74, %s81
      %p218 = scmp.eq.s32.totalorder %s217, 0
      %s220 = sadd.s32 %s219, 1
      %s221 = scalar_select %p218, %s219, %s220
      %p224 = pneg %p218
      %p225 = scmp.eq.s32.totalorder %s66, 1
      %p226 = por %p224, %p225
      %p227 = scmp.ne.s32.totalorder %s219, %s222
      %p228 = scmp.eq.s32.totalorder %s66, 0
      %p229 = por %p227, %p228
      %p230 = scmp.ne.s32.totalorder %s219, %s222
      %p231 = scmp.eq.s32.totalorder %s71, 1
      %p232 = por %p230, %p231
      %p233 = scmp.ne.s32.totalorder %s222, %s223
      %p234 = scmp.eq.s32.totalorder %s71, 0
      %p235 = por %p233, %p234
      %p236 = scmp.ne.s32.totalorder %s222, %s223
      %p237 = scmp.eq.s32.totalorder %s72, 1
      %p238 = por %p236, %p237
      %p240 = scmp.ne.s32.totalorder %s223, %s239
      %p241 = scmp.eq.s32.totalorder %s72, 0
      %p242 = por %p240, %p241
      %s243 = ssub.s32 %s74, %s81
      %p244 = scmp.eq.s32.totalorder %s243, 0
      %s246 = sadd.s32 %s245, 1
      %s247 = scalar_select %p244, %s245, %s246
      %p250 = pneg %p244
      %p251 = scmp.eq.s32.totalorder %s66, 1
      %p252 = por %p250, %p251
      %p253 = scmp.ne.s32.totalorder %s245, %s248
      %p254 = scmp.eq.s32.totalorder %s66, 0
      %p255 = por %p253, %p254
      %p256 = scmp.ne.s32.totalorder %s245, %s248
      %p257 = scmp.eq.s32.totalorder %s71, 1
      %p258 = por %p256, %p257
      %p259 = scmp.ne.s32.totalorder %s248, %s249
      %p260 = scmp.eq.s32.totalorder %s71, 0
      %p261 = por %p259, %p260
      %p262 = scmp.ne.s32.totalorder %s248, %s249
      %p263 = scmp.eq.s32.totalorder %s72, 1
      %p264 = por %p262, %p263
      %p266 = scmp.ne.s32.totalorder %s249, %s265
      %p267 = scmp.eq.s32.totalorder %s72, 0
      %p268 = por %p266, %p267
      %s269 = ssub.s32 %s74, %s81
      %p270 = scmp.eq.s32.totalorder %s269, 0
      %s272 = sadd.s32 %s271, 1
      %s273 = scalar_select %p270, %s271, %s272
      %p276 = pneg %p270
      %p277 = scmp.eq.s32.totalorder %s66, 1
      %p278 = por %p276, %p277
      %p279 = scmp.ne.s32.totalorder %s271, %s274
      %p280 = scmp.eq.s32.totalorder %s66, 0
      %p281 = por %p279, %p280
      %p282 = scmp.ne.s32.totalorder %s271, %s274
      %p283 = scmp.eq.s32.totalorder %s71, 1
      %p284 = por %p282, %p283
      %p285 = scmp.ne.s32.totalorder %s274, %s275
      %p286 = scmp.eq.s32.totalorder %s71, 0
      %p287 = por %p285, %p286
      %p288 = scmp.ne.s32.totalorder %s274, %s275
      %p289 = scmp.eq.s32.totalorder %s72, 1
      %p290 = por %p288, %p289
      %p292 = scmp.ne.s32.totalorder %s275, %s291
      %p293 = scmp.eq.s32.totalorder %s72, 0
      %p294 = por %p292, %p293
      %s295 = ssub.s32 %s74, %s81
      %p296 = scmp.eq.s32.totalorder %s295, 0
      %s298 = sadd.s32 %s297, 1
      %s299 = scalar_select %p296, %s297, %s298
      %p302 = pneg %p296
      %p303 = scmp.eq.s32.totalorder %s66, 1
      %p304 = por %p302, %p303
      %p305 = scmp.ne.s32.totalorder %s297, %s300
      %p306 = scmp.eq.s32.totalorder %s66, 0
      %p307 = por %p305, %p306
      %p308 = scmp.ne.s32.totalorder %s297, %s300
      %p309 = scmp.eq.s32.totalorder %s71, 1
      %p310 = por %p308, %p309
      %p311 = scmp.ne.s32.totalorder %s300, %s301
      %p312 = scmp.eq.s32.totalorder %s71, 0
      %p313 = por %p311, %p312
      %p314 = scmp.ne.s32.totalorder %s300, %s301
      %p315 = scmp.eq.s32.totalorder %s72, 1
      %p316 = por %p314, %p315
      %p318 = scmp.ne.s32.totalorder %s301, %s317
      %p319 = scmp.eq.s32.totalorder %s72, 0
      %p320 = por %p318, %p319
      %s321 = ssub.s32 %s74, %s81
      %p322 = scmp.eq.s32.totalorder %s321, 0
      %s324 = sadd.s32 %s323, 1
      %s325 = scalar_select %p322, %s323, %s324
      %p328 = pneg %p322
      %p329 = scmp.eq.s32.totalorder %s66, 1
      %p330 = por %p328, %p329
      %p331 = scmp.ne.s32.totalorder %s323, %s326
      %p332 = scmp.eq.s32.totalorder %s66, 0
      %p333 = por %p331, %p332
      %p334 = scmp.ne.s32.totalorder %s323, %s326
      %p335 = scmp.eq.s32.totalorder %s71, 1
      %p336 = por %p334, %p335
      %p337 = scmp.ne.s32.totalorder %s326, %s327
      %p338 = scmp.eq.s32.totalorder %s71, 0
      %p339 = por %p337, %p338
      %p340 = scmp.ne.s32.totalorder %s326, %s327
      %p341 = scmp.eq.s32.totalorder %s72, 1
      %p342 = por %p340, %p341
      %p344 = scmp.ne.s32.totalorder %s327, %s343
      %p345 = scmp.eq.s32.totalorder %s72, 0
      %p346 = por %p344, %p345
      %s347 = ssub.s32 %s74, %s81
      %p348 = scmp.eq.s32.totalorder %s347, 0
      %s350 = sadd.s32 %s349, 1
      %s351 = scalar_select %p348, %s349, %s350
      %p354 = pneg %p348
      %p355 = scmp.eq.s32.totalorder %s66, 1
      %p356 = por %p354, %p355
      %p357 = scmp.ne.s32.totalorder %s349, %s352
      %p358 = scmp.eq.s32.totalorder %s66, 0
      %p359 = por %p357, %p358
      %p360 = scmp.ne.s32.totalorder %s349, %s352
      %p361 = scmp.eq.s32.totalorder %s71, 1
      %p362 = por %p360, %p361
      %p363 = scmp.ne.s32.totalorder %s352, %s353
      %p364 = scmp.eq.s32.totalorder %s71, 0
      %p365 = por %p363, %p364
      %p366 = scmp.ne.s32.totalorder %s352, %s353
      %p367 = scmp.eq.s32.totalorder %s72, 1
      %p368 = por %p366, %p367
      %p370 = scmp.ne.s32.totalorder %s353, %s369
      %p371 = scmp.eq.s32.totalorder %s72, 0
      %p372 = por %p370, %p371
      %s373 = ssub.s32 %s74, %s81
      %p374 = scmp.eq.s32.totalorder %s373, 0
      %s376 = sadd.s32 %s375, 1
      %s377 = scalar_select %p374, %s375, %s376
      %p380 = pneg %p374
      %p381 = scmp.eq.s32.totalorder %s66, 1
      %p382 = por %p380, %p381
      %p383 = scmp.ne.s32.totalorder %s375, %s378
      %p384 = scmp.eq.s32.totalorder %s66, 0
      %p385 = por %p383, %p384
      %p386 = scmp.ne.s32.totalorder %s375, %s378
      %p387 = scmp.eq.s32.totalorder %s71, 1
      %p388 = por %p386, %p387
      %p389 = scmp.ne.s32.totalorder %s378, %s379
      %p390 = scmp.eq.s32.totalorder %s71, 0
      %p391 = por %p389, %p390
      %p392 = scmp.ne.s32.totalorder %s378, %s379
      %p393 = scmp.eq.s32.totalorder %s72, 1
      %p394 = por %p392, %p393
      %p396 = scmp.ne.s32.totalorder %s379, %s395
      %p397 = scmp.eq.s32.totalorder %s72, 0
      %p398 = por %p396, %p397
      %s399 = ssub.s32 %s74, %s81
      %p400 = scmp.eq.s32.totalorder %s399, 0
      %s402 = sadd.s32 %s401, 1
      %s403 = scalar_select %p400, %s401, %s402
      %p406 = pneg %p400
      %p407 = scmp.eq.s32.totalorder %s66, 1
      %p408 = por %p406, %p407
      %p409 = scmp.ne.s32.totalorder %s401, %s404
      %p410 = scmp.eq.s32.totalorder %s66, 0
      %p411 = por %p409, %p410
      %p412 = scmp.ne.s32.totalorder %s401, %s404
      %p413 = scmp.eq.s32.totalorder %s71, 1
      %p414 = por %p412, %p413
      %p415 = scmp.ne.s32.totalorder %s404, %s405
      %p416 = scmp.eq.s32.totalorder %s71, 0
      %p417 = por %p415, %p416
      %p418 = scmp.ne.s32.totalorder %s404, %s405
      %p419 = scmp.eq.s32.totalorder %s72, 1
      %p420 = por %p418, %p419
      %p422 = scmp.ne.s32.totalorder %s405, %s421
      %p423 = scmp.eq.s32.totalorder %s72, 0
      %p424 = por %p422, %p423
      %s425 = ssub.s32 %s74, %s81
      %p426 = scmp.eq.s32.totalorder %s425, 0
      %s428 = sadd.s32 %s427, 1
      %s429 = scalar_select %p426, %s427, %s428
      %p432 = pneg %p426
      %p433 = scmp.eq.s32.totalorder %s66, 1
      %p434 = por %p432, %p433
      %p435 = scmp.ne.s32.totalorder %s427, %s430
      %p436 = scmp.eq.s32.totalorder %s66, 0
      %p437 = por %p435, %p436
      %p438 = scmp.ne.s32.totalorder %s427, %s430
      %p439 = scmp.eq.s32.totalorder %s71, 1
      %p440 = por %p438, %p439
      %p441 = scmp.ne.s32.totalorder %s430, %s431
      %p442 = scmp.eq.s32.totalorder %s71, 0
      %p443 = por %p441, %p442
      %p444 = scmp.ne.s32.totalorder %s430, %s431
      %p445 = scmp.eq.s32.totalorder %s72, 1
      %p446 = por %p444, %p445
      %p448 = scmp.ne.s32.totalorder %s431, %s447
      %p449 = scmp.eq.s32.totalorder %s72, 0
      %p450 = por %p448, %p449
      %s451 = ssub.s32 %s74, %s81
      %p452 = scmp.eq.s32.totalorder %s451, 0
      %s454 = sadd.s32 %s453, 1
      %s455 = scalar_select %p452, %s453, %s454
      %p458 = pneg %p452
      %p459 = scmp.eq.s32.totalorder %s66, 1
      %p460 = por %p458, %p459
      %p461 = scmp.ne.s32.totalorder %s453, %s456
      %p462 = scmp.eq.s32.totalorder %s66, 0
      %p463 = por %p461, %p462
      %p464 = scmp.ne.s32.totalorder %s453, %s456
      %p465 = scmp.eq.s32.totalorder %s71, 1
      %p466 = por %p464, %p465
      %p467 = scmp.ne.s32.totalorder %s456, %s457
      %p468 = scmp.eq.s32.totalorder %s71, 0
      %p469 = por %p467, %p468
      %p470 = scmp.ne.s32.totalorder %s456, %s457
      %p471 = scmp.eq.s32.totalorder %s72, 1
      %p472 = por %p470, %p471
      %p474 = scmp.ne.s32.totalorder %s457, %s473
      %p475 = scmp.eq.s32.totalorder %s72, 0
      %p476 = por %p474, %p475
      %s477 = ssub.s32 %s74, %s81
      %p478 = scmp.eq.s32.totalorder %s477, 0
      %s480 = sadd.s32 %s479, 1
      %s481 = scalar_select %p478, %s479, %s480
      %p484 = pneg %p478
      %p485 = scmp.eq.s32.totalorder %s66, 1
      %p486 = por %p484, %p485
      %p487 = scmp.ne.s32.totalorder %s479, %s482
      %p488 = scmp.eq.s32.totalorder %s66, 0
      %p489 = por %p487, %p488
      %p490 = scmp.ne.s32.totalorder %s479, %s482
      %p491 = scmp.eq.s32.totalorder %s71, 1
      %p492 = por %p490, %p491
      %p493 = scmp.ne.s32.totalorder %s482, %s483
      %p494 = scmp.eq.s32.totalorder %s71, 0
      %p495 = por %p493, %p494
      %p496 = scmp.ne.s32.totalorder %s482, %s483
      %p497 = scmp.eq.s32.totalorder %s72, 1
      %p498 = por %p496, %p497
      %p500 = scmp.ne.s32.totalorder %s483, %s499
      %p501 = scmp.eq.s32.totalorder %s72, 0
      %p502 = por %p500, %p501
      %s503 = ssub.s32 %s74, %s81
      %p504 = scmp.eq.s32.totalorder %s503, 0
      %s506 = sadd.s32 %s505, 1
      %s507 = scalar_select %p504, %s505, %s506
      %p510 = pneg %p504
      %p511 = scmp.eq.s32.totalorder %s66, 1
      %p512 = por %p510, %p511
      %p513 = scmp.ne.s32.totalorder %s505, %s508
      %p514 = scmp.eq.s32.totalorder %s66, 0
      %p515 = por %p513, %p514
      %p516 = scmp.ne.s32.totalorder %s505, %s508
      %p517 = scmp.eq.s32.totalorder %s71, 1
      %p518 = por %p516, %p517
      %p519 = scmp.ne.s32.totalorder %s508, %s509
      %p520 = scmp.eq.s32.totalorder %s71, 0
      %p521 = por %p519, %p520
      %p522 = scmp.ne.s32.totalorder %s508, %s509
      %p523 = scmp.eq.s32.totalorder %s72, 1
      %p524 = por %p522, %p523
      %p526 = scmp.ne.s32.totalorder %s509, %s525
      %p527 = scmp.eq.s32.totalorder %s72, 0
      %p528 = por %p526, %p527
      %s529 = ssub.s32 %s74, %s81
      %p530 = scmp.eq.s32.totalorder %s529, 0
      %s532 = sadd.s32 %s531, 1
      %s533 = scalar_select %p530, %s531, %s532
      %p536 = pneg %p530
      %p537 = scmp.eq.s32.totalorder %s66, 1
      %p538 = por %p536, %p537
      %p539 = scmp.ne.s32.totalorder %s531, %s534
      %p540 = scmp.eq.s32.totalorder %s66, 0
      %p541 = por %p539, %p540
      %p542 = scmp.ne.s32.totalorder %s531, %s534
      %p543 = scmp.eq.s32.totalorder %s71, 1
      %p544 = por %p542, %p543
      %p545 = scmp.ne.s32.totalorder %s534, %s535
      %p546 = scmp.eq.s32.totalorder %s71, 0
      %p547 = por %p545, %p546
      %p548 = scmp.ne.s32.totalorder %s534, %s535
      %p549 = scmp.eq.s32.totalorder %s72, 1
      %p550 = por %p548, %p549
      %p552 = scmp.ne.s32.totalorder %s535, %s551
      %p553 = scmp.eq.s32.totalorder %s72, 0
      %p554 = por %p552, %p553
      %s555 = ssub.s32 %s74, %s81
      %p556 = scmp.eq.s32.totalorder %s555, 0
      %s558 = sadd.s32 %s557, 1
      %s559 = scalar_select %p556, %s557, %s558
      %p562 = pneg %p556
      %p563 = scmp.eq.s32.totalorder %s66, 1
      %p564 = por %p562, %p563
      %p565 = scmp.ne.s32.totalorder %s557, %s560
      %p566 = scmp.eq.s32.totalorder %s66, 0
      %p567 = por %p565, %p566
      %p568 = scmp.ne.s32.totalorder %s557, %s560
      %p569 = scmp.eq.s32.totalorder %s71, 1
      %p570 = por %p568, %p569
      %p571 = scmp.ne.s32.totalorder %s560, %s561
      %p572 = scmp.eq.s32.totalorder %s71, 0
      %p573 = por %p571, %p572
      %p574 = scmp.ne.s32.totalorder %s560, %s561
      %p575 = scmp.eq.s32.totalorder %s72, 1
      %p576 = por %p574, %p575
      %p578 = scmp.ne.s32.totalorder %s561, %s577
      %p579 = scmp.eq.s32.totalorder %s72, 0
      %p580 = por %p578, %p579
      %s581 = ssub.s32 %s74, %s81
      %p582 = scmp.eq.s32.totalorder %s581, 0
      %s584 = sadd.s32 %s583, 1
      %s585 = scalar_select %p582, %s583, %s584
      %p588 = pneg %p582
      %p589 = scmp.eq.s32.totalorder %s66, 1
      %p590 = por %p588, %p589
      %p591 = scmp.ne.s32.totalorder %s583, %s586
      %p592 = scmp.eq.s32.totalorder %s66, 0
      %p593 = por %p591, %p592
      %p594 = scmp.ne.s32.totalorder %s583, %s586
      %p595 = scmp.eq.s32.totalorder %s71, 1
      %p596 = por %p594, %p595
      %p597 = scmp.ne.s32.totalorder %s586, %s587
      %p598 = scmp.eq.s32.totalorder %s71, 0
      %p599 = por %p597, %p598
      %p600 = scmp.ne.s32.totalorder %s586, %s587
      %p601 = scmp.eq.s32.totalorder %s72, 1
      %p602 = por %p600, %p601
      %p604 = scmp.ne.s32.totalorder %s587, %s603
      %p605 = scmp.eq.s32.totalorder %s72, 0
      %p606 = por %p604, %p605
      %s607 = ssub.s32 %s74, %s81
      %p608 = scmp.eq.s32.totalorder %s607, 0
      %s610 = sadd.s32 %s609, 1
      %s611 = scalar_select %p608, %s609, %s610
      %p614 = pneg %p608
      %p615 = scmp.eq.s32.totalorder %s66, 1
      %p616 = por %p614, %p615
      %p617 = scmp.ne.s32.totalorder %s609, %s612
      %p618 = scmp.eq.s32.totalorder %s66, 0
      %p619 = por %p617, %p618
      %p620 = scmp.ne.s32.totalorder %s609, %s612
      %p621 = scmp.eq.s32.totalorder %s71, 1
      %p622 = por %p620, %p621
      %p623 = scmp.ne.s32.totalorder %s612, %s613
      %p624 = scmp.eq.s32.totalorder %s71, 0
      %p625 = por %p623, %p624
      %p626 = scmp.ne.s32.totalorder %s612, %s613
      %p627 = scmp.eq.s32.totalorder %s72, 1
      %p628 = por %p626, %p627
      %p630 = scmp.ne.s32.totalorder %s613, %s629
      %p631 = scmp.eq.s32.totalorder %s72, 0
      %p632 = por %p630, %p631
      %s634 = sadd.s32 %s633, 1
      %p637 = scmp.eq.s32.totalorder %s66, 1
      %p638 = scmp.ne.s32.totalorder %s633, %s635
      %p639 = scmp.eq.s32.totalorder %s66, 0
      %p640 = por %p638, %p639
      %p641 = scmp.ne.s32.totalorder %s633, %s635
      %p642 = scmp.eq.s32.totalorder %s71, 1
      %p643 = por %p641, %p642
      %p644 = scmp.ne.s32.totalorder %s635, %s636
      %p645 = scmp.eq.s32.totalorder %s71, 0
      %p646 = por %p644, %p645
      %p647 = scmp.ne.s32.totalorder %s635, %s636
      %p648 = scmp.eq.s32.totalorder %s72, 1
      %p649 = por %p647, %p648
      %p651 = scmp.ne.s32.totalorder %s636, %s650
      %p652 = scmp.eq.s32.totalorder %s72, 0
      %p653 = por %p651, %p652
      %s655 = sadd.s32 %s654, 1
      %p658 = scmp.eq.s32.totalorder %s66, 1
      %p659 = scmp.ne.s32.totalorder %s654, %s656
      %p660 = scmp.eq.s32.totalorder %s66, 0
      %p661 = por %p659, %p660
      %p662 = scmp.ne.s32.totalorder %s654, %s656
      %p663 = scmp.eq.s32.totalorder %s71, 1
      %p664 = por %p662, %p663
      %p665 = scmp.ne.s32.totalorder %s656, %s657
      %p666 = scmp.eq.s32.totalorder %s71, 0
      %p667 = por %p665, %p666
      %p668 = scmp.ne.s32.totalorder %s656, %s657
      %p669 = scmp.eq.s32.totalorder %s72, 1
      %p670 = por %p668, %p669
      %p672 = scmp.ne.s32.totalorder %s657, %s671
      %p673 = scmp.eq.s32.totalorder %s72, 0
      %p674 = por %p672, %p673
      %s676 = sadd.s32 %s675, 1
      %p679 = scmp.eq.s32.totalorder %s66, 1
      %p680 = scmp.ne.s32.totalorder %s675, %s677
      %p681 = scmp.eq.s32.totalorder %s66, 0
      %p682 = por %p680, %p681
      %p683 = scmp.ne.s32.totalorder %s675, %s677
      %p684 = scmp.eq.s32.totalorder %s71, 1
      %p685 = por %p683, %p684
      %p686 = scmp.ne.s32.totalorder %s677, %s678
      %p687 = scmp.eq.s32.totalorder %s71, 0
      %p688 = por %p686, %p687
      %p689 = scmp.ne.s32.totalorder %s677, %s678
      %p690 = scmp.eq.s32.totalorder %s72, 1
      %p691 = por %p689, %p690
      %p693 = scmp.ne.s32.totalorder %s678, %s692
      %p694 = scmp.eq.s32.totalorder %s72, 0
      %p695 = por %p693, %p694
      %s697 = sadd.s32 %s696, 1
      %p700 = scmp.eq.s32.totalorder %s66, 1
      %p701 = scmp.ne.s32.totalorder %s696, %s698
      %p702 = scmp.eq.s32.totalorder %s66, 0
      %p703 = por %p701, %p702
      %p704 = scmp.ne.s32.totalorder %s696, %s698
      %p705 = scmp.eq.s32.totalorder %s71, 1
      %p706 = por %p704, %p705
      %p707 = scmp.ne.s32.totalorder %s698, %s699
      %p708 = scmp.eq.s32.totalorder %s71, 0
      %p709 = por %p707, %p708
      %p710 = scmp.ne.s32.totalorder %s698, %s699
      %p711 = scmp.eq.s32.totalorder %s72, 1
      %p712 = por %p710, %p711
      %p714 = scmp.ne.s32.totalorder %s699, %s713
      %p715 = scmp.eq.s32.totalorder %s72, 0
      %p716 = por %p714, %p715
      %s718 = sadd.s32 %s717, 1
      %p721 = scmp.eq.s32.totalorder %s66, 1
      %p722 = scmp.ne.s32.totalorder %s717, %s719
      %p723 = scmp.eq.s32.totalorder %s66, 0
      %p724 = por %p722, %p723
      %p725 = scmp.ne.s32.totalorder %s717, %s719
      %p726 = scmp.eq.s32.totalorder %s71, 1
      %p727 = por %p725, %p726
      %p728 = scmp.ne.s32.totalorder %s719, %s720
      %p729 = scmp.eq.s32.totalorder %s71, 0
      %p730 = por %p728, %p729
      %p731 = scmp.ne.s32.totalorder %s719, %s720
      %p732 = scmp.eq.s32.totalorder %s72, 1
      %p733 = por %p731, %p732
      %p735 = scmp.ne.s32.totalorder %s720, %s734
      %p736 = scmp.eq.s32.totalorder %s72, 0
      %p737 = por %p735, %p736
      %s739 = sadd.s32 %s738, 1
      %p742 = scmp.eq.s32.totalorder %s66, 1
      %p743 = scmp.ne.s32.totalorder %s738, %s740
      %p744 = scmp.eq.s32.totalorder %s66, 0
      %p745 = por %p743, %p744
      %p746 = scmp.ne.s32.totalorder %s738, %s740
      %p747 = scmp.eq.s32.totalorder %s71, 1
      %p748 = por %p746, %p747
      %p749 = scmp.ne.s32.totalorder %s740, %s741
      %p750 = scmp.eq.s32.totalorder %s71, 0
      %p751 = por %p749, %p750
      %p752 = scmp.ne.s32.totalorder %s740, %s741
      %p753 = scmp.eq.s32.totalorder %s72, 1
      %p754 = por %p752, %p753
      %p756 = scmp.ne.s32.totalorder %s741, %s755
      %p757 = scmp.eq.s32.totalorder %s72, 0
      %p758 = por %p756, %p757
      %s760 = sadd.s32 %s759, 1
      %p763 = scmp.eq.s32.totalorder %s66, 1
      %p764 = scmp.ne.s32.totalorder %s759, %s761
      %p765 = scmp.eq.s32.totalorder %s66, 0
      %p766 = por %p764, %p765
      %p767 = scmp.ne.s32.totalorder %s759, %s761
      %p768 = scmp.eq.s32.totalorder %s71, 1
      %p769 = por %p767, %p768
      %p770 = scmp.ne.s32.totalorder %s761, %s762
      %p771 = scmp.eq.s32.totalorder %s71, 0
      %p772 = por %p770, %p771
      %p773 = scmp.ne.s32.totalorder %s761, %s762
      %p774 = scmp.eq.s32.totalorder %s72, 1
      %p775 = por %p773, %p774
      %p777 = scmp.ne.s32.totalorder %s762, %s776
      %p778 = scmp.eq.s32.totalorder %s72, 0
      %p779 = por %p777, %p778
      %s780 = ssub.s32 %s73, %s85
      %p781 = scmp.eq.s32.totalorder %s780, 0
      %s783 = sadd.s32 %s782, 1
      %s784 = scalar_select %p781, %s782, %s783
      %p787 = pneg %p781
      %p788 = scmp.eq.s32.totalorder %s66, 1
      %p789 = por %p787, %p788
      %p790 = scmp.ne.s32.totalorder %s782, %s785
      %p791 = scmp.eq.s32.totalorder %s66, 0
      %p792 = por %p790, %p791
      %p793 = scmp.ne.s32.totalorder %s782, %s785
      %p794 = scmp.eq.s32.totalorder %s71, 1
      %p795 = por %p793, %p794
      %p796 = scmp.ne.s32.totalorder %s785, %s786
      %p797 = scmp.eq.s32.totalorder %s71, 0
      %p798 = por %p796, %p797
      %p799 = scmp.ne.s32.totalorder %s785, %s786
      %p800 = scmp.eq.s32.totalorder %s72, 1
      %p801 = por %p799, %p800
      %p803 = scmp.ne.s32.totalorder %s786, %s802
      %p804 = scmp.eq.s32.totalorder %s72, 0
      %p805 = por %p803, %p804
      %p806 = scmp.le.s32.totalorder 1, %s66
      %p807 = scmp.lt.s32.totalorder %s66, 3
      %p808 = pnand %p806, %p807
      %p809 = pneg %p808
      // Predicated region
      $region9: #{forward.1} parent=5 // pred_check
        _
      $region10: #{forward.1} parent=5 // pred_check_branch
        %811 = sbr.rel (%p808) target = $region12
      $region11: #{forward.1} parent=5 // pred_region
        %s812 = ssub.s32 %s66, 1
        // Predicated region
        $region13: #{forward.1} parent=11 // pred_check
          %p813 = pneg %p104
        $region14: #{forward.1} parent=11 // pred_check_branch
          %815 = sbr.rel (%p813) target = $region16
        $region15: #{forward.1} parent=11 // pred_region
          %s816 = smul.u32 4, %s75
          %p817 = scmp.lt.s32.totalorder %s816, 3
          %s818 = scalar_select %p817, %s816, 3
          %s819 = smul.addr %s818, 8
          %s820 = scalar_lea.vmem %s1, %s819
          %s821 = smul.u32 4, %s75
        $region16: #{forward.1} parent=11 // pred_fallthru
          _
        // Predicated region
        $region17: #{forward.1} parent=11 // pred_check
          %p822 = pneg %p125
        $region18: #{forward.1} parent=11 // pred_check_branch
          %824 = sbr.rel (%p822) target = $region20
        $region19: #{forward.1} parent=11 // pred_region
          _
        $region20: #{forward.1} parent=11 // pred_fallthru
          _
        // Predicated region
        $region21: #{forward.1} parent=11 // pred_check
          %p825 = pneg %p146
        $region22: #{forward.1} parent=11 // pred_check_branch
          %827 = sbr.rel (%p825) target = $region24
        $region23: #{forward.1} parent=11 // pred_region
          _
        $region24: #{forward.1} parent=11 // pred_fallthru
          _
        // Predicated region
        $region25: #{forward.1} parent=11 // pred_check
          %p828 = pneg %p167
        $region26: #{forward.1} parent=11 // pred_check_branch
          %830 = sbr.rel (%p828) target = $region28
        $region27: #{forward.1} parent=11 // pred_region
          _
        $region28: #{forward.1} parent=11 // pred_fallthru
          _
        // Predicated region
        $region29: #{forward.1} parent=11 // pred_check
          %p831 = pneg %p188
        $region30: #{forward.1} parent=11 // pred_check_branch
          %833 = sbr.rel (%p831) target = $region32
        $region31: #{forward.1} parent=11 // pred_region
          _
        $region32: #{forward.1} parent=11 // pred_fallthru
          _
        // Predicated region
        $region33: #{forward.1} parent=11 // pred_check
          %p834 = pneg %p209
        $region34: #{forward.1} parent=11 // pred_check_branch
          %836 = sbr.rel (%p834) target = $region36
        $region35: #{forward.1} parent=11 // pred_region
          _
        $region36: #{forward.1} parent=11 // pred_fallthru
          _
        // Predicated region
        $region37: #{forward.1} parent=11 // pred_check
          %p837 = pneg %p646
        $region38: #{forward.1} parent=11 // pred_check_branch
          %839 = sbr.rel (%p837) target = $region40
        $region39: #{forward.1} parent=11 // pred_region
          _
        $region40: #{forward.1} parent=11 // pred_fallthru
          _
        // Predicated region
        $region41: #{forward.1} parent=11 // pred_check
          %p840 = pneg %p667
        $region42: #{forward.1} parent=11 // pred_check_branch
          %842 = sbr.rel (%p840) target = $region44
        $region43: #{forward.1} parent=11 // pred_region
          _
        $region44: #{forward.1} parent=11 // pred_fallthru
          _
        // Predicated region
        $region45: #{forward.1} parent=11 // pred_check
          %p843 = pneg %p688
        $region46: #{forward.1} parent=11 // pred_check_branch
          %845 = sbr.rel (%p843) target = $region48
        $region47: #{forward.1} parent=11 // pred_region
          _
        $region48: #{forward.1} parent=11 // pred_fallthru
          _
        // Predicated region
        $region49: #{forward.1} parent=11 // pred_check
          %p846 = pneg %p709
        $region50: #{forward.1} parent=11 // pred_check_branch
          %848 = sbr.rel (%p846) target = $region52
        $region51: #{forward.1} parent=11 // pred_region
          _
        $region52: #{forward.1} parent=11 // pred_fallthru
          _
        // Predicated region
        $region53: #{forward.1} parent=11 // pred_check
          %p849 = pneg %p730
        $region54: #{forward.1} parent=11 // pred_check_branch
          %851 = sbr.rel (%p849) target = $region56
        $region55: #{forward.1} parent=11 // pred_region
          _
        $region56: #{forward.1} parent=11 // pred_fallthru
          _
        // Predicated region
        $region57: #{forward.1} parent=11 // pred_check
          %p852 = pneg %p751
        $region58: #{forward.1} parent=11 // pred_check_branch
          %854 = sbr.rel (%p852) target = $region60
        $region59: #{forward.1} parent=11 // pred_region
          _
        $region60: #{forward.1} parent=11 // pred_fallthru
          _
        // Predicated region
        $region61: #{forward.1} parent=11 // pred_check
          %p855 = pneg %p772
        $region62: #{forward.1} parent=11 // pred_check_branch
          %857 = sbr.rel (%p855) target = $region64
        $region63: #{forward.1} parent=11 // pred_region
          _
        $region64: #{forward.1} parent=11 // pred_fallthru
          _
      $region12: #{forward.1} parent=5 // pred_fallthru
        _
      %p858 = scmp.lt.s32.totalorder %s66, 2
      // Predicated region
      $region65: #{forward.1} parent=5 // pred_check
        %p859 = pneg %p858
      $region66: #{forward.1} parent=5 // pred_check_branch
        %861 = sbr.rel (%p859) target = $region68
      $region67: #{forward.1} parent=5 // pred_region
        // Predicated region
        $region69: #{forward.1} parent=67 // pred_check
          %p862 = pneg %p229
        $region70: #{forward.1} parent=67 // pred_check_branch
          %864 = sbr.rel (%p862) target = $region72
        $region71: #{forward.1} parent=67 // pred_region
          %p865 = scmp.lt.s32.totalorder %s74, 1
          %s866 = scalar_select %p865, %s74, 1
          %s867 = scalar_lea.vmem %s13, %s866
        $region72: #{forward.1} parent=67 // pred_fallthru
          _
        // Predicated region
        $region73: #{forward.1} parent=67 // pred_check
          %p868 = pneg %p255
        $region74: #{forward.1} parent=67 // pred_check_branch
          %870 = sbr.rel (%p868) target = $region76
        $region75: #{forward.1} parent=67 // pred_region
          %p871 = scmp.lt.s32.totalorder %s74, 1
          %s872 = scalar_select %p871, %s74, 1
          %s873 = scalar_lea.vmem %s15, %s872
        $region76: #{forward.1} parent=67 // pred_fallthru
          _
        // Predicated region
        $region77: #{forward.1} parent=67 // pred_check
          %p874 = pneg %p281
        $region78: #{forward.1} parent=67 // pred_check_branch
          %876 = sbr.rel (%p874) target = $region80
        $region79: #{forward.1} parent=67 // pred_region
          %p877 = scmp.lt.s32.totalorder %s74, 1
          %s878 = scalar_select %p877, %s74, 1
          %s879 = smul.addr %s878, 8
          %s880 = smul.addr %s879, 4
          %s881 = scalar_lea.vmem %s17, %s880
        $region80: #{forward.1} parent=67 // pred_fallthru
          _
        // Predicated region
        $region81: #{forward.1} parent=67 // pred_check
          %p882 = pneg %p307
        $region82: #{forward.1} parent=67 // pred_check_branch
          %884 = sbr.rel (%p882) target = $region84
        $region83: #{forward.1} parent=67 // pred_region
          %p885 = scmp.lt.s32.totalorder %s74, 1
          %s886 = scalar_select %p885, %s74, 1
          %s887 = smul.addr %s886, 8
          %s888 = smul.addr %s887, 4
          %s889 = scalar_lea.vmem %s19, %s888
        $region84: #{forward.1} parent=67 // pred_fallthru
          _
        // Predicated region
        $region85: #{forward.1} parent=67 // pred_check
          %p890 = pneg %p333
        $region86: #{forward.1} parent=67 // pred_check_branch
          %892 = sbr.rel (%p890) target = $region88
        $region87: #{forward.1} parent=67 // pred_region
          %p893 = scmp.lt.s32.totalorder %s74, 1
          %s894 = scalar_select %p893, %s74, 1
          %s895 = smul.addr %s894, 8
          %s896 = smul.addr %s895, 4
          %s897 = scalar_lea.vmem %s21, %s896
        $region88: #{forward.1} parent=67 // pred_fallthru
          _
        // Predicated region
        $region89: #{forward.1} parent=67 // pred_check
          %p898 = pneg %p359
        $region90: #{forward.1} parent=67 // pred_check_branch
          %900 = sbr.rel (%p898) target = $region92
        $region91: #{forward.1} parent=67 // pred_region
          %p901 = scmp.lt.s32.totalorder %s74, 1
          %s902 = scalar_select %p901, %s74, 1
          %s903 = scalar_lea.vmem %s23, %s902
        $region92: #{forward.1} parent=67 // pred_fallthru
          _
        // Predicated region
        $region93: #{forward.1} parent=67 // pred_check
          %p904 = pneg %p385
        $region94: #{forward.1} parent=67 // pred_check_branch
          %906 = sbr.rel (%p904) target = $region96
        $region95: #{forward.1} parent=67 // pred_region
          %p907 = scmp.lt.s32.totalorder %s74, 1
          %s908 = scalar_select %p907, %s74, 1
          %s909 = scalar_lea.vmem %s25, %s908
        $region96: #{forward.1} parent=67 // pred_fallthru
          _
        // Predicated region
        $region97: #{forward.1} parent=67 // pred_check
          %p910 = pneg %p411
        $region98: #{forward.1} parent=67 // pred_check_branch
          %912 = sbr.rel (%p910) target = $region100
        $region99: #{forward.1} parent=67 // pred_region
          %p913 = scmp.lt.s32.totalorder %s74, 1
          %s914 = scalar_select %p913, %s74, 1
          %s915 = scalar_lea.vmem %s27, %s914
        $region100: #{forward.1} parent=67 // pred_fallthru
          _
        // Predicated region
        $region101: #{forward.1} parent=67 // pred_check
          %p916 = pneg %p437
        $region102: #{forward.1} parent=67 // pred_check_branch
          %918 = sbr.rel (%p916) target = $region104
        $region103: #{forward.1} parent=67 // pred_region
          %p919 = scmp.lt.s32.totalorder %s74, 1
          %s920 = scalar_select %p919, %s74, 1
          %s921 = smul.addr %s920, 8
          %s922 = smul.addr %s921, 4
          %s923 = scalar_lea.vmem %s29, %s922
        $region104: #{forward.1} parent=67 // pred_fallthru
          _
        // Predicated region
        $region105: #{forward.1} parent=67 // pred_check
          %p924 = pneg %p463
        $region106: #{forward.1} parent=67 // pred_check_branch
          %926 = sbr.rel (%p924) target = $region108
        $region107: #{forward.1} parent=67 // pred_region
          %p927 = scmp.lt.s32.totalorder %s74, 1
          %s928 = scalar_select %p927, %s74, 1
          %s929 = scalar_lea.vmem %s31, %s928
        $region108: #{forward.1} parent=67 // pred_fallthru
          _
        // Predicated region
        $region109: #{forward.1} parent=67 // pred_check
          %p930 = pneg %p489
        $region110: #{forward.1} parent=67 // pred_check_branch
          %932 = sbr.rel (%p930) target = $region112
        $region111: #{forward.1} parent=67 // pred_region
          %p933 = scmp.lt.s32.totalorder %s74, 1
          %s934 = scalar_select %p933, %s74, 1
          %s935 = scalar_lea.vmem %s33, %s934
        $region112: #{forward.1} parent=67 // pred_fallthru
          _
        // Predicated region
        $region113: #{forward.1} parent=67 // pred_check
          %p936 = pneg %p515
        $region114: #{forward.1} parent=67 // pred_check_branch
          %938 = sbr.rel (%p936) target = $region116
        $region115: #{forward.1} parent=67 // pred_region
          %p939 = scmp.lt.s32.totalorder %s74, 1
          %s940 = scalar_select %p939, %s74, 1
          %s941 = scalar_lea.vmem %s35, %s940
        $region116: #{forward.1} parent=67 // pred_fallthru
          _
        // Predicated region
        $region117: #{forward.1} parent=67 // pred_check
          %p942 = pneg %p541
        $region118: #{forward.1} parent=67 // pred_check_branch
          %944 = sbr.rel (%p942) target = $region120
        $region119: #{forward.1} parent=67 // pred_region
          %p945 = scmp.lt.s32.totalorder %s74, 1
          %s946 = scalar_select %p945, %s74, 1
          %s947 = smul.addr %s946, 16
          %s948 = smul.addr %s947, 4
          %s949 = scalar_lea.vmem %s37, %s948
        $region120: #{forward.1} parent=67 // pred_fallthru
          _
        // Predicated region
        $region121: #{forward.1} parent=67 // pred_check
          %p950 = pneg %p567
        $region122: #{forward.1} parent=67 // pred_check_branch
          %952 = sbr.rel (%p950) target = $region124
        $region123: #{forward.1} parent=67 // pred_region
          %p953 = scmp.lt.s32.totalorder %s74, 1
          %s954 = scalar_select %p953, %s74, 1
          %s955 = smul.addr %s954, 2
          %s956 = scalar_lea.vmem %s39, %s955
        $region124: #{forward.1} parent=67 // pred_fallthru
          _
        // Predicated region
        $region125: #{forward.1} parent=67 // pred_check
          %p957 = pneg %p593
        $region126: #{forward.1} parent=67 // pred_check_branch
          %959 = sbr.rel (%p957) target = $region128
        $region127: #{forward.1} parent=67 // pred_region
          %p960 = scmp.lt.s32.totalorder %s74, 1
          %s961 = scalar_select %p960, %s74, 1
          %s962 = smul.addr %s961, 32
          %s963 = smul.addr %s962, 4
          %s964 = scalar_lea.vmem %s41, %s963
        $region128: #{forward.1} parent=67 // pred_fallthru
          _
        // Predicated region
        $region129: #{forward.1} parent=67 // pred_check
          %p965 = pneg %p619
        $region130: #{forward.1} parent=67 // pred_check_branch
          %967 = sbr.rel (%p965) target = $region132
        $region131: #{forward.1} parent=67 // pred_region
          %p968 = scmp.lt.s32.totalorder %s74, 1
          %s969 = scalar_select %p968, %s74, 1
          %s970 = scalar_lea.vmem %s43, %s969
        $region132: #{forward.1} parent=67 // pred_fallthru
          _
      $region68: #{forward.1} parent=5 // pred_fallthru
        _
      %p971 = scmp.le.s32.totalorder 1, %s66
      %p972 = scmp.lt.s32.totalorder %s66, 3
      %p973 = pnand %p971, %p972
      %p974 = pneg %p973
      // Predicated region
      $region133: #{forward.1} parent=5 // pred_check
        _
      $region134: #{forward.1} parent=5 // pred_check_branch
        %976 = sbr.rel (%p973) target = $region136
      $region135: #{forward.1} parent=5 // pred_region
        %s977 = ssub.s32 %s66, 1
        %s978 = smul.u32 4, %s75
        %p979 = scmp.lt.s32.totalorder %s978, 3
        %s980 = scalar_select %p979, %s978, 3
        %s981 = smul.addr %s980, 8
        %s982 = scalar_lea.vmem %s1, %s981
        %p983 = pneg %p104
        %p984 = pneg %p101
        %p985 = pneg %p125
        %p986 = pneg %p122
        %p987 = pneg %p146
        %p988 = pneg %p143
        %p989 = pneg %p167
        %p990 = pneg %p164
        %p991 = pneg %p188
        %p992 = pneg %p185
        %p993 = pneg %p209
        %p994 = pneg %p206
        %p995 = scmp.lt.s32.totalorder %s76, 1
        %s996 = scalar_select %p995, %s76, 1
        %s997 = scalar_lea.vmem %s13, %s996
        %p998 = pneg %p235
        %p999 = pneg %p232
        %p1000 = scmp.lt.s32.totalorder %s76, 1
        %s1001 = scalar_select %p1000, %s76, 1
        %s1002 = scalar_lea.vmem %s15, %s1001
        %p1003 = pneg %p261
        %p1004 = pneg %p258
        %p1005 = scmp.lt.s32.totalorder %s76, 1
        %s1006 = scalar_select %p1005, %s76, 1
        %s1007 = smul.addr %s1006, 8
        %s1008 = smul.addr %s1007, 4
        %s1009 = scalar_lea.vmem %s17, %s1008
        %p1010 = pneg %p287
        %p1011 = pneg %p284
        %p1012 = scmp.lt.s32.totalorder %s76, 1
        %s1013 = scalar_select %p1012, %s76, 1
        %s1014 = smul.addr %s1013, 8
        %s1015 = smul.addr %s1014, 4
        %s1016 = scalar_lea.vmem %s19, %s1015
        %p1017 = pneg %p313
        %p1018 = pneg %p310
        %p1019 = scmp.lt.s32.totalorder %s76, 1
        %s1020 = scalar_select %p1019, %s76, 1
        %s1021 = smul.addr %s1020, 8
        %s1022 = smul.addr %s1021, 4
        %s1023 = scalar_lea.vmem %s21, %s1022
        %p1024 = pneg %p339
        %p1025 = pneg %p336
        %p1026 = scmp.lt.s32.totalorder %s76, 1
        %s1027 = scalar_select %p1026, %s76, 1
        %s1028 = scalar_lea.vmem %s23, %s1027
        %p1029 = pneg %p365
        %p1030 = pneg %p362
        %p1031 = scmp.lt.s32.totalorder %s76, 1
        %s1032 = scalar_select %p1031, %s76, 1
        %s1033 = scalar_lea.vmem %s25, %s1032
        %p1034 = pneg %p391
        %p1035 = pneg %p388
        %p1036 = scmp.lt.s32.totalorder %s76, 1
        %s1037 = scalar_select %p1036, %s76, 1
        %s1038 = scalar_lea.vmem %s27, %s1037
        %p1039 = pneg %p417
        %p1040 = pneg %p414
        %p1041 = scmp.lt.s32.totalorder %s76, 1
        %s1042 = scalar_select %p1041, %s76, 1
        %s1043 = smul.addr %s1042, 8
        %s1044 = smul.addr %s1043, 4
        %s1045 = scalar_lea.vmem %s29, %s1044
        %p1046 = pneg %p443
        %p1047 = pneg %p440
        %p1048 = scmp.lt.s32.totalorder %s76, 1
        %s1049 = scalar_select %p1048, %s76, 1
        %s1050 = scalar_lea.vmem %s31, %s1049
        %p1051 = pneg %p469
        %p1052 = pneg %p466
        %p1053 = scmp.lt.s32.totalorder %s76, 1
        %s1054 = scalar_select %p1053, %s76, 1
        %s1055 = scalar_lea.vmem %s33, %s1054
        %p1056 = pneg %p495
        %p1057 = pneg %p492
        %p1058 = scmp.lt.s32.totalorder %s76, 1
        %s1059 = scalar_select %p1058, %s76, 1
        %s1060 = scalar_lea.vmem %s35, %s1059
        %p1061 = pneg %p521
        %p1062 = pneg %p518
        %p1063 = scmp.lt.s32.totalorder %s76, 1
        %s1064 = scalar_select %p1063, %s76, 1
        %s1065 = smul.addr %s1064, 16
        %s1066 = smul.addr %s1065, 4
        %s1067 = scalar_lea.vmem %s37, %s1066
        %p1068 = pneg %p547
        %p1069 = pneg %p544
        %p1070 = scmp.lt.s32.totalorder %s76, 1
        %s1071 = scalar_select %p1070, %s76, 1
        %s1072 = smul.addr %s1071, 2
        %s1073 = scalar_lea.vmem %s39, %s1072
        %p1074 = pneg %p573
        %p1075 = pneg %p570
        %p1076 = scmp.lt.s32.totalorder %s76, 1
        %s1077 = scalar_select %p1076, %s76, 1
        %s1078 = smul.addr %s1077, 32
        %s1079 = smul.addr %s1078, 4
        %s1080 = scalar_lea.vmem %s41, %s1079
        %p1081 = pneg %p599
        %p1082 = pneg %p596
        %p1083 = scmp.lt.s32.totalorder %s76, 1
        %s1084 = scalar_select %p1083, %s76, 1
        %s1085 = scalar_lea.vmem %s43, %s1084
        %p1086 = pneg %p625
        %p1087 = pneg %p622
        %p1088 = pneg %p646
        %p1089 = pneg %p643
        %p1090 = pneg %p667
        %p1091 = pneg %p664
        %p1092 = pneg %p688
        %p1093 = pneg %p685
        %p1094 = pneg %p709
        %p1095 = pneg %p706
        %p1096 = pneg %p730
        %p1097 = pneg %p727
        %p1098 = pneg %p751
        %p1099 = pneg %p748
        %p1100 = pneg %p772
        %p1101 = pneg %p769
        %p1102 = pneg %p798
        %p1103 = pneg %p795
        %s1104 = smul.u32 4, %s75
        %p1105 = scmp.lt.s32.totalorder %s1104, 3
        %s1106 = scalar_select %p1105, %s1104, 3
        %s1107 = smul.addr %s1106, 8
        %s1108 = scalar_lea.vmem %s1, %s1107
        %s1109 = smul.u32 4, %s75
        %p1110 = scmp.lt.s32.totalorder %s76, 1
        %s1111 = scalar_select %p1110, %s76, 1
        %s1112 = scalar_lea.vmem %s13, %s1111
        %p1113 = scmp.lt.s32.totalorder %s76, 1
        %s1114 = scalar_select %p1113, %s76, 1
        %s1115 = scalar_lea.vmem %s15, %s1114
        %p1116 = scmp.lt.s32.totalorder %s76, 1
        %s1117 = scalar_select %p1116, %s76, 1
        %s1118 = smul.addr %s1117, 8
        %s1119 = smul.addr %s1118, 4
        %s1120 = scalar_lea.vmem %s17, %s1119
        %p1121 = scmp.lt.s32.totalorder %s76, 1
        %s1122 = scalar_select %p1121, %s76, 1
        %s1123 = smul.addr %s1122, 8
        %s1124 = smul.addr %s1123, 4
        %s1125 = scalar_lea.vmem %s19, %s1124
        %p1126 = scmp.lt.s32.totalorder %s76, 1
        %s1127 = scalar_select %p1126, %s76, 1
        %s1128 = smul.addr %s1127, 8
        %s1129 = smul.addr %s1128, 4
        %s1130 = scalar_lea.vmem %s21, %s1129
        %p1131 = scmp.lt.s32.totalorder %s76, 1
        %s1132 = scalar_select %p1131, %s76, 1
        %s1133 = scalar_lea.vmem %s23, %s1132
        %p1134 = scmp.lt.s32.totalorder %s76, 1
        %s1135 = scalar_select %p1134, %s76, 1
        %s1136 = scalar_lea.vmem %s25, %s1135
        %p1137 = scmp.lt.s32.totalorder %s76, 1
        %s1138 = scalar_select %p1137, %s76, 1
        %s1139 = scalar_lea.vmem %s27, %s1138
        %p1140 = scmp.lt.s32.totalorder %s76, 1
        %s1141 = scalar_select %p1140, %s76, 1
        %s1142 = smul.addr %s1141, 8
        %s1143 = smul.addr %s1142, 4
        %s1144 = scalar_lea.vmem %s29, %s1143
        %p1145 = scmp.lt.s32.totalorder %s76, 1
        %s1146 = scalar_select %p1145, %s76, 1
        %s1147 = scalar_lea.vmem %s31, %s1146
        %p1148 = scmp.lt.s32.totalorder %s76, 1
        %s1149 = scalar_select %p1148, %s76, 1
        %s1150 = scalar_lea.vmem %s33, %s1149
        %p1151 = scmp.lt.s32.totalorder %s76, 1
        %s1152 = scalar_select %p1151, %s76, 1
        %s1153 = scalar_lea.vmem %s35, %s1152
        %p1154 = scmp.lt.s32.totalorder %s76, 1
        %s1155 = scalar_select %p1154, %s76, 1
        %s1156 = smul.addr %s1155, 16
        %s1157 = smul.addr %s1156, 4
        %s1158 = scalar_lea.vmem %s37, %s1157
        %p1159 = scmp.lt.s32.totalorder %s76, 1
        %s1160 = scalar_select %p1159, %s76, 1
        %s1161 = smul.addr %s1160, 2
        %s1162 = scalar_lea.vmem %s39, %s1161
        %p1163 = scmp.lt.s32.totalorder %s76, 1
        %s1164 = scalar_select %p1163, %s76, 1
        %s1165 = smul.addr %s1164, 32
        %s1166 = smul.addr %s1165, 4
        %s1167 = scalar_lea.vmem %s41, %s1166
        %p1168 = scmp.lt.s32.totalorder %s76, 1
        %s1169 = scalar_select %p1168, %s76, 1
        %s1170 = scalar_lea.vmem %s43, %s1169
        %p1174 = scmp.eq.s32.totalorder %s76, 0
        // Predicated region
        $region137: #{forward.1} parent=135 // pred_check
          %p1175 = pneg %p1174
        $region138: #{forward.1} parent=135 // pred_check_branch
          %1177 = sbr.rel (%p1175) target = $region140
        $region139: #{forward.1} parent=135 // pred_region
          %v1178 = vld [vmem:[%s1108] sm:$0xff]
          %v1179 = vld [vmem:[%s1108 + $0x8] sm:$0xff]
          %v1180 = vld [vmem:[%s1108 + $0x10] sm:$0xff]
          %v1181 = vld [vmem:[%s1108 + $0x18] sm:$0xff]
          %v1182 = vpack.c.bf16 %v1179, %v1178
          %v1183 = vpack.c.bf16 %v1181, %v1180
          %v1184 = vld [vmem:[%s3] sm:$0xf]
          %v1185 = vld [vmem:[%s3 + $0x4] sm:$0xf]
          %v1186 = vld [vmem:[%s3 + $0x8] sm:$0xf]
          %v1187 = vld [vmem:[%s3 + $0xc] sm:$0xf]
          %v1188 = vld [vmem:[%s3 + $0x10] sm:$0xf]
          %v1189 = vld [vmem:[%s3 + $0x14] sm:$0xf]
          %v1196 = vunpack.c.l.b16 %v1184
          %v1197 = vunpack.c.l.b16 %v1185
          %v1198 = vunpack.c.l.b16 %v1186
          %v1199 = vunpack.c.l.b16 %v1187
          %v1200 = vunpack.c.l.b16 %v1188
          %v1201 = vunpack.c.l.b16 %v1189
          %v1202 = vpack.c.b16 %v1197, %v1196
          %v1203 = vpack.c.b16 %v1199, %v1198
          %v1204 = vpack.c.b16 %v1201, %v1200
          %vm1208 = vcmask 392192
          %v1210 = vsel %vm1208, %v1182, 0
          %v1213 = vsel %vm1208, %v1183, 0
          %1215 = vmatprep.subr.bf16.mxu0 0
          %1216 = vmatpush1.bf16.msra.mxu0 %v1202
          %1217 = vmatprep.subr.bf16.mxu0 0
          %1218 = vmatpush1.bf16.msra.mxu0 %v1203
          %1219 = vmatprep.subr.bf16.mxu0 0
          %1220 = vmatpush1.bf16.msra.mxu0 %v1204
          %1221 = vmatprep.subr.bf16.mxu0 0
          %1222 = vmatpush1.bf16.msra.mxu0 0
          %1223 = vmatprep.subr.bf16.mxu0 0
          %1224 = vmatpush1.bf16.msra.mxu0 0
          %1225 = vmatprep.subr.bf16.mxu0 0
          %1226 = vmatpush1.bf16.msra.mxu0 0
          %1227 = vmatprep.subr.bf16.mxu0 0
          %1228 = vmatpush1.bf16.msra.mxu0 0
          %1229 = vmatprep.subr.bf16.mxu0 0
          %1230 = vmatpush1.bf16.msra.mxu0 0
          %1231 = vmatprep.subr.bf16.mxu0 0
          %1232 = vmatpush1.bf16.msra.mxu0 0
          %1233 = vmatprep.subr.bf16.mxu0 0
          %1234 = vmatpush1.bf16.msra.mxu0 0
          %1235 = vmatprep.subr.bf16.mxu0 0
          %1236 = vmatpush1.bf16.msra.mxu0 0
          %1237 = vmatprep.subr.bf16.mxu0 0
          %1238 = vmatpush1.bf16.msra.mxu0 0
          %1239 = vmatprep.subr.bf16.mxu0 0
          %1240 = vmatpush1.bf16.msra.mxu0 0
          %1241 = vmatprep.subr.bf16.mxu0 0
          %1242 = vmatpush1.bf16.msra.mxu0 0
          %1243 = vmatprep.subr.bf16.mxu0 0
          %1244 = vmatpush1.bf16.msra.mxu0 0
          %1245 = vmatprep.subr.bf16.mxu0 0
          %1246 = vmatpush1.bf16.msra.mxu0 0
          %1247 = vmatprep.mubr.bf16.mxu0 0
          %1248 = vmatmul.mubr.bf16.gmra.mrb[0].mxu0 %v1210
          %v1249 = vpop.f32.mrb[0].mxu0
          %v1250 = vadd.f32 0.0, %v1249
          %v1251 = vpop.f32.mrb[0].mxu0
          %v1252 = vpop.f32.mrb[0].mxu0
          %v1253 = vadd.f32 0.0, %v1252
          %v1254 = vpop.f32.mrb[0].mxu0
          %1255 = vmatprep.mubr.bf16.mxu0 0
          %1256 = vmatmul.mubr.bf16.gmra.mrb[0].mxu0 %v1213
          %v1257 = vpop.f32.mrb[0].mxu0
          %v1258 = vadd.f32 0.0, %v1257
          %v1259 = vpop.f32.mrb[0].mxu0
          %v1260 = vpop.f32.mrb[0].mxu0
          %v1261 = vadd.f32 0.0, %v1260
          %v1262 = vpop.f32.mrb[0].mxu0
          %1263 = vdwg.mxu0
          %v1264 = vld [vmem:[%s7] sm:$0xff]
          %v1265 = vld [vmem:[%s7 + $0x8] sm:$0xff]
          %v1266 = vld [vmem:[%s7 + $0x10] sm:$0x1]
          %v1267 = vld [vmem:[%s9] sm:$0x1]
          %v1268 = vld [vmem:[%s11] sm:$0x1]
          %v1269 = vld [vmem:[%s5] sm:$0x1]
          %v1270 = vadd.f32 %v1269, %v1264
          %vm1271 = vcmask 516096
          %v1272 = vsel %vm1271, %v1270, 0.0
          %1273 = vadd.xlane.f32.xlu0 %v1272
          %v1274 = vpop.xlane.xlu0 %1273
          %v1275 = vrcp.pop 64.0
          %v1276 = vmul.f32 %v1274, %v1275
          %v1277 = vsub.f32 %v1270, %v1276
          %v1278 = vmul.f32 %v1277, %v1277
          %v1279 = vsel %vm1271, %v1278, 0.0
          %1280 = vadd.xlane.f32.xlu0 %v1279
          %v1281 = vpop.xlane.xlu0 %1280
          %v1282 = vmul.f32 %v1281, %v1275
          %v1283 = vadd.f32 %v1282, 1e-05
          %v1284 = vrsqrt.pop %v1283
          %v1285 = vmul.f32 %v1277, %v1284
          %v1286 = vmul.f32 %v1285, %v1267
          %v1287 = vadd.f32 %v1286, %v1268
          %1288 = vst.msk [vmem:[#allocation2] sm:$0x1] %vm1271, %v1287
          %vm1292 = vcmask 1046528
          %v1293 = vrot.slane %v1264, 1
          %v1294 = vrot.slane %v1265, 1
          %v1295 = vsel %vm1292, %v1293, %v1294
          %v1296 = vrot.slane %v1266, 1
          %v1297 = vsel %vm1292, %v1294, %v1296
          %v1300 = vadd.f32 %v1250, %v1295
          %v1301 = vadd.f32 %v1253, %v1297
          %vm1302 = vcmask 523264
          %v1303 = vsel %vm1302, %v1300, 0.0
          %1304 = vadd.xlane.f32.xlu0 %v1303
          %v1305 = vpop.xlane.xlu0 %1304
          %v1306 = vsel %vm1302, %v1301, 0.0
          %1307 = vadd.xlane.f32.xlu0 %v1306
          %v1308 = vpop.xlane.xlu0 %1307
          %v1309 = vmul.f32 %v1305, %v1275
          %v1310 = vmul.f32 %v1308, %v1275
          %v1311 = vsub.f32 %v1300, %v1309
          %v1312 = vsub.f32 %v1301, %v1310
          %v1313 = vmul.f32 %v1311, %v1311
          %v1314 = vmul.f32 %v1312, %v1312
          %v1315 = vsel %vm1302, %v1313, 0.0
          %1316 = vadd.xlane.f32.xlu0 %v1315
          %v1317 = vpop.xlane.xlu0 %1316
          %v1318 = vsel %vm1302, %v1314, 0.0
          %1319 = vadd.xlane.f32.xlu0 %v1318
          %v1320 = vpop.xlane.xlu0 %1319
          %v1321 = vmul.f32 %v1317, %v1275
          %v1322 = vmul.f32 %v1320, %v1275
          %v1323 = vadd.f32 %v1321, 1e-05
          %v1324 = vadd.f32 %v1322, 1e-05
          %v1325 = vrsqrt.pop %v1323
          %v1326 = vrsqrt.pop %v1324
          %v1327 = vmul.f32 %v1311, %v1325
          %v1328 = vmul.f32 %v1312, %v1326
          %v1330 = vlaneseq
          %v1331 = vshrl.u32 %v1330, 7
          %v1332 = vsub.s32 0, %v1331
          %v1333 = vrot.slane %v1267, %v1332
          %v1335 = vmul.f32 %v1327, %v1333
          %v1336 = vmul.f32 %v1328, %v1333
          %v1338 = vlaneseq
          %v1339 = vshrl.u32 %v1338, 7
          %v1340 = vsub.s32 0, %v1339
          %v1341 = vrot.slane %v1268, %v1340
          %v1343 = vadd.f32 %v1335, %v1341
          %v1344 = vadd.f32 %v1336, %v1341
          %1345 = vst.msk [vmem:[#allocation2 + $0x1] sm:$0xff] %vm1302, %v1343
          %1346 = vst.msk [vmem:[#allocation2 + $0x9] sm:$0xff] %vm1302, %v1344
          %1347 = vst.msk [vmem:[#allocation2 + $0x11] sm:$0x1] %vm1271, %v1287
          %v1348 = vadd.f32 %v1258, %v1295
          %v1349 = vadd.f32 %v1261, %v1297
          %v1350 = vsel %vm1302, %v1348, 0.0
          %1351 = vadd.xlane.f32.xlu0 %v1350
          %v1352 = vpop.xlane.xlu0 %1351
          %v1353 = vsel %vm1302, %v1349, 0.0
          %1354 = vadd.xlane.f32.xlu0 %v1353
          %v1355 = vpop.xlane.xlu0 %1354
          %v1356 = vmul.f32 %v1352, %v1275
          %v1357 = vmul.f32 %v1355, %v1275
          %v1358 = vsub.f32 %v1348, %v1356
          %v1359 = vsub.f32 %v1349, %v1357
          %v1360 = vmul.f32 %v1358, %v1358
          %v1361 = vmul.f32 %v1359, %v1359
          %v1362 = vsel %vm1302, %v1360, 0.0
          %1363 = vadd.xlane.f32.xlu0 %v1362
          %v1364 = vpop.xlane.xlu0 %1363
          %v1365 = vsel %vm1302, %v1361, 0.0
          %1366 = vadd.xlane.f32.xlu0 %v1365
          %v1367 = vpop.xlane.xlu0 %1366
          %v1368 = vmul.f32 %v1364, %v1275
          %v1369 = vmul.f32 %v1367, %v1275
          %v1370 = vadd.f32 %v1368, 1e-05
          %v1371 = vadd.f32 %v1369, 1e-05
          %v1372 = vrsqrt.pop %v1370
          %v1373 = vrsqrt.pop %v1371
          %v1374 = vmul.f32 %v1358, %v1372
          %v1375 = vmul.f32 %v1359, %v1373
          %v1376 = vmul.f32 %v1374, %v1333
          %v1377 = vmul.f32 %v1375, %v1333
          %v1378 = vadd.f32 %v1376, %v1341
          %v1379 = vadd.f32 %v1377, %v1341
          %1380 = vst.msk [vmem:[#allocation2 + $0x12] sm:$0xff] %vm1302, %v1378
          %1381 = vst.msk [vmem:[#allocation2 + $0x1a] sm:$0xff] %vm1302, %v1379
        $region140: #{forward.1} parent=135 // pred_fallthru
          _
        %v1382 = vld [vmem:[#allocation2] sm:$0xff]
        %v1383 = vld [vmem:[#allocation2 + $0x8] sm:$0xff]
        %v1384 = vld [vmem:[#allocation2 + $0x10] sm:$0xff]
        %v1385 = vld [vmem:[#allocation2 + $0x18] sm:$0xff]
        %v1386 = vld [vmem:[#allocation2 + $0x20] sm:$0x3]
        %v1387 = vld [vmem:[%s1112] sm:$0x1]
        %v1388 = vld [vmem:[%s1115] sm:$0x1]
        %vm1389 = vcmask 523264
        %v1390 = vsel %vm1389, %v1382, 0.0
        %1391 = vadd.xlane.f32.xlu0 %v1390
        %v1392 = vpop.xlane.xlu0 %1391
        %v1393 = vsel %vm1389, %v1383, 0.0
        %1394 = vadd.xlane.f32.xlu0 %v1393
        %v1395 = vpop.xlane.xlu0 %1394
        %v1396 = vsel %vm1389, %v1384, 0.0
        %1397 = vadd.xlane.f32.xlu0 %v1396
        %v1398 = vpop.xlane.xlu0 %1397
        %v1399 = vsel %vm1389, %v1385, 0.0
        %1400 = vadd.xlane.f32.xlu0 %v1399
        %v1401 = vpop.xlane.xlu0 %1400
        %vm1402 = vcmask 517120
        %v1403 = vsel %vm1402, %v1386, 0.0
        %1404 = vadd.xlane.f32.xlu0 %v1403
        %v1405 = vpop.xlane.xlu0 %1404
        %v1406 = vrcp.pop 64.0
        %v1407 = vmul.f32 %v1392, %v1406
        %v1408 = vmul.f32 %v1395, %v1406
        %v1409 = vmul.f32 %v1398, %v1406
        %v1410 = vmul.f32 %v1401, %v1406
        %v1411 = vmul.f32 %v1405, %v1406
        %v1412 = vsub.f32 %v1382, %v1407
        %v1413 = vsub.f32 %v1383, %v1408
        %v1414 = vsub.f32 %v1384, %v1409
        %v1415 = vsub.f32 %v1385, %v1410
        %v1416 = vsub.f32 %v1386, %v1411
        %v1417 = vmul.f32 %v1412, %v1412
        %v1418 = vmul.f32 %v1413, %v1413
        %v1419 = vmul.f32 %v1414, %v1414
        %v1420 = vmul.f32 %v1415, %v1415
        %v1421 = vmul.f32 %v1416, %v1416
        %v1422 = vsel %vm1389, %v1417, 0.0
        %1423 = vadd.xlane.f32.xlu0 %v1422
        %v1424 = vpop.xlane.xlu0 %1423
        %v1425 = vsel %vm1389, %v1418, 0.0
        %1426 = vadd.xlane.f32.xlu0 %v1425
        %v1427 = vpop.xlane.xlu0 %1426
        %v1428 = vsel %vm1389, %v1419, 0.0
        %1429 = vadd.xlane.f32.xlu0 %v1428
        %v1430 = vpop.xlane.xlu0 %1429
        %v1431 = vsel %vm1389, %v1420, 0.0
        %1432 = vadd.xlane.f32.xlu0 %v1431
        %v1433 = vpop.xlane.xlu0 %1432
        %v1434 = vsel %vm1402, %v1421, 0.0
        %1435 = vadd.xlane.f32.xlu0 %v1434
        %v1436 = vpop.xlane.xlu0 %1435
        %v1437 = vmul.f32 %v1424, %v1406
        %v1438 = vmul.f32 %v1427, %v1406
        %v1439 = vmul.f32 %v1430, %v1406
        %v1440 = vmul.f32 %v1433, %v1406
        %v1441 = vmul.f32 %v1436, %v1406
        %v1442 = vadd.f32 %v1437, 1e-05
        %v1443 = vadd.f32 %v1438, 1e-05
        %v1444 = vadd.f32 %v1439, 1e-05
        %v1445 = vadd.f32 %v1440, 1e-05
        %v1446 = vadd.f32 %v1441, 1e-05
        %v1447 = vrsqrt.pop %v1442
        %v1448 = vrsqrt.pop %v1443
        %v1449 = vrsqrt.pop %v1444
        %v1450 = vrsqrt.pop %v1445
        %v1451 = vrsqrt.pop %v1446
        %v1452 = vmul.f32 %v1412, %v1447
        %v1453 = vmul.f32 %v1413, %v1448
        %v1454 = vmul.f32 %v1414, %v1449
        %v1455 = vmul.f32 %v1415, %v1450
        %v1456 = vmul.f32 %v1416, %v1451
        %v1458 = vlaneseq
        %v1459 = vshrl.u32 %v1458, 7
        %v1460 = vsub.s32 0, %v1459
        %v1461 = vrot.slane %v1387, %v1460
        %v1463 = vmul.f32 %v1452, %v1461
        %v1464 = vmul.f32 %v1453, %v1461
        %v1465 = vmul.f32 %v1454, %v1461
        %v1466 = vmul.f32 %v1455, %v1461
        %v1467 = vmul.f32 %v1456, %v1461
        %v1469 = vlaneseq
        %v1470 = vshrl.u32 %v1469, 7
        %v1471 = vsub.s32 0, %v1470
        %v1472 = vrot.slane %v1388, %v1471
        %v1474 = vadd.f32 %v1463, %v1472
        %v1475 = vadd.f32 %v1464, %v1472
        %v1476 = vadd.f32 %v1465, %v1472
        %v1477 = vadd.f32 %v1466, %v1472
        %v1478 = vadd.f32 %v1467, %v1472
        %v1479 = vpack.c.bf16 %v1475, %v1474
        %v1480 = vpack.c.bf16 %v1477, %v1476
        %v1481 = vpack.c.bf16 %v1478, %v1478
        %v1482 = vld [vmem:[%s1120] sm:$0xf]
        %v1483 = vld [vmem:[%s1120 + $0x4] sm:$0xf]
        %v1484 = vld [vmem:[%s1120 + $0x8] sm:$0xf]
        %v1485 = vld [vmem:[%s1120 + $0xc] sm:$0xf]
        %v1486 = vld [vmem:[%s1120 + $0x10] sm:$0xf]
        %v1487 = vld [vmem:[%s1120 + $0x14] sm:$0xf]
        %v1488 = vld [vmem:[%s1120 + $0x18] sm:$0xf]
        %v1489 = vld [vmem:[%s1120 + $0x1c] sm:$0xf]
        %v1490 = vld [vmem:[%s1133] sm:$0x1]
        %v1492 = vlaneseq
        %v1493 = vshrl.u32 %v1492, 7
        %v1494 = vsub.s32 0, %v1493
        %v1495 = vrot.slane %v1490, %v1494
        %v1505 = vunpack.c.l.b16 %v1482
        %v1506 = vunpack.c.l.b16 %v1483
        %v1507 = vunpack.c.l.b16 %v1484
        %v1508 = vunpack.c.l.b16 %v1485
        %v1509 = vunpack.c.l.b16 %v1486
        %v1510 = vunpack.c.l.b16 %v1487
        %v1511 = vunpack.c.l.b16 %v1488
        %v1512 = vunpack.c.l.b16 %v1489
        %v1513 = vpack.c.b16 %v1506, %v1505
        %v1514 = vpack.c.b16 %v1508, %v1507
        %v1515 = vpack.c.b16 %v1510, %v1509
        %v1516 = vpack.c.b16 %v1512, %v1511
        %v1522 = vsel %vm1389, %v1479, 0
        %v1525 = vsel %vm1389, %v1480, 0
        %v1528 = vsel %vm1389, %v1481, 0
        %1530 = vmatprep.subr.bf16.mxu0 0
        %1531 = vmatpush1.bf16.msra.mxu0 %v1513
        %1532 = vmatprep.subr.bf16.mxu0 0
        %1533 = vmatpush1.bf16.msra.mxu0 %v1514
        %1534 = vmatprep.subr.bf16.mxu0 0
        %1535 = vmatpush1.bf16.msra.mxu0 %v1515
        %1536 = vmatprep.subr.bf16.mxu0 0
        %1537 = vmatpush1.bf16.msra.mxu0 %v1516
        %1538 = vmatprep.subr.bf16.mxu0 0
        %1539 = vmatpush1.bf16.msra.mxu0 0
        %1540 = vmatprep.subr.bf16.mxu0 0
        %1541 = vmatpush1.bf16.msra.mxu0 0
        %1542 = vmatprep.subr.bf16.mxu0 0
        %1543 = vmatpush1.bf16.msra.mxu0 0
        %1544 = vmatprep.subr.bf16.mxu0 0
        %1545 = vmatpush1.bf16.msra.mxu0 0
        %1546 = vmatprep.subr.bf16.mxu0 0
        %1547 = vmatpush1.bf16.msra.mxu0 0
        %1548 = vmatprep.subr.bf16.mxu0 0
        %1549 = vmatpush1.bf16.msra.mxu0 0
        %1550 = vmatprep.subr.bf16.mxu0 0
        %1551 = vmatpush1.bf16.msra.mxu0 0
        %1552 = vmatprep.subr.bf16.mxu0 0
        %1553 = vmatpush1.bf16.msra.mxu0 0
        %1554 = vmatprep.subr.bf16.mxu0 0
        %1555 = vmatpush1.bf16.msra.mxu0 0
        %1556 = vmatprep.subr.bf16.mxu0 0
        %1557 = vmatpush1.bf16.msra.mxu0 0
        %1558 = vmatprep.subr.bf16.mxu0 0
        %1559 = vmatpush1.bf16.msra.mxu0 0
        %1560 = vmatprep.subr.bf16.mxu0 0
        %1561 = vmatpush1.bf16.msra.mxu0 0
        %1562 = vmatprep.mubr.bf16.mxu0 0
        %1563 = vmatmul.mubr.bf16.gmra.mrb[0].mxu0 %v1522
        %v1564 = vpop.f32.mrb[0].mxu0
        %v1565 = vadd.f32 %v1495, %v1564
        %v1566 = vpop.f32.mrb[0].mxu0
        %v1567 = vpop.f32.mrb[0].mxu0
        %v1568 = vadd.f32 %v1495, %v1567
        %v1569 = vpop.f32.mrb[0].mxu0
        %1570 = vmatprep.mubr.bf16.mxu0 0
        %1571 = vmatmul.mubr.bf16.gmra.mrb[0].mxu0 %v1525
        %v1572 = vpop.f32.mrb[0].mxu0
        %v1573 = vadd.f32 %v1495, %v1572
        %v1574 = vpop.f32.mrb[0].mxu0
        %v1575 = vpop.f32.mrb[0].mxu0
        %v1576 = vadd.f32 %v1495, %v1575
        %v1577 = vpop.f32.mrb[0].mxu0
        %1578 = vmatprep.mubr.bf16.mxu0 0
        %1579 = vmatmul.mubr.bf16.gmra.mrb[0].mxu0 %v1528
        %v1580 = vpop.f32.mrb[0].mxu0
        %v1581 = vadd.f32 %v1495, %v1580
        %v1582 = vpop.f32.mrb[0].mxu0
        %v1583 = vpop.f32.mrb[0].mxu0
        %v1584 = vpop.f32.mrb[0].mxu0
        %1585 = vdwg.mxu0
        %v1586 = vmul.f32 %v1565, 0.25
        %v1587 = vmul.f32 %v1568, 0.25
        %v1588 = vmul.f32 %v1573, 0.25
        %v1589 = vmul.f32 %v1576, 0.25
        %v1590 = vmul.f32 %v1581, 0.25
        %v1591 = vld [vmem:[%s1125] sm:$0xf]
        %v1592 = vld [vmem:[%s1125 + $0x4] sm:$0xf]
        %v1593 = vld [vmem:[%s1125 + $0x8] sm:$0xf]
        %v1594 = vld [vmem:[%s1125 + $0xc] sm:$0xf]
        %v1595 = vld [vmem:[%s1125 + $0x10] sm:$0xf]
        %v1596 = vld [vmem:[%s1125 + $0x14] sm:$0xf]
        %v1597 = vld [vmem:[%s1125 + $0x18] sm:$0xf]
        %v1598 = vld [vmem:[%s1125 + $0x1c] sm:$0xf]
        %v1599 = vld [vmem:[%s1136] sm:$0x1]
        %v1601 = vlaneseq
        %v1602 = vshrl.u32 %v1601, 7
        %v1603 = vsub.s32 0, %v1602
        %v1604 = vrot.slane %v1599, %v1603
        %v1614 = vunpack.c.l.b16 %v1591
        %v1615 = vunpack.c.l.b16 %v1592
        %v1616 = vunpack.c.l.b16 %v1593
        %v1617 = vunpack.c.l.b16 %v1594
        %v1618 = vunpack.c.l.b16 %v1595
        %v1619 = vunpack.c.l.b16 %v1596
        %v1620 = vunpack.c.l.b16 %v1597
        %v1621 = vunpack.c.l.b16 %v1598
        %v1622 = vpack.c.b16 %v1615, %v1614
        %v1623 = vpack.c.b16 %v1617, %v1616
        %v1624 = vpack.c.b16 %v1619, %v1618
        %v1625 = vpack.c.b16 %v1621, %v1620
        %1630 = vmatprep.subr.bf16.mxu0 0
        %1631 = vmatpush1.bf16.msra.mxu0 %v1622
        %1632 = vmatprep.subr.bf16.mxu0 0
        %1633 = vmatpush1.bf16.msra.mxu0 %v1623
        %1634 = vmatprep.subr.bf16.mxu0 0
        %1635 = vmatpush1.bf16.msra.mxu0 %v1624
        %1636 = vmatprep.subr.bf16.mxu0 0
        %1637 = vmatpush1.bf16.msra.mxu0 %v1625
        %1638 = vmatprep.subr.bf16.mxu0 0
        %1639 = vmatpush1.bf16.msra.mxu0 0
        %1640 = vmatprep.subr.bf16.mxu0 0
        %1641 = vmatpush1.bf16.msra.mxu0 0
        %1642 = vmatprep.subr.bf16.mxu0 0
        %1643 = vmatpush1.bf16.msra.mxu0 0
        %1644 = vmatprep.subr.bf16.mxu0 0
        %1645 = vmatpush1.bf16.msra.mxu0 0
        %1646 = vmatprep.subr.bf16.mxu0 0
        %1647 = vmatpush1.bf16.msra.mxu0 0
        %1648 = vmatprep.subr.bf16.mxu0 0
        %1649 = vmatpush1.bf16.msra.mxu0 0
        %1650 = vmatprep.subr.bf16.mxu0 0
        %1651 = vmatpush1.bf16.msra.mxu0 0
        %1652 = vmatprep.subr.bf16.mxu0 0
        %1653 = vmatpush1.bf16.msra.mxu0 0
        %1654 = vmatprep.subr.bf16.mxu0 0
        %1655 = vmatpush1.bf16.msra.mxu0 0
        %1656 = vmatprep.subr.bf16.mxu0 0
        %1657 = vmatpush1.bf16.msra.mxu0 0
        %1658 = vmatprep.subr.bf16.mxu0 0
        %1659 = vmatpush1.bf16.msra.mxu0 0
        %1660 = vmatprep.subr.bf16.mxu0 0
        %1661 = vmatpush1.bf16.msra.mxu0 0
        %1662 = vmatprep.mubr.bf16.mxu0 0
        %1663 = vmatmul.mubr.bf16.gmra.mrb[0].mxu0 %v1522
        %v1664 = vpop.f32.mrb[0].mxu0
        %v1665 = vadd.f32 %v1604, %v1664
        %v1666 = vpop.f32.mrb[0].mxu0
        %v1667 = vpop.f32.mrb[0].mxu0
        %v1668 = vadd.f32 %v1604, %v1667
        %v1669 = vpop.f32.mrb[0].mxu0
        %1670 = vmatprep.mubr.bf16.mxu0 0
        %1671 = vmatmul.mubr.bf16.gmra.mrb[0].mxu0 %v1525
        %v1672 = vpop.f32.mrb[0].mxu0
        %v1673 = vadd.f32 %v1604, %v1672
        %v1674 = vpop.f32.mrb[0].mxu0
        %v1675 = vpop.f32.mrb[0].mxu0
        %v1676 = vadd.f32 %v1604, %v1675
        %v1677 = vpop.f32.mrb[0].mxu0
        %1678 = vmatprep.mubr.bf16.mxu0 0
        %1679 = vmatmul.mubr.bf16.gmra.mrb[0].mxu0 %v1528
        %v1680 = vpop.f32.mrb[0].mxu0
        %v1681 = vadd.f32 %v1604, %v1680
        %v1682 = vpop.f32.mrb[0].mxu0
        %v1683 = vpop.f32.mrb[0].mxu0
        %v1684 = vpop.f32.mrb[0].mxu0
        %1685 = vdwg.mxu0
        %v1686 = vld [vmem:[%s1130] sm:$0xf]
        %v1687 = vld [vmem:[%s1130 + $0x4] sm:$0xf]
        %v1688 = vld [vmem:[%s1130 + $0x8] sm:$0xf]
        %v1689 = vld [vmem:[%s1130 + $0xc] sm:$0xf]
        %v1690 = vld [vmem:[%s1130 + $0x10] sm:$0xf]
        %v1691 = vld [vmem:[%s1130 + $0x14] sm:$0xf]
        %v1692 = vld [vmem:[%s1130 + $0x18] sm:$0xf]
        %v1693 = vld [vmem:[%s1130 + $0x1c] sm:$0xf]
        %v1694 = vld [vmem:[%s1139] sm:$0x1]
        %v1696 = vlaneseq
        %v1697 = vshrl.u32 %v1696, 7
        %v1698 = vsub.s32 0, %v1697
        %v1699 = vrot.slane %v1694, %v1698
        %v1709 = vunpack.c.l.b16 %v1686
        %v1710 = vunpack.c.l.b16 %v1687
        %v1711 = vunpack.c.l.b16 %v1688
        %v1712 = vunpack.c.l.b16 %v1689
        %v1713 = vunpack.c.l.b16 %v1690
        %v1714 = vunpack.c.l.b16 %v1691
        %v1715 = vunpack.c.l.b16 %v1692
        %v1716 = vunpack.c.l.b16 %v1693
        %v1717 = vpack.c.b16 %v1710, %v1709
        %v1718 = vpack.c.b16 %v1712, %v1711
        %v1719 = vpack.c.b16 %v1714, %v1713
        %v1720 = vpack.c.b16 %v1716, %v1715
        %1725 = vmatprep.subr.bf16.mxu0 0
        %1726 = vmatpush1.bf16.msra.mxu0 %v1717
        %1727 = vmatprep.subr.bf16.mxu0 0
        %1728 = vmatpush1.bf16.msra.mxu0 %v1718
        %1729 = vmatprep.subr.bf16.mxu0 0
        %1730 = vmatpush1.bf16.msra.mxu0 %v1719
        %1731 = vmatprep.subr.bf16.mxu0 0
        %1732 = vmatpush1.bf16.msra.mxu0 %v1720
        %1733 = vmatprep.subr.bf16.mxu0 0
        %1734 = vmatpush1.bf16.msra.mxu0 0
        %1735 = vmatprep.subr.bf16.mxu0 0
        %1736 = vmatpush1.bf16.msra.mxu0 0
        %1737 = vmatprep.subr.bf16.mxu0 0
        %1738 = vmatpush1.bf16.msra.mxu0 0
        %1739 = vmatprep.subr.bf16.mxu0 0
        %1740 = vmatpush1.bf16.msra.mxu0 0
        %1741 = vmatprep.subr.bf16.mxu0 0
        %1742 = vmatpush1.bf16.msra.mxu0 0
        %1743 = vmatprep.subr.bf16.mxu0 0
        %1744 = vmatpush1.bf16.msra.mxu0 0
        %1745 = vmatprep.subr.bf16.mxu0 0
        %1746 = vmatpush1.bf16.msra.mxu0 0
        %1747 = vmatprep.subr.bf16.mxu0 0
        %1748 = vmatpush1.bf16.msra.mxu0 0
        %1749 = vmatprep.subr.bf16.mxu0 0
        %1750 = vmatpush1.bf16.msra.mxu0 0
        %1751 = vmatprep.subr.bf16.mxu0 0
        %1752 = vmatpush1.bf16.msra.mxu0 0
        %1753 = vmatprep.subr.bf16.mxu0 0
        %1754 = vmatpush1.bf16.msra.mxu0 0
        %1755 = vmatprep.subr.bf16.mxu0 0
        %1756 = vmatpush1.bf16.msra.mxu0 0
        %1757 = vmatprep.mubr.bf16.mxu0 0
        %1758 = vmatmul.mubr.bf16.gmra.mrb[0].mxu0 %v1522
        %v1759 = vpop.f32.mrb[0].mxu0
        %v1760 = vadd.f32 %v1699, %v1759
        %v1761 = vpop.f32.mrb[0].mxu0
        %v1762 = vpop.f32.mrb[0].mxu0
        %v1763 = vadd.f32 %v1699, %v1762
        %v1764 = vpop.f32.mrb[0].mxu0
        %1765 = vmatprep.mubr.bf16.mxu0 0
        %1766 = vmatmul.mubr.bf16.gmra.mrb[0].mxu0 %v1525
        %v1767 = vpop.f32.mrb[0].mxu0
        %v1768 = vadd.f32 %v1699, %v1767
        %v1769 = vpop.f32.mrb[0].mxu0
        %v1770 = vpop.f32.mrb[0].mxu0
        %v1771 = vadd.f32 %v1699, %v1770
        %v1772 = vpop.f32.mrb[0].mxu0
        %1773 = vmatprep.mubr.bf16.mxu0 0
        %1774 = vmatmul.mubr.bf16.gmra.mrb[0].mxu0 %v1528
        %v1775 = vpop.f32.mrb[0].mxu0
        %v1776 = vadd.f32 %v1699, %v1775
        %v1777 = vpop.f32.mrb[0].mxu0
        %v1778 = vpop.f32.mrb[0].mxu0
        %v1779 = vpop.f32.mrb[0].mxu0
        %1780 = vdwg.mxu0
        %v1781 = vpack.c.bf16 %v1587, %v1586
        %v1782 = vpack.c.bf16 %v1589, %v1588
        %v1783 = vpack.c.bf16 %v1590, %v1590
        %v1784 = vpack.c.bf16 %v1668, %v1665
        %v1785 = vpack.c.bf16 %v1676, %v1673
        %v1786 = vpack.c.bf16 %v1681, %v1681
        %v1787 = vpack.c.bf16 %v1763, %v1760
        %v1788 = vpack.c.bf16 %v1771, %v1768
        %v1789 = vpack.c.bf16 %v1776, %v1776
        %vm1790 = vcmask 130048
        %v1792 = vsel %vm1790, %v1781, 0
        %v1795 = vsel %vm1790, %v1782, 0
        %v1798 = vsel %vm1790, %v1784, 0
        %v1801 = vsel %vm1790, %v1785, 0
        %1803 = vmatprep.subr.bf16.mxu0 0
        %1804 = vmatpush1.bf16.xpose.msra.mxu0 %v1798
        %1805 = vmatprep.subr.bf16.mxu0 0
        %1806 = vmatpush1.bf16.xpose.msra.mxu0 %v1801
        %1807 = vmatprep.subr.bf16.mxu0 0
        %1808 = vmatpush1.bf16.xpose.msra.mxu0 0
        %1809 = vmatprep.subr.bf16.mxu0 0
        %1810 = vmatpush1.bf16.xpose.msra.mxu0 0
        %1811 = vmatprep.subr.bf16.mxu0 0
        %1812 = vmatpush1.bf16.xpose.msra.mxu0 0
        %1813 = vmatprep.subr.bf16.mxu0 0
        %1814 = vmatpush1.bf16.xpose.msra.mxu0 0
        %1815 = vmatprep.subr.bf16.mxu0 0
        %1816 = vmatpush1.bf16.xpose.msra.mxu0 0
        %1817 = vmatprep.subr.bf16.mxu0 0
        %1818 = vmatpush1.bf16.xpose.msra.mxu0 0
        %1819 = vmatprep.subr.bf16.mxu0 0
        %1820 = vmatpush1.bf16.xpose.msra.mxu0 0
        %1821 = vmatprep.subr.bf16.mxu0 0
        %1822 = vmatpush1.bf16.xpose.msra.mxu0 0
        %1823 = vmatprep.subr.bf16.mxu0 0
        %1824 = vmatpush1.bf16.xpose.msra.mxu0 0
        %1825 = vmatprep.subr.bf16.mxu0 0
        %1826 = vmatpush1.bf16.xpose.msra.mxu0 0
        %1827 = vmatprep.subr.bf16.mxu0 0
        %1828 = vmatpush1.bf16.xpose.msra.mxu0 0
        %1829 = vmatprep.subr.bf16.mxu0 0
        %1830 = vmatpush1.bf16.xpose.msra.mxu0 0
        %1831 = vmatprep.subr.bf16.mxu0 0
        %1832 = vmatpush1.bf16.xpose.msra.mxu0 0
        %1833 = vmatprep.subr.bf16.mxu0 0
        %1834 = vmatpush1.bf16.xpose.msra.mxu0 0
        %1835 = vmatprep.mubr.bf16.mxu0 0
        %1836 = vmatmul.mubr.bf16.gmra.mrb[0].mxu0 %v1792
        %v1837 = vpop.f32.mrb[0].mxu0
        %v1838 = vadd.f32 0.0, %v1837
        %v1839 = vpop.f32.mrb[0].mxu0
        %v1840 = vpop.f32.mrb[0].mxu0
        %v1841 = vadd.f32 0.0, %v1840
        %v1842 = vpop.f32.mrb[0].mxu0
        %1843 = vmatprep.mubr.bf16.mxu0 0
        %1844 = vmatmul.mubr.bf16.gmra.mrb[0].mxu0 %v1795
        %v1845 = vpop.f32.mrb[0].mxu0
        %v1846 = vadd.f32 0.0, %v1845
        %v1847 = vpop.f32.mrb[0].mxu0
        %v1848 = vpop.f32.mrb[0].mxu0
        %v1849 = vpop.f32.mrb[0].mxu0
        %1850 = vdwg.mxu0
        %vm1851 = vcmask 138240
        %v1852 = vsel %vm1851, %v1838, -inf
        %1853 = vmax.xlane.f32.xlu0 %v1852
        %v1854 = vpop.xlane.xlu0 %1853
        %v1855 = vsel %vm1851, %v1841, -inf
        %1856 = vmax.xlane.f32.xlu0 %v1855
        %v1857 = vpop.xlane.xlu0 %1856
        %vm1858 = vcmask 131072
        %v1859 = vsel %vm1858, %v1846, -inf
        %1860 = vmax.xlane.f32.xlu0 %v1859
        %v1861 = vpop.xlane.xlu0 %1860
        %v1862 = vsub.f32 %v1838, %v1854
        %v1863 = vsub.f32 %v1841, %v1857
        %v1864 = vsub.f32 %v1846, %v1861
        %v1865 = vmul.f32 %v1862, 1.442695
        %v1866 = vpow.pop %v1865
        %v1867 = vmul.f32 %v1863, 1.442695
        %v1868 = vpow.pop %v1867
        %v1869 = vmul.f32 %v1864, 1.442695
        %v1870 = vpow.pop %v1869
        %v1871 = vsel %vm1851, %v1866, 0.0
        %1872 = vadd.xlane.f32.xlu0 %v1871
        %v1873 = vpop.xlane.xlu0 %1872
        %v1874 = vsel %vm1851, %v1868, 0.0
        %1875 = vadd.xlane.f32.xlu0 %v1874
        %v1876 = vpop.xlane.xlu0 %1875
        %v1877 = vsel %vm1858, %v1870, 0.0
        %1878 = vadd.xlane.f32.xlu0 %v1877
        %v1879 = vpop.xlane.xlu0 %1878
        %v1880 = vrcp.pop %v1873
        %v1881 = vrcp.pop %v1876
        %v1882 = vrcp.pop %v1879
        %v1883 = vmul.f32 %v1866, %v1880
        %v1884 = vmul.f32 %v1868, %v1881
        %v1885 = vmul.f32 %v1870, %v1882
        %v1886 = vpack.c.bf16 %v1884, %v1883
        %v1887 = vpack.c.bf16 %v1885, %v1885
        %v1889 = vsel %vm1851, %v1886, 0
        %v1892 = vsel %vm1851, %v1887, 0
        %vm1894 = vcmask 1040384
        %v1895 = vsel 0, 4294967295, 65535
        %v1896 = vsel %vm1894, %v1895, 0
        %v1898 = vand.u32 %v1788, %v1896
        %1900 = vmatprep.subr.bf16.mxu0 0
        %1901 = vmatpush1.bf16.msra.mxu0 %v1787
        %1902 = vmatprep.subr.bf16.mxu0 0
        %1903 = vmatpush1.bf16.msra.mxu0 %v1898
        %1904 = vmatprep.subr.bf16.mxu0 0
        %1905 = vmatpush1.bf16.msra.mxu0 0
        %1906 = vmatprep.subr.bf16.mxu0 0
        %1907 = vmatpush1.bf16.msra.mxu0 0
        %1908 = vmatprep.subr.bf16.mxu0 0
        %1909 = vmatpush1.bf16.msra.mxu0 0
        %1910 = vmatprep.subr.bf16.mxu0 0
        %1911 = vmatpush1.bf16.msra.mxu0 0
        %1912 = vmatprep.subr.bf16.mxu0 0
        %1913 = vmatpush1.bf16.msra.mxu0 0
        %1914 = vmatprep.subr.bf16.mxu0 0
        %1915 = vmatpush1.bf16.msra.mxu0 0
        %1916 = vmatprep.subr.bf16.mxu0 0
        %1917 = vmatpush1.bf16.msra.mxu0 0
        %1918 = vmatprep.subr.bf16.mxu0 0
        %1919 = vmatpush1.bf16.msra.mxu0 0
        %1920 = vmatprep.subr.bf16.mxu0 0
        %1921 = vmatpush1.bf16.msra.mxu0 0
        %1922 = vmatprep.subr.bf16.mxu0 0
        %1923 = vmatpush1.bf16.msra.mxu0 0
        %1924 = vmatprep.subr.bf16.mxu0 0
        %1925 = vmatpush1.bf16.msra.mxu0 0
        %1926 = vmatprep.subr.bf16.mxu0 0
        %1927 = vmatpush1.bf16.msra.mxu0 0
        %1928 = vmatprep.subr.bf16.mxu0 0
        %1929 = vmatpush1.bf16.msra.mxu0 0
        %1930 = vmatprep.subr.bf16.mxu0 0
        %1931 = vmatpush1.bf16.msra.mxu0 0
        %1932 = vmatprep.mubr.bf16.mxu0 0
        %1933 = vmatmul.mubr.bf16.gmra.mrb[0].mxu0 %v1889
        %v1934 = vpop.f32.mrb[0].mxu0
        %v1935 = vadd.f32 0.0, %v1934
        %v1936 = vpop.f32.mrb[0].mxu0
        %v1937 = vpop.f32.mrb[0].mxu0
        %v1938 = vadd.f32 0.0, %v1937
        %v1939 = vpop.f32.mrb[0].mxu0
        %1940 = vmatprep.mubr.bf16.mxu0 0
        %1941 = vmatmul.mubr.bf16.gmra.mrb[0].mxu0 %v1892
        %v1942 = vpop.f32.mrb[0].mxu0
        %v1943 = vadd.f32 0.0, %v1942
        %v1944 = vpop.f32.mrb[0].mxu0
        %v1945 = vpop.f32.mrb[0].mxu0
        %v1946 = vpop.f32.mrb[0].mxu0
        %1947 = vdwg.mxu0
        %1948 = vst.msk [vmem:[#allocation3] sm:$0xff] %vm1790, %v1935
        %1949 = vst.msk [vmem:[#allocation3 + $0x8] sm:$0xff] %vm1790, %v1938
        %vm1950 = vcmask 122880
        %1951 = vst.msk [vmem:[#allocation3 + $0x10] sm:$0x1] %vm1950, %v1943
        %1954 = vrot.lane.b32.xlu0 %v1781, 112
        %v1955 = vpop.permute.xlu0 %1954
        %1956 = vrot.lane.b32.xlu0 %v1782, 112
        %v1957 = vpop.permute.xlu0 %1956
        %1960 = vrot.lane.b32.xlu0 %v1784, 112
        %v1961 = vpop.permute.xlu0 %1960
        %1962 = vrot.lane.b32.xlu0 %v1785, 112
        %v1963 = vpop.permute.xlu0 %1962
        %v1965 = vsel %vm1790, %v1955, 0
        %v1968 = vsel %vm1790, %v1957, 0
        %v1971 = vsel %vm1790, %v1961, 0
        %v1974 = vsel %vm1790, %v1963, 0
        %1976 = vmatprep.subr.bf16.mxu0 0
        %1977 = vmatpush1.bf16.xpose.msra.mxu0 %v1971
        %1978 = vmatprep.subr.bf16.mxu0 0
        %1979 = vmatpush1.bf16.xpose.msra.mxu0 %v1974
        %1980 = vmatprep.subr.bf16.mxu0 0
        %1981 = vmatpush1.bf16.xpose.msra.mxu0 0
        %1982 = vmatprep.subr.bf16.mxu0 0
        %1983 = vmatpush1.bf16.xpose.msra.mxu0 0
        %1984 = vmatprep.subr.bf16.mxu0 0
        %1985 = vmatpush1.bf16.xpose.msra.mxu0 0
        %1986 = vmatprep.subr.bf16.mxu0 0
        %1987 = vmatpush1.bf16.xpose.msra.mxu0 0
        %1988 = vmatprep.subr.bf16.mxu0 0
        %1989 = vmatpush1.bf16.xpose.msra.mxu0 0
        %1990 = vmatprep.subr.bf16.mxu0 0
        %1991 = vmatpush1.bf16.xpose.msra.mxu0 0
        %1992 = vmatprep.subr.bf16.mxu0 0
        %1993 = vmatpush1.bf16.xpose.msra.mxu0 0
        %1994 = vmatprep.subr.bf16.mxu0 0
        %1995 = vmatpush1.bf16.xpose.msra.mxu0 0
        %1996 = vmatprep.subr.bf16.mxu0 0
        %1997 = vmatpush1.bf16.xpose.msra.mxu0 0
        %1998 = vmatprep.subr.bf16.mxu0 0
        %1999 = vmatpush1.bf16.xpose.msra.mxu0 0
        %2000 = vmatprep.subr.bf16.mxu0 0
        %2001 = vmatpush1.bf16.xpose.msra.mxu0 0
        %2002 = vmatprep.subr.bf16.mxu0 0
        %2003 = vmatpush1.bf16.xpose.msra.mxu0 0
        %2004 = vmatprep.subr.bf16.mxu0 0
        %2005 = vmatpush1.bf16.xpose.msra.mxu0 0
        %2006 = vmatprep.subr.bf16.mxu0 0
        %2007 = vmatpush1.bf16.xpose.msra.mxu0 0
        %2008 = vmatprep.mubr.bf16.mxu0 0
        %2009 = vmatmul.mubr.bf16.gmra.mrb[0].mxu0 %v1965
        %v2010 = vpop.f32.mrb[0].mxu0
        %v2011 = vadd.f32 0.0, %v2010
        %v2012 = vpop.f32.mrb[0].mxu0
        %v2013 = vpop.f32.mrb[0].mxu0
        %v2014 = vadd.f32 0.0, %v2013
        %v2015 = vpop.f32.mrb[0].mxu0
        %2016 = vmatprep.mubr.bf16.mxu0 0
        %2017 = vmatmul.mubr.bf16.gmra.mrb[0].mxu0 %v1968
        %v2018 = vpop.f32.mrb[0].mxu0
        %v2019 = vadd.f32 0.0, %v2018
        %v2020 = vpop.f32.mrb[0].mxu0
        %v2021 = vpop.f32.mrb[0].mxu0
        %v2022 = vpop.f32.mrb[0].mxu0
        %2023 = vdwg.mxu0
        %v2024 = vsel %vm1851, %v2011, -inf
        %2025 = vmax.xlane.f32.xlu0 %v2024
        %v2026 = vpop.xlane.xlu0 %2025
        %v2027 = vsel %vm1851, %v2014, -inf
        %2028 = vmax.xlane.f32.xlu0 %v2027
        %v2029 = vpop.xlane.xlu0 %2028
        %v2030 = vsel %vm1858, %v2019, -inf
        %2031 = vmax.xlane.f32.xlu0 %v2030
        %v2032 = vpop.xlane.xlu0 %2031
        %v2033 = vsub.f32 %v2011, %v2026
        %v2034 = vsub.f32 %v2014, %v2029
        %v2035 = vsub.f32 %v2019, %v2032
        %v2036 = vmul.f32 %v2033, 1.442695
        %v2037 = vpow.pop %v2036
        %v2038 = vmul.f32 %v2034, 1.442695
        %v2039 = vpow.pop %v2038
        %v2040 = vmul.f32 %v2035, 1.442695
        %v2041 = vpow.pop %v2040
        %v2042 = vsel %vm1851, %v2037, 0.0
        %2043 = vadd.xlane.f32.xlu0 %v2042
        %v2044 = vpop.xlane.xlu0 %2043
        %v2045 = vsel %vm1851, %v2039, 0.0
        %2046 = vadd.xlane.f32.xlu0 %v2045
        %v2047 = vpop.xlane.xlu0 %2046
        %v2048 = vsel %vm1858, %v2041, 0.0
        %2049 = vadd.xlane.f32.xlu0 %v2048
        %v2050 = vpop.xlane.xlu0 %2049
        %v2051 = vrcp.pop %v2044
        %v2052 = vrcp.pop %v2047
        %v2053 = vrcp.pop %v2050
        %v2054 = vmul.f32 %v2037, %v2051
        %v2055 = vmul.f32 %v2039, %v2052
        %v2056 = vmul.f32 %v2041, %v2053
        %v2057 = vpack.c.bf16 %v2055, %v2054
        %v2058 = vpack.c.bf16 %v2056, %v2056
        %2061 = vrot.lane.b32.xlu0 %v1787, 112
        %v2062 = vpop.permute.xlu0 %2061
        %2063 = vrot.lane.b32.xlu0 %v1788, 112
        %v2064 = vpop.permute.xlu0 %2063
        %v2067 = vsel %vm1851, %v2057, 0
        %v2070 = vsel %vm1851, %v2058, 0
        %v2073 = vand.u32 %v2064, %v1896
        %2075 = vmatprep.subr.bf16.mxu0 0
        %2076 = vmatpush1.bf16.msra.mxu0 %v2062
        %2077 = vmatprep.subr.bf16.mxu0 0
        %2078 = vmatpush1.bf16.msra.mxu0 %v2073
        %2079 = vmatprep.subr.bf16.mxu0 0
        %2080 = vmatpush1.bf16.msra.mxu0 0
        %2081 = vmatprep.subr.bf16.mxu0 0
        %2082 = vmatpush1.bf16.msra.mxu0 0
        %2083 = vmatprep.subr.bf16.mxu0 0
        %2084 = vmatpush1.bf16.msra.mxu0 0
        %2085 = vmatprep.subr.bf16.mxu0 0
        %2086 = vmatpush1.bf16.msra.mxu0 0
        %2087 = vmatprep.subr.bf16.mxu0 0
        %2088 = vmatpush1.bf16.msra.mxu0 0
        %2089 = vmatprep.subr.bf16.mxu0 0
        %2090 = vmatpush1.bf16.msra.mxu0 0
        %2091 = vmatprep.subr.bf16.mxu0 0
        %2092 = vmatpush1.bf16.msra.mxu0 0
        %2093 = vmatprep.subr.bf16.mxu0 0
        %2094 = vmatpush1.bf16.msra.mxu0 0
        %2095 = vmatprep.subr.bf16.mxu0 0
        %2096 = vmatpush1.bf16.msra.mxu0 0
        %2097 = vmatprep.subr.bf16.mxu0 0
        %2098 = vmatpush1.bf16.msra.mxu0 0
        %2099 = vmatprep.subr.bf16.mxu0 0
        %2100 = vmatpush1.bf16.msra.mxu0 0
        %2101 = vmatprep.subr.bf16.mxu0 0
        %2102 = vmatpush1.bf16.msra.mxu0 0
        %2103 = vmatprep.subr.bf16.mxu0 0
        %2104 = vmatpush1.bf16.msra.mxu0 0
        %2105 = vmatprep.subr.bf16.mxu0 0
        %2106 = vmatpush1.bf16.msra.mxu0 0
        %2107 = vmatprep.mubr.bf16.mxu0 0
        %2108 = vmatmul.mubr.bf16.gmra.mrb[0].mxu0 %v2067
        %v2109 = vpop.f32.mrb[0].mxu0
        %v2110 = vadd.f32 0.0, %v2109
        %v2111 = vpop.f32.mrb[0].mxu0
        %v2112 = vpop.f32.mrb[0].mxu0
        %v2113 = vadd.f32 0.0, %v2112
        %v2114 = vpop.f32.mrb[0].mxu0
        %2115 = vmatprep.mubr.bf16.mxu0 0
        %2116 = vmatmul.mubr.bf16.gmra.mrb[0].mxu0 %v2070
        %v2117 = vpop.f32.mrb[0].mxu0
        %v2118 = vadd.f32 0.0, %v2117
        %v2119 = vpop.f32.mrb[0].mxu0
        %v2120 = vpop.f32.mrb[0].mxu0
        %v2121 = vpop.f32.mrb[0].mxu0
        %2122 = vdwg.mxu0
        %2126 = vrot.lane.b32.xlu0 %v2110, 16
        %v2127 = vpop.permute.xlu0 %2126
        %2128 = vrot.lane.b32.xlu0 %v2113, 16
        %v2129 = vpop.permute.xlu0 %2128
        %2130 = vrot.lane.b32.xlu0 %v2118, 16
        %v2131 = vpop.permute.xlu0 %2130
        %vm2135 = vcmask 261248
        %2136 = vst.msk [vmem:[#allocation3] sm:$0xff] %vm2135, %v2127
        %2137 = vst.msk [vmem:[#allocation3 + $0x8] sm:$0xff] %vm2135, %v2129
        %vm2138 = vcmask 254080
        %2139 = vst.msk [vmem:[#allocation3 + $0x10] sm:$0x1] %vm2138, %v2131
        %2140 = vrot.lane.b32.xlu0 %v1781, 96
        %v2141 = vpop.permute.xlu0 %2140
        %2142 = vrot.lane.b32.xlu0 %v1782, 96
        %v2143 = vpop.permute.xlu0 %2142
        %2144 = vrot.lane.b32.xlu0 %v1784, 96
        %v2145 = vpop.permute.xlu0 %2144
        %2146 = vrot.lane.b32.xlu0 %v1785, 96
        %v2147 = vpop.permute.xlu0 %2146
        %v2149 = vsel %vm1790, %v2141, 0
        %v2152 = vsel %vm1790, %v2143, 0
        %v2155 = vsel %vm1790, %v2145, 0
        %v2158 = vsel %vm1790, %v2147, 0
        %2160 = vmatprep.subr.bf16.mxu0 0
        %2161 = vmatpush1.bf16.xpose.msra.mxu0 %v2155
        %2162 = vmatprep.subr.bf16.mxu0 0
        %2163 = vmatpush1.bf16.xpose.msra.mxu0 %v2158
        %2164 = vmatprep.subr.bf16.mxu0 0
        %2165 = vmatpush1.bf16.xpose.msra.mxu0 0
        %2166 = vmatprep.subr.bf16.mxu0 0
        %2167 = vmatpush1.bf16.xpose.msra.mxu0 0
        %2168 = vmatprep.subr.bf16.mxu0 0
        %2169 = vmatpush1.bf16.xpose.msra.mxu0 0
        %2170 = vmatprep.subr.bf16.mxu0 0
        %2171 = vmatpush1.bf16.xpose.msra.mxu0 0
        %2172 = vmatprep.subr.bf16.mxu0 0
        %2173 = vmatpush1.bf16.xpose.msra.mxu0 0
        %2174 = vmatprep.subr.bf16.mxu0 0
        %2175 = vmatpush1.bf16.xpose.msra.mxu0 0
        %2176 = vmatprep.subr.bf16.mxu0 0
        %2177 = vmatpush1.bf16.xpose.msra.mxu0 0
        %2178 = vmatprep.subr.bf16.mxu0 0
        %2179 = vmatpush1.bf16.xpose.msra.mxu0 0
        %2180 = vmatprep.subr.bf16.mxu0 0
        %2181 = vmatpush1.bf16.xpose.msra.mxu0 0
        %2182 = vmatprep.subr.bf16.mxu0 0
        %2183 = vmatpush1.bf16.xpose.msra.mxu0 0
        %2184 = vmatprep.subr.bf16.mxu0 0
        %2185 = vmatpush1.bf16.xpose.msra.mxu0 0
        %2186 = vmatprep.subr.bf16.mxu0 0
        %2187 = vmatpush1.bf16.xpose.msra.mxu0 0
        %2188 = vmatprep.subr.bf16.mxu0 0
        %2189 = vmatpush1.bf16.xpose.msra.mxu0 0
        %2190 = vmatprep.subr.bf16.mxu0 0
        %2191 = vmatpush1.bf16.xpose.msra.mxu0 0
        %2192 = vmatprep.mubr.bf16.mxu0 0
        %2193 = vmatmul.mubr.bf16.gmra.mrb[0].mxu0 %v2149
        %v2194 = vpop.f32.mrb[0].mxu0
        %v2195 = vadd.f32 0.0, %v2194
        %v2196 = vpop.f32.mrb[0].mxu0
        %v2197 = vpop.f32.mrb[0].mxu0
        %v2198 = vadd.f32 0.0, %v2197
        %v2199 = vpop.f32.mrb[0].mxu0
        %2200 = vmatprep.mubr.bf16.mxu0 0
        %2201 = vmatmul.mubr.bf16.gmra.mrb[0].mxu0 %v2152
        %v2202 = vpop.f32.mrb[0].mxu0
        %v2203 = vadd.f32 0.0, %v2202
        %v2204 = vpop.f32.mrb[0].mxu0
        %v2205 = vpop.f32.mrb[0].mxu0
        %v2206 = vpop.f32.mrb[0].mxu0
        %2207 = vdwg.mxu0
        %v2208 = vsel %vm1851, %v2195, -inf
        %2209 = vmax.xlane.f32.xlu0 %v2208
        %v2210 = vpop.xlane.xlu0 %2209
        %v2211 = vsel %vm1851, %v2198, -inf
        %2212 = vmax.xlane.f32.xlu0 %v2211
        %v2213 = vpop.xlane.xlu0 %2212
        %v2214 = vsel %vm1858, %v2203, -inf
        %2215 = vmax.xlane.f32.xlu0 %v2214
        %v2216 = vpop.xlane.xlu0 %2215
        %v2217 = vsub.f32 %v2195, %v2210
        %v2218 = vsub.f32 %v2198, %v2213
        %v2219 = vsub.f32 %v2203, %v2216
        %v2220 = vmul.f32 %v2217, 1.442695
        %v2221 = vpow.pop %v2220
        %v2222 = vmul.f32 %v2218, 1.442695
        %v2223 = vpow.pop %v2222
        %v2224 = vmul.f32 %v2219, 1.442695
        %v2225 = vpow.pop %v2224
        %v2226 = vsel %vm1851, %v2221, 0.0
        %2227 = vadd.xlane.f32.xlu0 %v2226
        %v2228 = vpop.xlane.xlu0 %2227
        %v2229 = vsel %vm1851, %v2223, 0.0
        %2230 = vadd.xlane.f32.xlu0 %v2229
        %v2231 = vpop.xlane.xlu0 %2230
        %v2232 = vsel %vm1858, %v2225, 0.0
        %2233 = vadd.xlane.f32.xlu0 %v2232
        %v2234 = vpop.xlane.xlu0 %2233
        %v2235 = vrcp.pop %v2228
        %v2236 = vrcp.pop %v2231
        %v2237 = vrcp.pop %v2234
        %v2238 = vmul.f32 %v2221, %v2235
        %v2239 = vmul.f32 %v2223, %v2236
        %v2240 = vmul.f32 %v2225, %v2237
        %v2241 = vpack.c.bf16 %v2239, %v2238
        %v2242 = vpack.c.bf16 %v2240, %v2240
        %2243 = vrot.lane.b32.xlu0 %v1787, 96
        %v2244 = vpop.permute.xlu0 %2243
        %2245 = vrot.lane.b32.xlu0 %v1788, 96
        %v2246 = vpop.permute.xlu0 %2245
        %v2249 = vsel %vm1851, %v2241, 0
        %v2252 = vsel %vm1851, %v2242, 0
        %v2255 = vand.u32 %v2246, %v1896
        %2257 = vmatprep.subr.bf16.mxu0 0
        %2258 = vmatpush1.bf16.msra.mxu0 %v2244
        %2259 = vmatprep.subr.bf16.mxu0 0
        %2260 = vmatpush1.bf16.msra.mxu0 %v2255
        %2261 = vmatprep.subr.bf16.mxu0 0
        %2262 = vmatpush1.bf16.msra.mxu0 0
        %2263 = vmatprep.subr.bf16.mxu0 0
        %2264 = vmatpush1.bf16.msra.mxu0 0
        %2265 = vmatprep.subr.bf16.mxu0 0
        %2266 = vmatpush1.bf16.msra.mxu0 0
        %2267 = vmatprep.subr.bf16.mxu0 0
        %2268 = vmatpush1.bf16.msra.mxu0 0
        %2269 = vmatprep.subr.bf16.mxu0 0
        %2270 = vmatpush1.bf16.msra.mxu0 0
        %2271 = vmatprep.subr.bf16.mxu0 0
        %2272 = vmatpush1.bf16.msra.mxu0 0
        %2273 = vmatprep.subr.bf16.mxu0 0
        %2274 = vmatpush1.bf16.msra.mxu0 0
        %2275 = vmatprep.subr.bf16.mxu0 0
        %2276 = vmatpush1.bf16.msra.mxu0 0
        %2277 = vmatprep.subr.bf16.mxu0 0
        %2278 = vmatpush1.bf16.msra.mxu0 0
        %2279 = vmatprep.subr.bf16.mxu0 0
        %2280 = vmatpush1.bf16.msra.mxu0 0
        %2281 = vmatprep.subr.bf16.mxu0 0
        %2282 = vmatpush1.bf16.msra.mxu0 0
        %2283 = vmatprep.subr.bf16.mxu0 0
        %2284 = vmatpush1.bf16.msra.mxu0 0
        %2285 = vmatprep.subr.bf16.mxu0 0
        %2286 = vmatpush1.bf16.msra.mxu0 0
        %2287 = vmatprep.subr.bf16.mxu0 0
        %2288 = vmatpush1.bf16.msra.mxu0 0
        %2289 = vmatprep.mubr.bf16.mxu0 0
        %2290 = vmatmul.mubr.bf16.gmra.mrb[0].mxu0 %v2249
        %v2291 = vpop.f32.mrb[0].mxu0
        %v2292 = vadd.f32 0.0, %v2291
        %v2293 = vpop.f32.mrb[0].mxu0
        %v2294 = vpop.f32.mrb[0].mxu0
        %v2295 = vadd.f32 0.0, %v2294
        %v2296 = vpop.f32.mrb[0].mxu0
        %2297 = vmatprep.mubr.bf16.mxu0 0
        %2298 = vmatmul.mubr.bf16.gmra.mrb[0].mxu0 %v2252
        %v2299 = vpop.f32.mrb[0].mxu0
        %v2300 = vadd.f32 0.0, %v2299
        %v2301 = vpop.f32.mrb[0].mxu0
        %v2302 = vpop.f32.mrb[0].mxu0
        %v2303 = vpop.f32.mrb[0].mxu0
        %2304 = vdwg.mxu0
        %2308 = vrot.lane.b32.xlu0 %v2292, 32
        %v2309 = vpop.permute.xlu0 %2308
        %2310 = vrot.lane.b32.xlu0 %v2295, 32
        %v2311 = vpop.permute.xlu0 %2310
        %2312 = vrot.lane.b32.xlu0 %v2300, 32
        %v2313 = vpop.permute.xlu0 %2312
        %vm2317 = vcmask 392448
        %2318 = vst.msk [vmem:[#allocation3] sm:$0xff] %vm2317, %v2309
        %2319 = vst.msk [vmem:[#allocation3 + $0x8] sm:$0xff] %vm2317, %v2311
        %vm2320 = vcmask 385280
        %2321 = vst.msk [vmem:[#allocation3 + $0x10] sm:$0x1] %vm2320, %v2313
        %2322 = vrot.lane.b32.xlu0 %v1781, 80
        %v2323 = vpop.permute.xlu0 %2322
        %2324 = vrot.lane.b32.xlu0 %v1782, 80
        %v2325 = vpop.permute.xlu0 %2324
        %2326 = vrot.lane.b32.xlu0 %v1784, 80
        %v2327 = vpop.permute.xlu0 %2326
        %2328 = vrot.lane.b32.xlu0 %v1785, 80
        %v2329 = vpop.permute.xlu0 %2328
        %v2331 = vsel %vm1790, %v2323, 0
        %v2334 = vsel %vm1790, %v2325, 0
        %v2337 = vsel %vm1790, %v2327, 0
        %v2340 = vsel %vm1790, %v2329, 0
        %2342 = vmatprep.subr.bf16.mxu0 0
        %2343 = vmatpush1.bf16.xpose.msra.mxu0 %v2337
        %2344 = vmatprep.subr.bf16.mxu0 0
        %2345 = vmatpush1.bf16.xpose.msra.mxu0 %v2340
        %2346 = vmatprep.subr.bf16.mxu0 0
        %2347 = vmatpush1.bf16.xpose.msra.mxu0 0
        %2348 = vmatprep.subr.bf16.mxu0 0
        %2349 = vmatpush1.bf16.xpose.msra.mxu0 0
        %2350 = vmatprep.subr.bf16.mxu0 0
        %2351 = vmatpush1.bf16.xpose.msra.mxu0 0
        %2352 = vmatprep.subr.bf16.mxu0 0
        %2353 = vmatpush1.bf16.xpose.msra.mxu0 0
        %2354 = vmatprep.subr.bf16.mxu0 0
        %2355 = vmatpush1.bf16.xpose.msra.mxu0 0
        %2356 = vmatprep.subr.bf16.mxu0 0
        %2357 = vmatpush1.bf16.xpose.msra.mxu0 0
        %2358 = vmatprep.subr.bf16.mxu0 0
        %2359 = vmatpush1.bf16.xpose.msra.mxu0 0
        %2360 = vmatprep.subr.bf16.mxu0 0
        %2361 = vmatpush1.bf16.xpose.msra.mxu0 0
        %2362 = vmatprep.subr.bf16.mxu0 0
        %2363 = vmatpush1.bf16.xpose.msra.mxu0 0
        %2364 = vmatprep.subr.bf16.mxu0 0
        %2365 = vmatpush1.bf16.xpose.msra.mxu0 0
        %2366 = vmatprep.subr.bf16.mxu0 0
        %2367 = vmatpush1.bf16.xpose.msra.mxu0 0
        %2368 = vmatprep.subr.bf16.mxu0 0
        %2369 = vmatpush1.bf16.xpose.msra.mxu0 0
        %2370 = vmatprep.subr.bf16.mxu0 0
        %2371 = vmatpush1.bf16.xpose.msra.mxu0 0
        %2372 = vmatprep.subr.bf16.mxu0 0
        %2373 = vmatpush1.bf16.xpose.msra.mxu0 0
        %2374 = vmatprep.mubr.bf16.mxu0 0
        %2375 = vmatmul.mubr.bf16.gmra.mrb[0].mxu0 %v2331
        %v2376 = vpop.f32.mrb[0].mxu0
        %v2377 = vadd.f32 0.0, %v2376
        %v2378 = vpop.f32.mrb[0].mxu0
        %v2379 = vpop.f32.mrb[0].mxu0
        %v2380 = vadd.f32 0.0, %v2379
        %v2381 = vpop.f32.mrb[0].mxu0
        %2382 = vmatprep.mubr.bf16.mxu0 0
        %2383 = vmatmul.mubr.bf16.gmra.mrb[0].mxu0 %v2334
        %v2384 = vpop.f32.mrb[0].mxu0
        %v2385 = vadd.f32 0.0, %v2384
        %v2386 = vpop.f32.mrb[0].mxu0
        %v2387 = vpop.f32.mrb[0].mxu0
        %v2388 = vpop.f32.mrb[0].mxu0
        %2389 = vdwg.mxu0
        %v2390 = vsel %vm1851, %v2377, -inf
        %2391 = vmax.xlane.f32.xlu0 %v2390
        %v2392 = vpop.xlane.xlu0 %2391
        %v2393 = vsel %vm1851, %v2380, -inf
        %2394 = vmax.xlane.f32.xlu0 %v2393
        %v2395 = vpop.xlane.xlu0 %2394
        %v2396 = vsel %vm1858, %v2385, -inf
        %2397 = vmax.xlane.f32.xlu0 %v2396
        %v2398 = vpop.xlane.xlu0 %2397
        %v2399 = vsub.f32 %v2377, %v2392
        %v2400 = vsub.f32 %v2380, %v2395
        %v2401 = vsub.f32 %v2385, %v2398
        %v2402 = vmul.f32 %v2399, 1.442695
        %v2403 = vpow.pop %v2402
        %v2404 = vmul.f32 %v2400, 1.442695
        %v2405 = vpow.pop %v2404
        %v2406 = vmul.f32 %v2401, 1.442695
        %v2407 = vpow.pop %v2406
        %v2408 = vsel %vm1851, %v2403, 0.0
        %2409 = vadd.xlane.f32.xlu0 %v2408
        %v2410 = vpop.xlane.xlu0 %2409
        %v2411 = vsel %vm1851, %v2405, 0.0
        %2412 = vadd.xlane.f32.xlu0 %v2411
        %v2413 = vpop.xlane.xlu0 %2412
        %v2414 = vsel %vm1858, %v2407, 0.0
        %2415 = vadd.xlane.f32.xlu0 %v2414
        %v2416 = vpop.xlane.xlu0 %2415
        %v2417 = vrcp.pop %v2410
        %v2418 = vrcp.pop %v2413
        %v2419 = vrcp.pop %v2416
        %v2420 = vmul.f32 %v2403, %v2417
        %v2421 = vmul.f32 %v2405, %v2418
        %v2422 = vmul.f32 %v2407, %v2419
        %v2423 = vpack.c.bf16 %v2421, %v2420
        %v2424 = vpack.c.bf16 %v2422, %v2422
        %2425 = vrot.lane.b32.xlu0 %v1787, 80
        %v2426 = vpop.permute.xlu0 %2425
        %2427 = vrot.lane.b32.xlu0 %v1788, 80
        %v2428 = vpop.permute.xlu0 %2427
        %v2431 = vsel %vm1851, %v2423, 0
        %v2434 = vsel %vm1851, %v2424, 0
        %v2437 = vand.u32 %v2428, %v1896
        %2439 = vmatprep.subr.bf16.mxu0 0
        %2440 = vmatpush1.bf16.msra.mxu0 %v2426
        %2441 = vmatprep.subr.bf16.mxu0 0
        %2442 = vmatpush1.bf16.msra.mxu0 %v2437
        %2443 = vmatprep.subr.bf16.mxu0 0
        %2444 = vmatpush1.bf16.msra.mxu0 0
        %2445 = vmatprep.subr.bf16.mxu0 0
        %2446 = vmatpush1.bf16.msra.mxu0 0
        %2447 = vmatprep.subr.bf16.mxu0 0
        %2448 = vmatpush1.bf16.msra.mxu0 0
        %2449 = vmatprep.subr.bf16.mxu0 0
        %2450 = vmatpush1.bf16.msra.mxu0 0
        %2451 = vmatprep.subr.bf16.mxu0 0
        %2452 = vmatpush1.bf16.msra.mxu0 0
        %2453 = vmatprep.subr.bf16.mxu0 0
        %2454 = vmatpush1.bf16.msra.mxu0 0
        %2455 = vmatprep.subr.bf16.mxu0 0
        %2456 = vmatpush1.bf16.msra.mxu0 0
        %2457 = vmatprep.subr.bf16.mxu0 0
        %2458 = vmatpush1.bf16.msra.mxu0 0
        %2459 = vmatprep.subr.bf16.mxu0 0
        %2460 = vmatpush1.bf16.msra.mxu0 0
        %2461 = vmatprep.subr.bf16.mxu0 0
        %2462 = vmatpush1.bf16.msra.mxu0 0
        %2463 = vmatprep.subr.bf16.mxu0 0
        %2464 = vmatpush1.bf16.msra.mxu0 0
        %2465 = vmatprep.subr.bf16.mxu0 0
        %2466 = vmatpush1.bf16.msra.mxu0 0
        %2467 = vmatprep.subr.bf16.mxu0 0
        %2468 = vmatpush1.bf16.msra.mxu0 0
        %2469 = vmatprep.subr.bf16.mxu0 0
        %2470 = vmatpush1.bf16.msra.mxu0 0
        %2471 = vmatprep.mubr.bf16.mxu0 0
        %2472 = vmatmul.mubr.bf16.gmra.mrb[0].mxu0 %v2431
        %v2473 = vpop.f32.mrb[0].mxu0
        %v2474 = vadd.f32 0.0, %v2473
        %v2475 = vpop.f32.mrb[0].mxu0
        %v2476 = vpop.f32.mrb[0].mxu0
        %v2477 = vadd.f32 0.0, %v2476
        %v2478 = vpop.f32.mrb[0].mxu0
        %2479 = vmatprep.mubr.bf16.mxu0 0
        %2480 = vmatmul.mubr.bf16.gmra.mrb[0].mxu0 %v2434
        %v2481 = vpop.f32.mrb[0].mxu0
        %v2482 = vadd.f32 0.0, %v2481
        %v2483 = vpop.f32.mrb[0].mxu0
        %v2484 = vpop.f32.mrb[0].mxu0
        %v2485 = vpop.f32.mrb[0].mxu0
        %2486 = vdwg.mxu0
        %2490 = vrot.lane.b32.xlu0 %v2474, 48
        %v2491 = vpop.permute.xlu0 %2490
        %2492 = vrot.lane.b32.xlu0 %v2477, 48
        %v2493 = vpop.permute.xlu0 %2492
        %2494 = vrot.lane.b32.xlu0 %v2482, 48
        %v2495 = vpop.permute.xlu0 %2494
        %vm2499 = vcmask 523648
        %2500 = vst.msk [vmem:[#allocation3] sm:$0xff] %vm2499, %v2491
        %2501 = vst.msk [vmem:[#allocation3 + $0x8] sm:$0xff] %vm2499, %v2493
        %vm2502 = vcmask 516480
        %2503 = vst.msk [vmem:[#allocation3 + $0x10] sm:$0x1] %vm2502, %v2495
        %vm2504 = vsmask.f32 7424
        %v2505 = vshrl.u32 %v1782, 16
        %v2507 = vshll.u32 %v1782, 16
        %v2509 = vrot.slane %v2507, 1
        %v2510 = vor.u32 %v2505, %v2509
        %v2512 = vshll.u32 %v1783, 16
        %v2514 = vrot.slane %v2512, 1
        %v2515 = vsel %vm2504, %v2510, %v2514
        %v2516 = vshrl.u32 %v1783, 16
        %v2518 = vshrl.u32 %v1785, 16
        %v2520 = vshll.u32 %v1785, 16
        %v2522 = vrot.slane %v2520, 1
        %v2523 = vor.u32 %v2518, %v2522
        %v2525 = vshll.u32 %v1786, 16
        %v2527 = vrot.slane %v2525, 1
        %v2528 = vsel %vm2504, %v2523, %v2527
        %v2529 = vshrl.u32 %v1786, 16
        %v2532 = vsel %vm1790, %v2515, 0
        %v2535 = vsel %vm1790, %v2516, 0
        %v2538 = vsel %vm1790, %v2528, 0
        %v2541 = vsel %vm1790, %v2529, 0
        %2543 = vmatprep.subr.bf16.mxu0 0
        %2544 = vmatpush1.bf16.xpose.msra.mxu0 %v2538
        %2545 = vmatprep.subr.bf16.mxu0 0
        %2546 = vmatpush1.bf16.xpose.msra.mxu0 %v2541
        %2547 = vmatprep.subr.bf16.mxu0 0
        %2548 = vmatpush1.bf16.xpose.msra.mxu0 0
        %2549 = vmatprep.subr.bf16.mxu0 0
        %2550 = vmatpush1.bf16.xpose.msra.mxu0 0
        %2551 = vmatprep.subr.bf16.mxu0 0
        %2552 = vmatpush1.bf16.xpose.msra.mxu0 0
        %2553 = vmatprep.subr.bf16.mxu0 0
        %2554 = vmatpush1.bf16.xpose.msra.mxu0 0
        %2555 = vmatprep.subr.bf16.mxu0 0
        %2556 = vmatpush1.bf16.xpose.msra.mxu0 0
        %2557 = vmatprep.subr.bf16.mxu0 0
        %2558 = vmatpush1.bf16.xpose.msra.mxu0 0
        %2559 = vmatprep.subr.bf16.mxu0 0
        %2560 = vmatpush1.bf16.xpose.msra.mxu0 0
        %2561 = vmatprep.subr.bf16.mxu0 0
        %2562 = vmatpush1.bf16.xpose.msra.mxu0 0
        %2563 = vmatprep.subr.bf16.mxu0 0
        %2564 = vmatpush1.bf16.xpose.msra.mxu0 0
        %2565 = vmatprep.subr.bf16.mxu0 0
        %2566 = vmatpush1.bf16.xpose.msra.mxu0 0
        %2567 = vmatprep.subr.bf16.mxu0 0
        %2568 = vmatpush1.bf16.xpose.msra.mxu0 0
        %2569 = vmatprep.subr.bf16.mxu0 0
        %2570 = vmatpush1.bf16.xpose.msra.mxu0 0
        %2571 = vmatprep.subr.bf16.mxu0 0
        %2572 = vmatpush1.bf16.xpose.msra.mxu0 0
        %2573 = vmatprep.subr.bf16.mxu0 0
        %2574 = vmatpush1.bf16.xpose.msra.mxu0 0
        %2575 = vmatprep.mubr.bf16.mxu0 0
        %2576 = vmatmul.mubr.bf16.gmra.mrb[0].mxu0 %v2532
        %v2577 = vpop.f32.mrb[0].mxu0
        %v2578 = vadd.f32 0.0, %v2577
        %v2579 = vpop.f32.mrb[0].mxu0
        %v2580 = vpop.f32.mrb[0].mxu0
        %v2581 = vadd.f32 0.0, %v2580
        %v2582 = vpop.f32.mrb[0].mxu0
        %2583 = vmatprep.mubr.bf16.mxu0 0
        %2584 = vmatmul.mubr.bf16.gmra.mrb[0].mxu0 %v2535
        %v2585 = vpop.f32.mrb[0].mxu0
        %v2586 = vadd.f32 0.0, %v2585
        %v2587 = vpop.f32.mrb[0].mxu0
        %v2588 = vpop.f32.mrb[0].mxu0
        %v2589 = vpop.f32.mrb[0].mxu0
        %2590 = vdwg.mxu0
        %v2591 = vsel %vm1851, %v2578, -inf
        %2592 = vmax.xlane.f32.xlu0 %v2591
        %v2593 = vpop.xlane.xlu0 %2592
        %v2594 = vsel %vm1851, %v2581, -inf
        %2595 = vmax.xlane.f32.xlu0 %v2594
        %v2596 = vpop.xlane.xlu0 %2595
        %v2597 = vsel %vm1858, %v2586, -inf
        %2598 = vmax.xlane.f32.xlu0 %v2597
        %v2599 = vpop.xlane.xlu0 %2598
        %v2600 = vsub.f32 %v2578, %v2593
        %v2601 = vsub.f32 %v2581, %v2596
        %v2602 = vsub.f32 %v2586, %v2599
        %v2603 = vmul.f32 %v2600, 1.442695
        %v2604 = vpow.pop %v2603
        %v2605 = vmul.f32 %v2601, 1.442695
        %v2606 = vpow.pop %v2605
        %v2607 = vmul.f32 %v2602, 1.442695
        %v2608 = vpow.pop %v2607
        %v2609 = vsel %vm1851, %v2604, 0.0
        %2610 = vadd.xlane.f32.xlu0 %v2609
        %v2611 = vpop.xlane.xlu0 %2610
        %v2612 = vsel %vm1851, %v2606, 0.0
        %2613 = vadd.xlane.f32.xlu0 %v2612
        %v2614 = vpop.xlane.xlu0 %2613
        %v2615 = vsel %vm1858, %v2608, 0.0
        %2616 = vadd.xlane.f32.xlu0 %v2615
        %v2617 = vpop.xlane.xlu0 %2616
        %v2618 = vrcp.pop %v2611
        %v2619 = vrcp.pop %v2614
        %v2620 = vrcp.pop %v2617
        %v2621 = vmul.f32 %v2604, %v2618
        %v2622 = vmul.f32 %v2606, %v2619
        %v2623 = vmul.f32 %v2608, %v2620
        %v2624 = vpack.c.bf16 %v2622, %v2621
        %v2625 = vpack.c.bf16 %v2623, %v2623
        %v2626 = vshrl.u32 %v1788, 16
        %v2628 = vshll.u32 %v1788, 16
        %v2630 = vrot.slane %v2628, 1
        %v2631 = vor.u32 %v2626, %v2630
        %v2633 = vshll.u32 %v1789, 16
        %v2635 = vrot.slane %v2633, 1
        %v2636 = vsel %vm2504, %v2631, %v2635
        %v2637 = vshrl.u32 %v1789, 16
        %v2641 = vsel %vm1851, %v2624, 0
        %v2644 = vsel %vm1851, %v2625, 0
        %v2647 = vand.u32 %v2637, %v1896
        %2649 = vmatprep.subr.bf16.mxu0 0
        %2650 = vmatpush1.bf16.msra.mxu0 %v2636
        %2651 = vmatprep.subr.bf16.mxu0 0
        %2652 = vmatpush1.bf16.msra.mxu0 %v2647
        %2653 = vmatprep.subr.bf16.mxu0 0
        %2654 = vmatpush1.bf16.msra.mxu0 0
        %2655 = vmatprep.subr.bf16.mxu0 0
        %2656 = vmatpush1.bf16.msra.mxu0 0
        %2657 = vmatprep.subr.bf16.mxu0 0
        %2658 = vmatpush1.bf16.msra.mxu0 0
        %2659 = vmatprep.subr.bf16.mxu0 0
        %2660 = vmatpush1.bf16.msra.mxu0 0
        %2661 = vmatprep.subr.bf16.mxu0 0
        %2662 = vmatpush1.bf16.msra.mxu0 0
        %2663 = vmatprep.subr.bf16.mxu0 0
        %2664 = vmatpush1.bf16.msra.mxu0 0
        %2665 = vmatprep.subr.bf16.mxu0 0
        %2666 = vmatpush1.bf16.msra.mxu0 0
        %2667 = vmatprep.subr.bf16.mxu0 0
        %2668 = vmatpush1.bf16.msra.mxu0 0
        %2669 = vmatprep.subr.bf16.mxu0 0
        %2670 = vmatpush1.bf16.msra.mxu0 0
        %2671 = vmatprep.subr.bf16.mxu0 0
        %2672 = vmatpush1.bf16.msra.mxu0 0
        %2673 = vmatprep.subr.bf16.mxu0 0
        %2674 = vmatpush1.bf16.msra.mxu0 0
        %2675 = vmatprep.subr.bf16.mxu0 0
        %2676 = vmatpush1.bf16.msra.mxu0 0
        %2677 = vmatprep.subr.bf16.mxu0 0
        %2678 = vmatpush1.bf16.msra.mxu0 0
        %2679 = vmatprep.subr.bf16.mxu0 0
        %2680 = vmatpush1.bf16.msra.mxu0 0
        %2681 = vmatprep.mubr.bf16.mxu0 0
        %2682 = vmatmul.mubr.bf16.gmra.mrb[0].mxu0 %v2641
        %v2683 = vpop.f32.mrb[0].mxu0
        %v2684 = vadd.f32 0.0, %v2683
        %v2685 = vpop.f32.mrb[0].mxu0
        %v2686 = vpop.f32.mrb[0].mxu0
        %v2687 = vadd.f32 0.0, %v2686
        %v2688 = vpop.f32.mrb[0].mxu0
        %2689 = vmatprep.mubr.bf16.mxu0 0
        %2690 = vmatmul.mubr.bf16.gmra.mrb[0].mxu0 %v2644
        %v2691 = vpop.f32.mrb[0].mxu0
        %v2692 = vadd.f32 0.0, %v2691
        %v2693 = vpop.f32.mrb[0].mxu0
        %v2694 = vpop.f32.mrb[0].mxu0
        %v2695 = vpop.f32.mrb[0].mxu0
        %2696 = vdwg.mxu0
        %2697 = vst.msk [vmem:[#allocation3 + $0x11] sm:$0xff] %vm1790, %v2684
        %2698 = vst.msk [vmem:[#allocation3 + $0x19] sm:$0xff] %vm1790, %v2687
        %2699 = vst.msk [vmem:[#allocation3 + $0x21] sm:$0x1] %vm1950, %v2692
        %2700 = vrot.lane.b32.xlu0 %v2515, 112
        %v2701 = vpop.permute.xlu0 %2700
        %2702 = vrot.lane.b32.xlu0 %v2516, 112
        %v2703 = vpop.permute.xlu0 %2702
        %2704 = vrot.lane.b32.xlu0 %v2528, 112
        %v2705 = vpop.permute.xlu0 %2704
        %2706 = vrot.lane.b32.xlu0 %v2529, 112
        %v2707 = vpop.permute.xlu0 %2706
        %v2709 = vsel %vm1790, %v2701, 0
        %v2712 = vsel %vm1790, %v2703, 0
        %v2715 = vsel %vm1790, %v2705, 0
        %v2718 = vsel %vm1790, %v2707, 0
        %2720 = vmatprep.subr.bf16.mxu0 0
        %2721 = vmatpush1.bf16.xpose.msra.mxu0 %v2715
        %2722 = vmatprep.subr.bf16.mxu0 0
        %2723 = vmatpush1.bf16.xpose.msra.mxu0 %v2718
        %2724 = vmatprep.subr.bf16.mxu0 0
        %2725 = vmatpush1.bf16.xpose.msra.mxu0 0
        %2726 = vmatprep.subr.bf16.mxu0 0
        %2727 = vmatpush1.bf16.xpose.msra.mxu0 0
        %2728 = vmatprep.subr.bf16.mxu0 0
        %2729 = vmatpush1.bf16.xpose.msra.mxu0 0
        %2730 = vmatprep.subr.bf16.mxu0 0
        %2731 = vmatpush1.bf16.xpose.msra.mxu0 0
        %2732 = vmatprep.subr.bf16.mxu0 0
        %2733 = vmatpush1.bf16.xpose.msra.mxu0 0
        %2734 = vmatprep.subr.bf16.mxu0 0
        %2735 = vmatpush1.bf16.xpose.msra.mxu0 0
        %2736 = vmatprep.subr.bf16.mxu0 0
        %2737 = vmatpush1.bf16.xpose.msra.mxu0 0
        %2738 = vmatprep.subr.bf16.mxu0 0
        %2739 = vmatpush1.bf16.xpose.msra.mxu0 0
        %2740 = vmatprep.subr.bf16.mxu0 0
        %2741 = vmatpush1.bf16.xpose.msra.mxu0 0
        %2742 = vmatprep.subr.bf16.mxu0 0
        %2743 = vmatpush1.bf16.xpose.msra.mxu0 0
        %2744 = vmatprep.subr.bf16.mxu0 0
        %2745 = vmatpush1.bf16.xpose.msra.mxu0 0
        %2746 = vmatprep.subr.bf16.mxu0 0
        %2747 = vmatpush1.bf16.xpose.msra.mxu0 0
        %2748 = vmatprep.subr.bf16.mxu0 0
        %2749 = vmatpush1.bf16.xpose.msra.mxu0 0
        %2750 = vmatprep.subr.bf16.mxu0 0
        %2751 = vmatpush1.bf16.xpose.msra.mxu0 0
        %2752 = vmatprep.mubr.bf16.mxu0 0
        %2753 = vmatmul.mubr.bf16.gmra.mrb[0].mxu0 %v2709
        %v2754 = vpop.f32.mrb[0].mxu0
        %v2755 = vadd.f32 0.0, %v2754
        %v2756 = vpop.f32.mrb[0].mxu0
        %v2757 = vpop.f32.mrb[0].mxu0
        %v2758 = vadd.f32 0.0, %v2757
        %v2759 = vpop.f32.mrb[0].mxu0
        %2760 = vmatprep.mubr.bf16.mxu0 0
        %2761 = vmatmul.mubr.bf16.gmra.mrb[0].mxu0 %v2712
        %v2762 = vpop.f32.mrb[0].mxu0
        %v2763 = vadd.f32 0.0, %v2762
        %v2764 = vpop.f32.mrb[0].mxu0
        %v2765 = vpop.f32.mrb[0].mxu0
        %v2766 = vpop.f32.mrb[0].mxu0
        %2767 = vdwg.mxu0
        %v2768 = vsel %vm1851, %v2755, -inf
        %2769 = vmax.xlane.f32.xlu0 %v2768
        %v2770 = vpop.xlane.xlu0 %2769
        %v2771 = vsel %vm1851, %v2758, -inf
        %2772 = vmax.xlane.f32.xlu0 %v2771
        %v2773 = vpop.xlane.xlu0 %2772
        %v2774 = vsel %vm1858, %v2763, -inf
        %2775 = vmax.xlane.f32.xlu0 %v2774
        %v2776 = vpop.xlane.xlu0 %2775
        %v2777 = vsub.f32 %v2755, %v2770
        %v2778 = vsub.f32 %v2758, %v2773
        %v2779 = vsub.f32 %v2763, %v2776
        %v2780 = vmul.f32 %v2777, 1.442695
        %v2781 = vpow.pop %v2780
        %v2782 = vmul.f32 %v2778, 1.442695
        %v2783 = vpow.pop %v2782
        %v2784 = vmul.f32 %v2779, 1.442695
        %v2785 = vpow.pop %v2784
        %v2786 = vsel %vm1851, %v2781, 0.0
        %2787 = vadd.xlane.f32.xlu0 %v2786
        %v2788 = vpop.xlane.xlu0 %2787
        %v2789 = vsel %vm1851, %v2783, 0.0
        %2790 = vadd.xlane.f32.xlu0 %v2789
        %v2791 = vpop.xlane.xlu0 %2790
        %v2792 = vsel %vm1858, %v2785, 0.0
        %2793 = vadd.xlane.f32.xlu0 %v2792
        %v2794 = vpop.xlane.xlu0 %2793
        %v2795 = vrcp.pop %v2788
        %v2796 = vrcp.pop %v2791
        %v2797 = vrcp.pop %v2794
        %v2798 = vmul.f32 %v2781, %v2795
        %v2799 = vmul.f32 %v2783, %v2796
        %v2800 = vmul.f32 %v2785, %v2797
        %v2801 = vpack.c.bf16 %v2799, %v2798
        %v2802 = vpack.c.bf16 %v2800, %v2800
        %2803 = vrot.lane.b32.xlu0 %v2636, 112
        %v2804 = vpop.permute.xlu0 %2803
        %2805 = vrot.lane.b32.xlu0 %v2637, 112
        %v2806 = vpop.permute.xlu0 %2805
        %v2809 = vsel %vm1851, %v2801, 0
        %v2812 = vsel %vm1851, %v2802, 0
        %v2815 = vand.u32 %v2806, %v1896
        %2817 = vmatprep.subr.bf16.mxu0 0
        %2818 = vmatpush1.bf16.msra.mxu0 %v2804
        %2819 = vmatprep.subr.bf16.mxu0 0
        %2820 = vmatpush1.bf16.msra.mxu0 %v2815
        %2821 = vmatprep.subr.bf16.mxu0 0
        %2822 = vmatpush1.bf16.msra.mxu0 0
        %2823 = vmatprep.subr.bf16.mxu0 0
        %2824 = vmatpush1.bf16.msra.mxu0 0
        %2825 = vmatprep.subr.bf16.mxu0 0
        %2826 = vmatpush1.bf16.msra.mxu0 0
        %2827 = vmatprep.subr.bf16.mxu0 0
        %2828 = vmatpush1.bf16.msra.mxu0 0
        %2829 = vmatprep.subr.bf16.mxu0 0
        %2830 = vmatpush1.bf16.msra.mxu0 0
        %2831 = vmatprep.subr.bf16.mxu0 0
        %2832 = vmatpush1.bf16.msra.mxu0 0
        %2833 = vmatprep.subr.bf16.mxu0 0
        %2834 = vmatpush1.bf16.msra.mxu0 0
        %2835 = vmatprep.subr.bf16.mxu0 0
        %2836 = vmatpush1.bf16.msra.mxu0 0
        %2837 = vmatprep.subr.bf16.mxu0 0
        %2838 = vmatpush1.bf16.msra.mxu0 0
        %2839 = vmatprep.subr.bf16.mxu0 0
        %2840 = vmatpush1.bf16.msra.mxu0 0
        %2841 = vmatprep.subr.bf16.mxu0 0
        %2842 = vmatpush1.bf16.msra.mxu0 0
        %2843 = vmatprep.subr.bf16.mxu0 0
        %2844 = vmatpush1.bf16.msra.mxu0 0
        %2845 = vmatprep.subr.bf16.mxu0 0
        %2846 = vmatpush1.bf16.msra.mxu0 0
        %2847 = vmatprep.subr.bf16.mxu0 0
        %2848 = vmatpush1.bf16.msra.mxu0 0
        %2849 = vmatprep.mubr.bf16.mxu0 0
        %2850 = vmatmul.mubr.bf16.gmra.mrb[0].mxu0 %v2809
        %v2851 = vpop.f32.mrb[0].mxu0
        %v2852 = vadd.f32 0.0, %v2851
        %v2853 = vpop.f32.mrb[0].mxu0
        %v2854 = vpop.f32.mrb[0].mxu0
        %v2855 = vadd.f32 0.0, %v2854
        %v2856 = vpop.f32.mrb[0].mxu0
        %2857 = vmatprep.mubr.bf16.mxu0 0
        %2858 = vmatmul.mubr.bf16.gmra.mrb[0].mxu0 %v2812
        %v2859 = vpop.f32.mrb[0].mxu0
        %v2860 = vadd.f32 0.0, %v2859
        %v2861 = vpop.f32.mrb[0].mxu0
        %v2862 = vpop.f32.mrb[0].mxu0
        %v2863 = vpop.f32.mrb[0].mxu0
        %2864 = vdwg.mxu0
        %2868 = vrot.lane.b32.xlu0 %v2852, 16
        %v2869 = vpop.permute.xlu0 %2868
        %2870 = vrot.lane.b32.xlu0 %v2855, 16
        %v2871 = vpop.permute.xlu0 %2870
        %2872 = vrot.lane.b32.xlu0 %v2860, 16
        %v2873 = vpop.permute.xlu0 %2872
        %2877 = vst.msk [vmem:[#allocation3 + $0x11] sm:$0xff] %vm2135, %v2869
        %2878 = vst.msk [vmem:[#allocation3 + $0x19] sm:$0xff] %vm2135, %v2871
        %2879 = vst.msk [vmem:[#allocation3 + $0x21] sm:$0x1] %vm2138, %v2873
        %2880 = vrot.lane.b32.xlu0 %v2515, 96
        %v2881 = vpop.permute.xlu0 %2880
        %2882 = vrot.lane.b32.xlu0 %v2516, 96
        %v2883 = vpop.permute.xlu0 %2882
        %2884 = vrot.lane.b32.xlu0 %v2528, 96
        %v2885 = vpop.permute.xlu0 %2884
        %2886 = vrot.lane.b32.xlu0 %v2529, 96
        %v2887 = vpop.permute.xlu0 %2886
        %v2889 = vsel %vm1790, %v2881, 0
        %v2892 = vsel %vm1790, %v2883, 0
        %v2895 = vsel %vm1790, %v2885, 0
        %v2898 = vsel %vm1790, %v2887, 0
        %2900 = vmatprep.subr.bf16.mxu0 0
        %2901 = vmatpush1.bf16.xpose.msra.mxu0 %v2895
        %2902 = vmatprep.subr.bf16.mxu0 0
        %2903 = vmatpush1.bf16.xpose.msra.mxu0 %v2898
        %2904 = vmatprep.subr.bf16.mxu0 0
        %2905 = vmatpush1.bf16.xpose.msra.mxu0 0
        %2906 = vmatprep.subr.bf16.mxu0 0
        %2907 = vmatpush1.bf16.xpose.msra.mxu0 0
        %2908 = vmatprep.subr.bf16.mxu0 0
        %2909 = vmatpush1.bf16.xpose.msra.mxu0 0
        %2910 = vmatprep.subr.bf16.mxu0 0
        %2911 = vmatpush1.bf16.xpose.msra.mxu0 0
        %2912 = vmatprep.subr.bf16.mxu0 0
        %2913 = vmatpush1.bf16.xpose.msra.mxu0 0
        %2914 = vmatprep.subr.bf16.mxu0 0
        %2915 = vmatpush1.bf16.xpose.msra.mxu0 0
        %2916 = vmatprep.subr.bf16.mxu0 0
        %2917 = vmatpush1.bf16.xpose.msra.mxu0 0
        %2918 = vmatprep.subr.bf16.mxu0 0
        %2919 = vmatpush1.bf16.xpose.msra.mxu0 0
        %2920 = vmatprep.subr.bf16.mxu0 0
        %2921 = vmatpush1.bf16.xpose.msra.mxu0 0
        %2922 = vmatprep.subr.bf16.mxu0 0
        %2923 = vmatpush1.bf16.xpose.msra.mxu0 0
        %2924 = vmatprep.subr.bf16.mxu0 0
        %2925 = vmatpush1.bf16.xpose.msra.mxu0 0
        %2926 = vmatprep.subr.bf16.mxu0 0
        %2927 = vmatpush1.bf16.xpose.msra.mxu0 0
        %2928 = vmatprep.subr.bf16.mxu0 0
        %2929 = vmatpush1.bf16.xpose.msra.mxu0 0
        %2930 = vmatprep.subr.bf16.mxu0 0
        %2931 = vmatpush1.bf16.xpose.msra.mxu0 0
        %2932 = vmatprep.mubr.bf16.mxu0 0
        %2933 = vmatmul.mubr.bf16.gmra.mrb[0].mxu0 %v2889
        %v2934 = vpop.f32.mrb[0].mxu0
        %v2935 = vadd.f32 0.0, %v2934
        %v2936 = vpop.f32.mrb[0].mxu0
        %v2937 = vpop.f32.mrb[0].mxu0
        %v2938 = vadd.f32 0.0, %v2937
        %v2939 = vpop.f32.mrb[0].mxu0
        %2940 = vmatprep.mubr.bf16.mxu0 0
        %2941 = vmatmul.mubr.bf16.gmra.mrb[0].mxu0 %v2892
        %v2942 = vpop.f32.mrb[0].mxu0
        %v2943 = vadd.f32 0.0, %v2942
        %v2944 = vpop.f32.mrb[0].mxu0
        %v2945 = vpop.f32.mrb[0].mxu0
        %v2946 = vpop.f32.mrb[0].mxu0
        %2947 = vdwg.mxu0
        %v2948 = vsel %vm1851, %v2935, -inf
        %2949 = vmax.xlane.f32.xlu0 %v2948
        %v2950 = vpop.xlane.xlu0 %2949
        %v2951 = vsel %vm1851, %v2938, -inf
        %2952 = vmax.xlane.f32.xlu0 %v2951
        %v2953 = vpop.xlane.xlu0 %2952
        %v2954 = vsel %vm1858, %v2943, -inf
        %2955 = vmax.xlane.f32.xlu0 %v2954
        %v2956 = vpop.xlane.xlu0 %2955
        %v2957 = vsub.f32 %v2935, %v2950
        %v2958 = vsub.f32 %v2938, %v2953
        %v2959 = vsub.f32 %v2943, %v2956
        %v2960 = vmul.f32 %v2957, 1.442695
        %v2961 = vpow.pop %v2960
        %v2962 = vmul.f32 %v2958, 1.442695
        %v2963 = vpow.pop %v2962
        %v2964 = vmul.f32 %v2959, 1.442695
        %v2965 = vpow.pop %v2964
        %v2966 = vsel %vm1851, %v2961, 0.0
        %2967 = vadd.xlane.f32.xlu0 %v2966
        %v2968 = vpop.xlane.xlu0 %2967
        %v2969 = vsel %vm1851, %v2963, 0.0
        %2970 = vadd.xlane.f32.xlu0 %v2969
        %v2971 = vpop.xlane.xlu0 %2970
        %v2972 = vsel %vm1858, %v2965, 0.0
        %2973 = vadd.xlane.f32.xlu0 %v2972
        %v2974 = vpop.xlane.xlu0 %2973
        %v2975 = vrcp.pop %v2968
        %v2976 = vrcp.pop %v2971
        %v2977 = vrcp.pop %v2974
        %v2978 = vmul.f32 %v2961, %v2975
        %v2979 = vmul.f32 %v2963, %v2976
        %v2980 = vmul.f32 %v2965, %v2977
        %v2981 = vpack.c.bf16 %v2979, %v2978
        %v2982 = vpack.c.bf16 %v2980, %v2980
        %2983 = vrot.lane.b32.xlu0 %v2636, 96
        %v2984 = vpop.permute.xlu0 %2983
        %2985 = vrot.lane.b32.xlu0 %v2637, 96
        %v2986 = vpop.permute.xlu0 %2985
        %v2989 = vsel %vm1851, %v2981, 0
        %v2992 = vsel %vm1851, %v2982, 0
        %v2995 = vand.u32 %v2986, %v1896
        %2997 = vmatprep.subr.bf16.mxu0 0
        %2998 = vmatpush1.bf16.msra.mxu0 %v2984
        %2999 = vmatprep.subr.bf16.mxu0 0
        %3000 = vmatpush1.bf16.msra.mxu0 %v2995
        %3001 = vmatprep.subr.bf16.mxu0 0
        %3002 = vmatpush1.bf16.msra.mxu0 0
        %3003 = vmatprep.subr.bf16.mxu0 0
        %3004 = vmatpush1.bf16.msra.mxu0 0
        %3005 = vmatprep.subr.bf16.mxu0 0
        %3006 = vmatpush1.bf16.msra.mxu0 0
        %3007 = vmatprep.subr.bf16.mxu0 0
        %3008 = vmatpush1.bf16.msra.mxu0 0
        %3009 = vmatprep.subr.bf16.mxu0 0
        %3010 = vmatpush1.bf16.msra.mxu0 0
        %3011 = vmatprep.subr.bf16.mxu0 0
        %3012 = vmatpush1.bf16.msra.mxu0 0
        %3013 = vmatprep.subr.bf16.mxu0 0
        %3014 = vmatpush1.bf16.msra.mxu0 0
        %3015 = vmatprep.subr.bf16.mxu0 0
        %3016 = vmatpush1.bf16.msra.mxu0 0
        %3017 = vmatprep.subr.bf16.mxu0 0
        %3018 = vmatpush1.bf16.msra.mxu0 0
        %3019 = vmatprep.subr.bf16.mxu0 0
        %3020 = vmatpush1.bf16.msra.mxu0 0
        %3021 = vmatprep.subr.bf16.mxu0 0
        %3022 = vmatpush1.bf16.msra.mxu0 0
        %3023 = vmatprep.subr.bf16.mxu0 0
        %3024 = vmatpush1.bf16.msra.mxu0 0
        %3025 = vmatprep.subr.bf16.mxu0 0
        %3026 = vmatpush1.bf16.msra.mxu0 0
        %3027 = vmatprep.subr.bf16.mxu0 0
        %3028 = vmatpush1.bf16.msra.mxu0 0
        %3029 = vmatprep.mubr.bf16.mxu0 0
        %3030 = vmatmul.mubr.bf16.gmra.mrb[0].mxu0 %v2989
        %v3031 = vpop.f32.mrb[0].mxu0
        %v3032 = vadd.f32 0.0, %v3031
        %v3033 = vpop.f32.mrb[0].mxu0
        %v3034 = vpop.f32.mrb[0].mxu0
        %v3035 = vadd.f32 0.0, %v3034
        %v3036 = vpop.f32.mrb[0].mxu0
        %3037 = vmatprep.mubr.bf16.mxu0 0
        %3038 = vmatmul.mubr.bf16.gmra.mrb[0].mxu0 %v2992
        %v3039 = vpop.f32.mrb[0].mxu0
        %v3040 = vadd.f32 0.0, %v3039
        %v3041 = vpop.f32.mrb[0].mxu0
        %v3042 = vpop.f32.mrb[0].mxu0
        %v3043 = vpop.f32.mrb[0].mxu0
        %3044 = vdwg.mxu0
        %3048 = vrot.lane.b32.xlu0 %v3032, 32
        %v3049 = vpop.permute.xlu0 %3048
        %3050 = vrot.lane.b32.xlu0 %v3035, 32
        %v3051 = vpop.permute.xlu0 %3050
        %3052 = vrot.lane.b32.xlu0 %v3040, 32
        %v3053 = vpop.permute.xlu0 %3052
        %3057 = vst.msk [vmem:[#allocation3 + $0x11] sm:$0xff] %vm2317, %v3049
        %3058 = vst.msk [vmem:[#allocation3 + $0x19] sm:$0xff] %vm2317, %v3051
        %3059 = vst.msk [vmem:[#allocation3 + $0x21] sm:$0x1] %vm2320, %v3053
        %3060 = vrot.lane.b32.xlu0 %v2515, 80
        %v3061 = vpop.permute.xlu0 %3060
        %3062 = vrot.lane.b32.xlu0 %v2516, 80
        %v3063 = vpop.permute.xlu0 %3062
        %3064 = vrot.lane.b32.xlu0 %v2528, 80
        %v3065 = vpop.permute.xlu0 %3064
        %3066 = vrot.lane.b32.xlu0 %v2529, 80
        %v3067 = vpop.permute.xlu0 %3066
        %v3069 = vsel %vm1790, %v3061, 0
        %v3072 = vsel %vm1790, %v3063, 0
        %v3075 = vsel %vm1790, %v3065, 0
        %v3078 = vsel %vm1790, %v3067, 0
        %3080 = vmatprep.subr.bf16.mxu0 0
        %3081 = vmatpush1.bf16.xpose.msra.mxu0 %v3075
        %3082 = vmatprep.subr.bf16.mxu0 0
        %3083 = vmatpush1.bf16.xpose.msra.mxu0 %v3078
        %3084 = vmatprep.subr.bf16.mxu0 0
        %3085 = vmatpush1.bf16.xpose.msra.mxu0 0
        %3086 = vmatprep.subr.bf16.mxu0 0
        %3087 = vmatpush1.bf16.xpose.msra.mxu0 0
        %3088 = vmatprep.subr.bf16.mxu0 0
        %3089 = vmatpush1.bf16.xpose.msra.mxu0 0
        %3090 = vmatprep.subr.bf16.mxu0 0
        %3091 = vmatpush1.bf16.xpose.msra.mxu0 0
        %3092 = vmatprep.subr.bf16.mxu0 0
        %3093 = vmatpush1.bf16.xpose.msra.mxu0 0
        %3094 = vmatprep.subr.bf16.mxu0 0
        %3095 = vmatpush1.bf16.xpose.msra.mxu0 0
        %3096 = vmatprep.subr.bf16.mxu0 0
        %3097 = vmatpush1.bf16.xpose.msra.mxu0 0
        %3098 = vmatprep.subr.bf16.mxu0 0
        %3099 = vmatpush1.bf16.xpose.msra.mxu0 0
        %3100 = vmatprep.subr.bf16.mxu0 0
        %3101 = vmatpush1.bf16.xpose.msra.mxu0 0
        %3102 = vmatprep.subr.bf16.mxu0 0
        %3103 = vmatpush1.bf16.xpose.msra.mxu0 0
        %3104 = vmatprep.subr.bf16.mxu0 0
        %3105 = vmatpush1.bf16.xpose.msra.mxu0 0
        %3106 = vmatprep.subr.bf16.mxu0 0
        %3107 = vmatpush1.bf16.xpose.msra.mxu0 0
        %3108 = vmatprep.subr.bf16.mxu0 0
        %3109 = vmatpush1.bf16.xpose.msra.mxu0 0
        %3110 = vmatprep.subr.bf16.mxu0 0
        %3111 = vmatpush1.bf16.xpose.msra.mxu0 0
        %3112 = vmatprep.mubr.bf16.mxu0 0
        %3113 = vmatmul.mubr.bf16.gmra.mrb[0].mxu0 %v3069
        %v3114 = vpop.f32.mrb[0].mxu0
        %v3115 = vadd.f32 0.0, %v3114
        %v3116 = vpop.f32.mrb[0].mxu0
        %v3117 = vpop.f32.mrb[0].mxu0
        %v3118 = vadd.f32 0.0, %v3117
        %v3119 = vpop.f32.mrb[0].mxu0
        %3120 = vmatprep.mubr.bf16.mxu0 0
        %3121 = vmatmul.mubr.bf16.gmra.mrb[0].mxu0 %v3072
        %v3122 = vpop.f32.mrb[0].mxu0
        %v3123 = vadd.f32 0.0, %v3122
        %v3124 = vpop.f32.mrb[0].mxu0
        %v3125 = vpop.f32.mrb[0].mxu0
        %v3126 = vpop.f32.mrb[0].mxu0
        %3127 = vdwg.mxu0
        %v3128 = vsel %vm1851, %v3115, -inf
        %3129 = vmax.xlane.f32.xlu0 %v3128
        %v3130 = vpop.xlane.xlu0 %3129
        %v3131 = vsel %vm1851, %v3118, -inf
        %3132 = vmax.xlane.f32.xlu0 %v3131
        %v3133 = vpop.xlane.xlu0 %3132
        %v3134 = vsel %vm1858, %v3123, -inf
        %3135 = vmax.xlane.f32.xlu0 %v3134
        %v3136 = vpop.xlane.xlu0 %3135
        %v3137 = vsub.f32 %v3115, %v3130
        %v3138 = vsub.f32 %v3118, %v3133
        %v3139 = vsub.f32 %v3123, %v3136
        %v3140 = vmul.f32 %v3137, 1.442695
        %v3141 = vpow.pop %v3140
        %v3142 = vmul.f32 %v3138, 1.442695
        %v3143 = vpow.pop %v3142
        %v3144 = vmul.f32 %v3139, 1.442695
        %v3145 = vpow.pop %v3144
        %v3146 = vsel %vm1851, %v3141, 0.0
        %3147 = vadd.xlane.f32.xlu0 %v3146
        %v3148 = vpop.xlane.xlu0 %3147
        %v3149 = vsel %vm1851, %v3143, 0.0
        %3150 = vadd.xlane.f32.xlu0 %v3149
        %v3151 = vpop.xlane.xlu0 %3150
        %v3152 = vsel %vm1858, %v3145, 0.0
        %3153 = vadd.xlane.f32.xlu0 %v3152
        %v3154 = vpop.xlane.xlu0 %3153
        %v3155 = vrcp.pop %v3148
        %v3156 = vrcp.pop %v3151
        %v3157 = vrcp.pop %v3154
        %v3158 = vmul.f32 %v3141, %v3155
        %v3159 = vmul.f32 %v3143, %v3156
        %v3160 = vmul.f32 %v3145, %v3157
        %v3161 = vpack.c.bf16 %v3159, %v3158
        %v3162 = vpack.c.bf16 %v3160, %v3160
        %3163 = vrot.lane.b32.xlu0 %v2636, 80
        %v3164 = vpop.permute.xlu0 %3163
        %3165 = vrot.lane.b32.xlu0 %v2637, 80
        %v3166 = vpop.permute.xlu0 %3165
        %v3169 = vsel %vm1851, %v3161, 0
        %v3172 = vsel %vm1851, %v3162, 0
        %v3175 = vand.u32 %v3166, %v1896
        %3177 = vmatprep.subr.bf16.mxu0 0
        %3178 = vmatpush1.bf16.msra.mxu0 %v3164
        %3179 = vmatprep.subr.bf16.mxu0 0
        %3180 = vmatpush1.bf16.msra.mxu0 %v3175
        %3181 = vmatprep.subr.bf16.mxu0 0
        %3182 = vmatpush1.bf16.msra.mxu0 0
        %3183 = vmatprep.subr.bf16.mxu0 0
        %3184 = vmatpush1.bf16.msra.mxu0 0
        %3185 = vmatprep.subr.bf16.mxu0 0
        %3186 = vmatpush1.bf16.msra.mxu0 0
        %3187 = vmatprep.subr.bf16.mxu0 0
        %3188 = vmatpush1.bf16.msra.mxu0 0
        %3189 = vmatprep.subr.bf16.mxu0 0
        %3190 = vmatpush1.bf16.msra.mxu0 0
        %3191 = vmatprep.subr.bf16.mxu0 0
        %3192 = vmatpush1.bf16.msra.mxu0 0
        %3193 = vmatprep.subr.bf16.mxu0 0
        %3194 = vmatpush1.bf16.msra.mxu0 0
        %3195 = vmatprep.subr.bf16.mxu0 0
        %3196 = vmatpush1.bf16.msra.mxu0 0
        %3197 = vmatprep.subr.bf16.mxu0 0
        %3198 = vmatpush1.bf16.msra.mxu0 0
        %3199 = vmatprep.subr.bf16.mxu0 0
        %3200 = vmatpush1.bf16.msra.mxu0 0
        %3201 = vmatprep.subr.bf16.mxu0 0
        %3202 = vmatpush1.bf16.msra.mxu0 0
        %3203 = vmatprep.subr.bf16.mxu0 0
        %3204 = vmatpush1.bf16.msra.mxu0 0
        %3205 = vmatprep.subr.bf16.mxu0 0
        %3206 = vmatpush1.bf16.msra.mxu0 0
        %3207 = vmatprep.subr.bf16.mxu0 0
        %3208 = vmatpush1.bf16.msra.mxu0 0
        %3209 = vmatprep.mubr.bf16.mxu0 0
        %3210 = vmatmul.mubr.bf16.gmra.mrb[0].mxu0 %v3169
        %v3211 = vpop.f32.mrb[0].mxu0
        %v3212 = vadd.f32 0.0, %v3211
        %v3213 = vpop.f32.mrb[0].mxu0
        %v3214 = vpop.f32.mrb[0].mxu0
        %v3215 = vadd.f32 0.0, %v3214
        %v3216 = vpop.f32.mrb[0].mxu0
        %3217 = vmatprep.mubr.bf16.mxu0 0
        %3218 = vmatmul.mubr.bf16.gmra.mrb[0].mxu0 %v3172
        %v3219 = vpop.f32.mrb[0].mxu0
        %v3220 = vadd.f32 0.0, %v3219
        %v3221 = vpop.f32.mrb[0].mxu0
        %v3222 = vpop.f32.mrb[0].mxu0
        %v3223 = vpop.f32.mrb[0].mxu0
        %3224 = vdwg.mxu0
        %3228 = vrot.lane.b32.xlu0 %v3212, 48
        %v3229 = vpop.permute.xlu0 %3228
        %3230 = vrot.lane.b32.xlu0 %v3215, 48
        %v3231 = vpop.permute.xlu0 %3230
        %3232 = vrot.lane.b32.xlu0 %v3220, 48
        %v3233 = vpop.permute.xlu0 %3232
        %3237 = vst.msk [vmem:[#allocation3 + $0x11] sm:$0xff] %vm2499, %v3229
        %3238 = vst.msk [vmem:[#allocation3 + $0x19] sm:$0xff] %vm2499, %v3231
        %3239 = vst.msk [vmem:[#allocation3 + $0x21] sm:$0x1] %vm2502, %v3233
        %v3240 = vld [vmem:[#allocation3] sm:$0xff]
        %v3241 = vld [vmem:[#allocation3 + $0x8] sm:$0xff]
        %v3242 = vld [vmem:[#allocation3 + $0x10] sm:$0xff]
        %v3243 = vld [vmem:[#allocation3 + $0x18] sm:$0xff]
        %v3244 = vld [vmem:[#allocation3 + $0x20] sm:$0x3]
        %v3245 = vpack.c.bf16 %v3241, %v3240
        %v3246 = vpack.c.bf16 %v3243, %v3242
        %v3247 = vpack.c.bf16 %v3244, %v3244
        %v3248 = vld [vmem:[%s1144] sm:$0xf]
        %v3249 = vld [vmem:[%s1144 + $0x4] sm:$0xf]
        %v3250 = vld [vmem:[%s1144 + $0x8] sm:$0xf]
        %v3251 = vld [vmem:[%s1144 + $0xc] sm:$0xf]
        %v3252 = vld [vmem:[%s1144 + $0x10] sm:$0xf]
        %v3253 = vld [vmem:[%s1144 + $0x14] sm:$0xf]
        %v3254 = vld [vmem:[%s1144 + $0x18] sm:$0xf]
        %v3255 = vld [vmem:[%s1144 + $0x1c] sm:$0xf]
        %v3264 = vunpack.c.l.b16 %v3248
        %v3265 = vunpack.c.l.b16 %v3249
        %v3266 = vunpack.c.l.b16 %v3250
        %v3267 = vunpack.c.l.b16 %v3251
        %v3268 = vunpack.c.l.b16 %v3252
        %v3269 = vunpack.c.l.b16 %v3253
        %v3270 = vunpack.c.l.b16 %v3254
        %v3271 = vunpack.c.l.b16 %v3255
        %v3272 = vpack.c.b16 %v3265, %v3264
        %v3273 = vpack.c.b16 %v3267, %v3266
        %v3274 = vpack.c.b16 %v3269, %v3268
        %v3275 = vpack.c.b16 %v3271, %v3270
        %v3281 = vsel %vm1389, %v3245, 0
        %v3284 = vsel %vm1389, %v3246, 0
        %v3287 = vsel %vm1389, %v3247, 0
        %3289 = vmatprep.subr.bf16.mxu0 0
        %3290 = vmatpush1.bf16.msra.mxu0 %v3272
        %3291 = vmatprep.subr.bf16.mxu0 0
        %3292 = vmatpush1.bf16.msra.mxu0 %v3273
        %3293 = vmatprep.subr.bf16.mxu0 0
        %3294 = vmatpush1.bf16.msra.mxu0 %v3274
        %3295 = vmatprep.subr.bf16.mxu0 0
        %3296 = vmatpush1.bf16.msra.mxu0 %v3275
        %3297 = vmatprep.subr.bf16.mxu0 0
        %3298 = vmatpush1.bf16.msra.mxu0 0
        %3299 = vmatprep.subr.bf16.mxu0 0
        %3300 = vmatpush1.bf16.msra.mxu0 0
        %3301 = vmatprep.subr.bf16.mxu0 0
        %3302 = vmatpush1.bf16.msra.mxu0 0
        %3303 = vmatprep.subr.bf16.mxu0 0
        %3304 = vmatpush1.bf16.msra.mxu0 0
        %3305 = vmatprep.subr.bf16.mxu0 0
        %3306 = vmatpush1.bf16.msra.mxu0 0
        %3307 = vmatprep.subr.bf16.mxu0 0
        %3308 = vmatpush1.bf16.msra.mxu0 0
        %3309 = vmatprep.subr.bf16.mxu0 0
        %3310 = vmatpush1.bf16.msra.mxu0 0
        %3311 = vmatprep.subr.bf16.mxu0 0
        %3312 = vmatpush1.bf16.msra.mxu0 0
        %3313 = vmatprep.subr.bf16.mxu0 0
        %3314 = vmatpush1.bf16.msra.mxu0 0
        %3315 = vmatprep.subr.bf16.mxu0 0
        %3316 = vmatpush1.bf16.msra.mxu0 0
        %3317 = vmatprep.subr.bf16.mxu0 0
        %3318 = vmatpush1.bf16.msra.mxu0 0
        %3319 = vmatprep.subr.bf16.mxu0 0
        %3320 = vmatpush1.bf16.msra.mxu0 0
        %3321 = vmatprep.mubr.bf16.mxu0 0
        %3322 = vmatmul.mubr.bf16.gmra.mrb[0].mxu0 %v3281
        %v3323 = vpop.f32.mrb[0].mxu0
        %v3324 = vadd.f32 0.0, %v3323
        %v3325 = vpop.f32.mrb[0].mxu0
        %v3326 = vpop.f32.mrb[0].mxu0
        %v3327 = vadd.f32 0.0, %v3326
        %v3328 = vpop.f32.mrb[0].mxu0
        %3329 = vmatprep.mubr.bf16.mxu0 0
        %3330 = vmatmul.mubr.bf16.gmra.mrb[0].mxu0 %v3284
        %v3331 = vpop.f32.mrb[0].mxu0
        %v3332 = vadd.f32 0.0, %v3331
        %v3333 = vpop.f32.mrb[0].mxu0
        %v3334 = vpop.f32.mrb[0].mxu0
        %v3335 = vadd.f32 0.0, %v3334
        %v3336 = vpop.f32.mrb[0].mxu0
        %3337 = vmatprep.mubr.bf16.mxu0 0
        %3338 = vmatmul.mubr.bf16.gmra.mrb[0].mxu0 %v3287
        %v3339 = vpop.f32.mrb[0].mxu0
        %v3340 = vadd.f32 0.0, %v3339
        %v3341 = vpop.f32.mrb[0].mxu0
        %v3342 = vpop.f32.mrb[0].mxu0
        %v3343 = vpop.f32.mrb[0].mxu0
        %3344 = vdwg.mxu0
        %v3345 = vadd.f32 %v1382, %v3324
        %v3346 = vadd.f32 %v1383, %v3327
        %v3347 = vadd.f32 %v1384, %v3332
        %v3348 = vadd.f32 %v1385, %v3335
        %v3349 = vadd.f32 %v1386, %v3340
        %v3350 = vld [vmem:[%s1147] sm:$0x1]
        %v3352 = vlaneseq
        %v3353 = vshrl.u32 %v3352, 7
        %v3354 = vsub.s32 0, %v3353
        %v3355 = vrot.slane %v3350, %v3354
        %v3357 = vadd.f32 %v3345, %v3355
        %v3358 = vadd.f32 %v3346, %v3355
        %v3359 = vadd.f32 %v3347, %v3355
        %v3360 = vadd.f32 %v3348, %v3355
        %v3361 = vadd.f32 %v3349, %v3355
        %v3362 = vld [vmem:[%s1150] sm:$0x1]
        %v3363 = vld [vmem:[%s1153] sm:$0x1]
        %v3364 = vsel %vm1389, %v3357, 0.0
        %3365 = vadd.xlane.f32.xlu0 %v3364
        %v3366 = vpop.xlane.xlu0 %3365
        %v3367 = vsel %vm1389, %v3358, 0.0
        %3368 = vadd.xlane.f32.xlu0 %v3367
        %v3369 = vpop.xlane.xlu0 %3368
        %v3370 = vsel %vm1389, %v3359, 0.0
        %3371 = vadd.xlane.f32.xlu0 %v3370
        %v3372 = vpop.xlane.xlu0 %3371
        %v3373 = vsel %vm1389, %v3360, 0.0
        %3374 = vadd.xlane.f32.xlu0 %v3373
        %v3375 = vpop.xlane.xlu0 %3374
        %v3376 = vsel %vm1402, %v3361, 0.0
        %3377 = vadd.xlane.f32.xlu0 %v3376
        %v3378 = vpop.xlane.xlu0 %3377
        %v3379 = vmul.f32 %v3366, %v1406
        %v3380 = vmul.f32 %v3369, %v1406
        %v3381 = vmul.f32 %v3372, %v1406
        %v3382 = vmul.f32 %v3375, %v1406
        %v3383 = vmul.f32 %v3378, %v1406
        %v3384 = vsub.f32 %v3357, %v3379
        %v3385 = vsub.f32 %v3358, %v3380
        %v3386 = vsub.f32 %v3359, %v3381
        %v3387 = vsub.f32 %v3360, %v3382
        %v3388 = vsub.f32 %v3361, %v3383
        %v3389 = vmul.f32 %v3384, %v3384
        %v3390 = vmul.f32 %v3385, %v3385
        %v3391 = vmul.f32 %v3386, %v3386
        %v3392 = vmul.f32 %v3387, %v3387
        %v3393 = vmul.f32 %v3388, %v3388
        %v3394 = vsel %vm1389, %v3389, 0.0
        %3395 = vadd.xlane.f32.xlu0 %v3394
        %v3396 = vpop.xlane.xlu0 %3395
        %v3397 = vsel %vm1389, %v3390, 0.0
        %3398 = vadd.xlane.f32.xlu0 %v3397
        %v3399 = vpop.xlane.xlu0 %3398
        %v3400 = vsel %vm1389, %v3391, 0.0
        %3401 = vadd.xlane.f32.xlu0 %v3400
        %v3402 = vpop.xlane.xlu0 %3401
        %v3403 = vsel %vm1389, %v3392, 0.0
        %3404 = vadd.xlane.f32.xlu0 %v3403
        %v3405 = vpop.xlane.xlu0 %3404
        %v3406 = vsel %vm1402, %v3393, 0.0
        %3407 = vadd.xlane.f32.xlu0 %v3406
        %v3408 = vpop.xlane.xlu0 %3407
        %v3409 = vmul.f32 %v3396, %v1406
        %v3410 = vmul.f32 %v3399, %v1406
        %v3411 = vmul.f32 %v3402, %v1406
        %v3412 = vmul.f32 %v3405, %v1406
        %v3413 = vmul.f32 %v3408, %v1406
        %v3414 = vadd.f32 %v3409, 1e-05
        %v3415 = vadd.f32 %v3410, 1e-05
        %v3416 = vadd.f32 %v3411, 1e-05
        %v3417 = vadd.f32 %v3412, 1e-05
        %v3418 = vadd.f32 %v3413, 1e-05
        %v3419 = vrsqrt.pop %v3414
        %v3420 = vrsqrt.pop %v3415
        %v3421 = vrsqrt.pop %v3416
        %v3422 = vrsqrt.pop %v3417
        %v3423 = vrsqrt.pop %v3418
        %v3424 = vmul.f32 %v3384, %v3419
        %v3425 = vmul.f32 %v3385, %v3420
        %v3426 = vmul.f32 %v3386, %v3421
        %v3427 = vmul.f32 %v3387, %v3422
        %v3428 = vmul.f32 %v3388, %v3423
        %v3430 = vlaneseq
        %v3431 = vshrl.u32 %v3430, 7
        %v3432 = vsub.s32 0, %v3431
        %v3433 = vrot.slane %v3362, %v3432
        %v3435 = vmul.f32 %v3424, %v3433
        %v3436 = vmul.f32 %v3425, %v3433
        %v3437 = vmul.f32 %v3426, %v3433
        %v3438 = vmul.f32 %v3427, %v3433
        %v3439 = vmul.f32 %v3428, %v3433
        %v3441 = vlaneseq
        %v3442 = vshrl.u32 %v3441, 7
        %v3443 = vsub.s32 0, %v3442
        %v3444 = vrot.slane %v3363, %v3443
        %v3446 = vadd.f32 %v3435, %v3444
        %v3447 = vadd.f32 %v3436, %v3444
        %v3448 = vadd.f32 %v3437, %v3444
        %v3449 = vadd.f32 %v3438, %v3444
        %v3450 = vadd.f32 %v3439, %v3444
        %v3451 = vpack.c.bf16 %v3447, %v3446
        %v3452 = vpack.c.bf16 %v3449, %v3448
        %v3453 = vpack.c.bf16 %v3450, %v3450
        %v3454 = vld [vmem:[%s1158] sm:$0xff]
        %v3455 = vld [vmem:[%s1158 + $0x8] sm:$0xff]
        %v3456 = vld [vmem:[%s1158 + $0x10] sm:$0xff]
        %v3457 = vld [vmem:[%s1158 + $0x18] sm:$0xff]
        %v3458 = vld [vmem:[%s1158 + $0x20] sm:$0xff]
        %v3459 = vld [vmem:[%s1158 + $0x28] sm:$0xff]
        %v3460 = vld [vmem:[%s1158 + $0x30] sm:$0xff]
        %v3461 = vld [vmem:[%s1158 + $0x38] sm:$0xff]
        %v3462 = vld [vmem:[%s1162] sm:$0x3]
        %v3464 = vlaneseq
        %v3465 = vshrl.u32 %v3464, 7
        %v3466 = vsub.s32 0, %v3465
        %v3467 = vrot.slane %v3462, %v3466
        %v3468 = vlaneseq
        %v3469 = vshrl.u32 %v3468, 7
        %v3470 = vsub.s32 1, %v3469
        %v3471 = vrot.slane %v3462, %v3470
        %v3482 = vunpack.c.l.b16 %v3454
        %v3483 = vunpack.c.h.b16 %v3454
        %v3484 = vunpack.c.l.b16 %v3455
        %v3485 = vunpack.c.h.b16 %v3455
        %v3486 = vunpack.c.l.b16 %v3456
        %v3487 = vunpack.c.h.b16 %v3456
        %v3488 = vunpack.c.l.b16 %v3457
        %v3489 = vunpack.c.h.b16 %v3457
        %v3490 = vunpack.c.l.b16 %v3458
        %v3491 = vunpack.c.h.b16 %v3458
        %v3492 = vunpack.c.l.b16 %v3459
        %v3493 = vunpack.c.h.b16 %v3459
        %v3494 = vunpack.c.l.b16 %v3460
        %v3495 = vunpack.c.h.b16 %v3460
        %v3496 = vunpack.c.l.b16 %v3461
        %v3497 = vunpack.c.h.b16 %v3461
        %v3498 = vpack.c.b16 %v3484, %v3482
        %v3499 = vpack.c.b16 %v3485, %v3483
        %v3500 = vpack.c.b16 %v3488, %v3486
        %v3501 = vpack.c.b16 %v3489, %v3487
        %v3502 = vpack.c.b16 %v3492, %v3490
        %v3503 = vpack.c.b16 %v3493, %v3491
        %v3504 = vpack.c.b16 %v3496, %v3494
        %v3505 = vpack.c.b16 %v3497, %v3495
        %v3515 = vsel %vm1389, %v3451, 0
        %v3518 = vsel %vm1389, %v3452, 0
        %v3521 = vsel %vm1389, %v3453, 0
        %3523 = vmatprep.subr.bf16.mxu0 %v3499
        %3524 = vmatpush1.bf16.msra.mxu0 %v3498
        %3525 = vmatprep.subr.bf16.mxu0 %v3501
        %3526 = vmatpush1.bf16.msra.mxu0 %v3500
        %3527 = vmatprep.subr.bf16.mxu0 %v3503
        %3528 = vmatpush1.bf16.msra.mxu0 %v3502
        %3529 = vmatprep.subr.bf16.mxu0 %v3505
        %3530 = vmatpush1.bf16.msra.mxu0 %v3504
        %3531 = vmatprep.subr.bf16.mxu0 0
        %3532 = vmatpush1.bf16.msra.mxu0 0
        %3533 = vmatprep.subr.bf16.mxu0 0
        %3534 = vmatpush1.bf16.msra.mxu0 0
        %3535 = vmatprep.subr.bf16.mxu0 0
        %3536 = vmatpush1.bf16.msra.mxu0 0
        %3537 = vmatprep.subr.bf16.mxu0 0
        %3538 = vmatpush1.bf16.msra.mxu0 0
        %3539 = vmatprep.subr.bf16.mxu0 0
        %3540 = vmatpush1.bf16.msra.mxu0 0
        %3541 = vmatprep.subr.bf16.mxu0 0
        %3542 = vmatpush1.bf16.msra.mxu0 0
        %3543 = vmatprep.subr.bf16.mxu0 0
        %3544 = vmatpush1.bf16.msra.mxu0 0
        %3545 = vmatprep.subr.bf16.mxu0 0
        %3546 = vmatpush1.bf16.msra.mxu0 0
        %3547 = vmatprep.subr.bf16.mxu0 0
        %3548 = vmatpush1.bf16.msra.mxu0 0
        %3549 = vmatprep.subr.bf16.mxu0 0
        %3550 = vmatpush1.bf16.msra.mxu0 0
        %3551 = vmatprep.subr.bf16.mxu0 0
        %3552 = vmatpush1.bf16.msra.mxu0 0
        %3553 = vmatprep.subr.bf16.mxu0 0
        %3554 = vmatpush1.bf16.msra.mxu0 0
        %3555 = vmatprep.mubr.bf16.mxu0 0
        %3556 = vmatmul.mubr.bf16.gmra.mrb[0].mxu0 %v3515
        %v3557 = vpop.f32.mrb[0].mxu0
        %v3558 = vadd.f32 %v3467, %v3557
        %v3559 = vpop.f32.mrb[0].mxu0
        %v3560 = vadd.f32 %v3471, %v3559
        %v3561 = vpop.f32.mrb[0].mxu0
        %v3562 = vadd.f32 %v3467, %v3561
        %v3563 = vpop.f32.mrb[0].mxu0
        %v3564 = vadd.f32 %v3471, %v3563
        %3565 = vmatprep.mubr.bf16.mxu0 0
        %3566 = vmatmul.mubr.bf16.gmra.mrb[0].mxu0 %v3518
        %v3567 = vpop.f32.mrb[0].mxu0
        %v3568 = vadd.f32 %v3467, %v3567
        %v3569 = vpop.f32.mrb[0].mxu0
        %v3570 = vadd.f32 %v3471, %v3569
        %v3571 = vpop.f32.mrb[0].mxu0
        %v3572 = vadd.f32 %v3467, %v3571
        %v3573 = vpop.f32.mrb[0].mxu0
        %v3574 = vadd.f32 %v3471, %v3573
        %3575 = vmatprep.mubr.bf16.mxu0 0
        %3576 = vmatmul.mubr.bf16.gmra.mrb[0].mxu0 %v3521
        %v3577 = vpop.f32.mrb[0].mxu0
        %v3578 = vadd.f32 %v3467, %v3577
        %v3579 = vpop.f32.mrb[0].mxu0
        %v3580 = vadd.f32 %v3471, %v3579
        %v3581 = vpop.f32.mrb[0].mxu0
        %v3582 = vpop.f32.mrb[0].mxu0
        %3583 = vdwg.mxu0
        %v3584 = vpack.c.bf16 %v3562, %v3558
        %v3585 = vpack.c.bf16 %v3564, %v3560
        %v3586 = vpack.c.bf16 %v3572, %v3568
        %v3587 = vpack.c.bf16 %v3574, %v3570
        %v3588 = vpack.c.bf16 %v3578, %v3578
        %v3589 = vpack.c.bf16 %v3580, %v3580
        %v3590 = vmul.bf16 %v3584, 1071267802
        %v3591 = vmul.bf16 %v3585, 1071267802
        %v3592 = vmul.bf16 %v3586, 1071267802
        %v3593 = vmul.bf16 %v3587, 1071267802
        %v3594 = vmul.bf16 %v3588, 1071267802
        %v3595 = vmul.bf16 %v3589, 1071267802
        %v3596 = vxor.u32 %v3590, 2147516416
        %v3597 = vxor.u32 %v3591, 2147516416
        %v3598 = vxor.u32 %v3592, 2147516416
        %v3599 = vxor.u32 %v3593, 2147516416
        %v3600 = vxor.u32 %v3594, 2147516416
        %v3601 = vxor.u32 %v3595, 2147516416
        %v3603 = vmul.bf16 %v3596, 1069105081
        %v3604 = vpow.bf16.pop %v3603
        %v3606 = vmul.bf16 %v3597, 1069105081
        %v3607 = vpow.bf16.pop %v3606
        %v3609 = vmul.bf16 %v3598, 1069105081
        %v3610 = vpow.bf16.pop %v3609
        %v3612 = vmul.bf16 %v3599, 1069105081
        %v3613 = vpow.bf16.pop %v3612
        %v3615 = vmul.bf16 %v3600, 1069105081
        %v3616 = vpow.bf16.pop %v3615
        %v3618 = vmul.bf16 %v3601, 1069105081
        %v3619 = vpow.bf16.pop %v3618
        %v3620 = vadd.bf16 %v3604, 1065369472
        %v3621 = vadd.bf16 %v3607, 1065369472
        %v3622 = vadd.bf16 %v3610, 1065369472
        %v3623 = vadd.bf16 %v3613, 1065369472
        %v3624 = vadd.bf16 %v3616, 1065369472
        %v3625 = vadd.bf16 %v3619, 1065369472
        %v3626 = vrcp.bf16.pop %v3620
        %v3627 = vmul.bf16 1065369472, %v3626
        %v3628 = vrcp.bf16.pop %v3621
        %v3629 = vmul.bf16 1065369472, %v3628
        %v3630 = vrcp.bf16.pop %v3622
        %v3631 = vmul.bf16 1065369472, %v3630
        %v3632 = vrcp.bf16.pop %v3623
        %v3633 = vmul.bf16 1065369472, %v3632
        %v3634 = vrcp.bf16.pop %v3624
        %v3635 = vmul.bf16 1065369472, %v3634
        %v3636 = vrcp.bf16.pop %v3625
        %v3637 = vmul.bf16 1065369472, %v3636
        %v3638 = vmul.bf16 %v3584, %v3627
        %v3639 = vmul.bf16 %v3585, %v3629
        %v3640 = vmul.bf16 %v3586, %v3631
        %v3641 = vmul.bf16 %v3587, %v3633
        %v3642 = vmul.bf16 %v3588, %v3635
        %v3643 = vmul.bf16 %v3589, %v3637
        %v3644 = vld [vmem:[%s1167] sm:$0xf]
        %v3645 = vld [vmem:[%s1167 + $0x4] sm:$0xf]
        %v3646 = vld [vmem:[%s1167 + $0x8] sm:$0xf]
        %v3647 = vld [vmem:[%s1167 + $0xc] sm:$0xf]
        %v3648 = vld [vmem:[%s1167 + $0x10] sm:$0xf]
        %v3649 = vld [vmem:[%s1167 + $0x14] sm:$0xf]
        %v3650 = vld [vmem:[%s1167 + $0x18] sm:$0xf]
        %v3651 = vld [vmem:[%s1167 + $0x1c] sm:$0xf]
        %v3652 = vld [vmem:[%s1167 + $0x20] sm:$0xf]
        %v3653 = vld [vmem:[%s1167 + $0x24] sm:$0xf]
        %v3654 = vld [vmem:[%s1167 + $0x28] sm:$0xf]
        %v3655 = vld [vmem:[%s1167 + $0x2c] sm:$0xf]
        %v3656 = vld [vmem:[%s1167 + $0x30] sm:$0xf]
        %v3657 = vld [vmem:[%s1167 + $0x34] sm:$0xf]
        %v3658 = vld [vmem:[%s1167 + $0x38] sm:$0xf]
        %v3659 = vld [vmem:[%s1167 + $0x3c] sm:$0xf]
        %v3660 = vld [vmem:[%s1167 + $0x40] sm:$0xf]
        %v3661 = vld [vmem:[%s1167 + $0x44] sm:$0xf]
        %v3662 = vld [vmem:[%s1167 + $0x48] sm:$0xf]
        %v3663 = vld [vmem:[%s1167 + $0x4c] sm:$0xf]
        %v3664 = vld [vmem:[%s1167 + $0x50] sm:$0xf]
        %v3665 = vld [vmem:[%s1167 + $0x54] sm:$0xf]
        %v3666 = vld [vmem:[%s1167 + $0x58] sm:$0xf]
        %v3667 = vld [vmem:[%s1167 + $0x5c] sm:$0xf]
        %v3668 = vld [vmem:[%s1167 + $0x60] sm:$0xf]
        %v3669 = vld [vmem:[%s1167 + $0x64] sm:$0xf]
        %v3670 = vld [vmem:[%s1167 + $0x68] sm:$0xf]
        %v3671 = vld [vmem:[%s1167 + $0x6c] sm:$0xf]
        %v3672 = vld [vmem:[%s1167 + $0x70] sm:$0xf]
        %v3673 = vld [vmem:[%s1167 + $0x74] sm:$0xf]
        %v3674 = vld [vmem:[%s1167 + $0x78] sm:$0xf]
        %v3675 = vld [vmem:[%s1167 + $0x7c] sm:$0xf]
        %v3708 = vunpack.c.l.b16 %v3644
        %v3709 = vunpack.c.l.b16 %v3645
        %v3710 = vunpack.c.l.b16 %v3646
        %v3711 = vunpack.c.l.b16 %v3647
        %v3712 = vunpack.c.l.b16 %v3648
        %v3713 = vunpack.c.l.b16 %v3649
        %v3714 = vunpack.c.l.b16 %v3650
        %v3715 = vunpack.c.l.b16 %v3651
        %v3716 = vunpack.c.l.b16 %v3652
        %v3717 = vunpack.c.l.b16 %v3653
        %v3718 = vunpack.c.l.b16 %v3654
        %v3719 = vunpack.c.l.b16 %v3655
        %v3720 = vunpack.c.l.b16 %v3656
        %v3721 = vunpack.c.l.b16 %v3657
        %v3722 = vunpack.c.l.b16 %v3658
        %v3723 = vunpack.c.l.b16 %v3659
        %v3724 = vunpack.c.l.b16 %v3660
        %v3725 = vunpack.c.l.b16 %v3661
        %v3726 = vunpack.c.l.b16 %v3662
        %v3727 = vunpack.c.l.b16 %v3663
        %v3728 = vunpack.c.l.b16 %v3664
        %v3729 = vunpack.c.l.b16 %v3665
        %v3730 = vunpack.c.l.b16 %v3666
        %v3731 = vunpack.c.l.b16 %v3667
        %v3732 = vunpack.c.l.b16 %v3668
        %v3733 = vunpack.c.l.b16 %v3669
        %v3734 = vunpack.c.l.b16 %v3670
        %v3735 = vunpack.c.l.b16 %v3671
        %v3736 = vunpack.c.l.b16 %v3672
        %v3737 = vunpack.c.l.b16 %v3673
        %v3738 = vunpack.c.l.b16 %v3674
        %v3739 = vunpack.c.l.b16 %v3675
        %v3740 = vpack.c.b16 %v3709, %v3708
        %v3741 = vpack.c.b16 %v3711, %v3710
        %v3742 = vpack.c.b16 %v3713, %v3712
        %v3743 = vpack.c.b16 %v3715, %v3714
        %v3744 = vpack.c.b16 %v3717, %v3716
        %v3745 = vpack.c.b16 %v3719, %v3718
        %v3746 = vpack.c.b16 %v3721, %v3720
        %v3747 = vpack.c.b16 %v3723, %v3722
        %v3748 = vpack.c.b16 %v3725, %v3724
        %v3749 = vpack.c.b16 %v3727, %v3726
        %v3750 = vpack.c.b16 %v3729, %v3728
        %v3751 = vpack.c.b16 %v3731, %v3730
        %v3752 = vpack.c.b16 %v3733, %v3732
        %v3753 = vpack.c.b16 %v3735, %v3734
        %v3754 = vpack.c.b16 %v3737, %v3736
        %v3755 = vpack.c.b16 %v3739, %v3738
        %3772 = vmatprep.subr.bf16.mxu0 0
        %3773 = vmatpush1.bf16.msra.mxu0 %v3740
        %3774 = vmatprep.subr.bf16.mxu0 0
        %3775 = vmatpush1.bf16.msra.mxu0 %v3741
        %3776 = vmatprep.subr.bf16.mxu0 0
        %3777 = vmatpush1.bf16.msra.mxu0 %v3742
        %3778 = vmatprep.subr.bf16.mxu0 0
        %3779 = vmatpush1.bf16.msra.mxu0 %v3743
        %3780 = vmatprep.subr.bf16.mxu0 0
        %3781 = vmatpush1.bf16.msra.mxu0 %v3744
        %3782 = vmatprep.subr.bf16.mxu0 0
        %3783 = vmatpush1.bf16.msra.mxu0 %v3745
        %3784 = vmatprep.subr.bf16.mxu0 0
        %3785 = vmatpush1.bf16.msra.mxu0 %v3746
        %3786 = vmatprep.subr.bf16.mxu0 0
        %3787 = vmatpush1.bf16.msra.mxu0 %v3747
        %3788 = vmatprep.subr.bf16.mxu0 0
        %3789 = vmatpush1.bf16.msra.mxu0 %v3748
        %3790 = vmatprep.subr.bf16.mxu0 0
        %3791 = vmatpush1.bf16.msra.mxu0 %v3749
        %3792 = vmatprep.subr.bf16.mxu0 0
        %3793 = vmatpush1.bf16.msra.mxu0 %v3750
        %3794 = vmatprep.subr.bf16.mxu0 0
        %3795 = vmatpush1.bf16.msra.mxu0 %v3751
        %3796 = vmatprep.subr.bf16.mxu0 0
        %3797 = vmatpush1.bf16.msra.mxu0 %v3752
        %3798 = vmatprep.subr.bf16.mxu0 0
        %3799 = vmatpush1.bf16.msra.mxu0 %v3753
        %3800 = vmatprep.subr.bf16.mxu0 0
        %3801 = vmatpush1.bf16.msra.mxu0 %v3754
        %3802 = vmatprep.subr.bf16.mxu0 0
        %3803 = vmatpush1.bf16.msra.mxu0 %v3755
        %3804 = vmatprep.mubr.bf16.mxu0 %v3639
        %3805 = vmatmul.mubr.bf16.gmra.mrb[0].mxu0 %v3638
        %v3806 = vpop.f32.mrb[0].mxu0
        %v3807 = vadd.f32 0.0, %v3806
        %v3808 = vpop.f32.mrb[0].mxu0
        %v3809 = vpop.f32.mrb[0].mxu0
        %v3810 = vadd.f32 0.0, %v3809
        %v3811 = vpop.f32.mrb[0].mxu0
        %3812 = vmatprep.mubr.bf16.mxu0 %v3641
        %3813 = vmatmul.mubr.bf16.gmra.mrb[0].mxu0 %v3640
        %v3814 = vpop.f32.mrb[0].mxu0
        %v3815 = vadd.f32 0.0, %v3814
        %v3816 = vpop.f32.mrb[0].mxu0
        %v3817 = vpop.f32.mrb[0].mxu0
        %v3818 = vadd.f32 0.0, %v3817
        %v3819 = vpop.f32.mrb[0].mxu0
        %3820 = vmatprep.mubr.bf16.mxu0 %v3643
        %3821 = vmatmul.mubr.bf16.gmra.mrb[0].mxu0 %v3642
        %v3822 = vpop.f32.mrb[0].mxu0
        %v3823 = vadd.f32 0.0, %v3822
        %v3824 = vpop.f32.mrb[0].mxu0
        %v3825 = vpop.f32.mrb[0].mxu0
        %v3826 = vpop.f32.mrb[0].mxu0
        %3827 = vdwg.mxu0
        %v3828 = vadd.f32 %v3357, %v3807
        %v3829 = vadd.f32 %v3358, %v3810
        %v3830 = vadd.f32 %v3359, %v3815
        %v3831 = vadd.f32 %v3360, %v3818
        %v3832 = vadd.f32 %v3361, %v3823
        %v3833 = vld [vmem:[%s1170] sm:$0x1]
        %v3835 = vlaneseq
        %v3836 = vshrl.u32 %v3835, 7
        %v3837 = vsub.s32 0, %v3836
        %v3838 = vrot.slane %v3833, %v3837
        %v3840 = vadd.f32 %v3828, %v3838
        %v3841 = vadd.f32 %v3829, %v3838
        %v3842 = vadd.f32 %v3830, %v3838
        %v3843 = vadd.f32 %v3831, %v3838
        %v3844 = vadd.f32 %v3832, %v3838
        %3845 = vst.msk [vmem:[#allocation2] sm:$0xff] %vm1389, %v3840
        %3846 = vst.msk [vmem:[#allocation2 + $0x8] sm:$0xff] %vm1389, %v3841
        %3847 = vst.msk [vmem:[#allocation2 + $0x10] sm:$0xff] %vm1389, %v3842
        %3848 = vst.msk [vmem:[#allocation2 + $0x18] sm:$0xff] %vm1389, %v3843
        %3849 = vst.msk [vmem:[#allocation2 + $0x20] sm:$0x3] %vm1402, %v3844
        %p3850 = scmp.eq.s32.totalorder %s76, 1
        // Predicated region
        $region141: #{forward.1} parent=135 // pred_check
          %p3851 = pneg %p3850
        $region142: #{forward.1} parent=135 // pred_check_branch
          %3853 = sbr.rel (%p3851) target = $region144
        $region143: #{forward.1} parent=135 // pred_region
          %v3854 = vsel %vm1894, %v3840, %v3842
          %v3855 = vld [vmem:[%s45] sm:$0x1]
          %v3856 = vld [vmem:[%s47] sm:$0x1]
          %v3857 = vsel %vm1402, %v3854, 0.0
          %3858 = vadd.xlane.f32.xlu0 %v3857
          %v3859 = vpop.xlane.xlu0 %3858
          %v3860 = vmul.f32 %v3859, %v1406
          %v3861 = vsub.f32 %v3854, %v3860
          %v3862 = vmul.f32 %v3861, %v3861
          %v3863 = vsel %vm1402, %v3862, 0.0
          %3864 = vadd.xlane.f32.xlu0 %v3863
          %v3865 = vpop.xlane.xlu0 %3864
          %v3866 = vmul.f32 %v3865, %v1406
          %v3867 = vadd.f32 %v3866, 1e-05
          %v3868 = vrsqrt.pop %v3867
          %v3869 = vmul.f32 %v3861, %v3868
          %v3871 = vlaneseq
          %v3872 = vshrl.u32 %v3871, 7
          %v3873 = vsub.s32 0, %v3872
          %v3874 = vrot.slane %v3855, %v3873
          %v3876 = vmul.f32 %v3869, %v3874
          %v3878 = vlaneseq
          %v3879 = vshrl.u32 %v3878, 7
          %v3880 = vsub.s32 0, %v3879
          %v3881 = vrot.slane %v3856, %v3880
          %v3883 = vadd.f32 %v3876, %v3881
          %v3884 = vpack.c.bf16 %v3883, %v3883
          %v3885 = vld [vmem:[%s49] sm:$0xf]
          %v3886 = vld [vmem:[%s49 + $0x4] sm:$0xf]
          %v3887 = vld [vmem:[%s49 + $0x8] sm:$0xf]
          %v3888 = vld [vmem:[%s49 + $0xc] sm:$0xf]
          %v3889 = vld [vmem:[%s49 + $0x10] sm:$0xf]
          %v3890 = vld [vmem:[%s49 + $0x14] sm:$0xf]
          %v3891 = vld [vmem:[%s49 + $0x18] sm:$0xf]
          %v3892 = vld [vmem:[%s49 + $0x1c] sm:$0xf]
          %v3901 = vunpack.c.l.b16 %v3885
          %v3902 = vunpack.c.l.b16 %v3886
          %v3903 = vunpack.c.l.b16 %v3887
          %v3904 = vunpack.c.l.b16 %v3888
          %v3905 = vunpack.c.l.b16 %v3889
          %v3906 = vunpack.c.l.b16 %v3890
          %v3907 = vunpack.c.l.b16 %v3891
          %v3908 = vunpack.c.l.b16 %v3892
          %v3909 = vpack.c.b16 %v3902, %v3901
          %v3910 = vpack.c.b16 %v3904, %v3903
          %v3911 = vpack.c.b16 %v3906, %v3905
          %v3912 = vpack.c.b16 %v3908, %v3907
          %v3918 = vsel %vm1389, %v3884, 0
          %3920 = vmatprep.subr.bf16.mxu0 0
          %3921 = vmatpush1.bf16.msra.mxu0 %v3909
          %3922 = vmatprep.subr.bf16.mxu0 0
          %3923 = vmatpush1.bf16.msra.mxu0 %v3910
          %3924 = vmatprep.subr.bf16.mxu0 0
          %3925 = vmatpush1.bf16.msra.mxu0 %v3911
          %3926 = vmatprep.subr.bf16.mxu0 0
          %3927 = vmatpush1.bf16.msra.mxu0 %v3912
          %3928 = vmatprep.subr.bf16.mxu0 0
          %3929 = vmatpush1.bf16.msra.mxu0 0
          %3930 = vmatprep.subr.bf16.mxu0 0
          %3931 = vmatpush1.bf16.msra.mxu0 0
          %3932 = vmatprep.subr.bf16.mxu0 0
          %3933 = vmatpush1.bf16.msra.mxu0 0
          %3934 = vmatprep.subr.bf16.mxu0 0
          %3935 = vmatpush1.bf16.msra.mxu0 0
          %3936 = vmatprep.subr.bf16.mxu0 0
          %3937 = vmatpush1.bf16.msra.mxu0 0
          %3938 = vmatprep.subr.bf16.mxu0 0
          %3939 = vmatpush1.bf16.msra.mxu0 0
          %3940 = vmatprep.subr.bf16.mxu0 0
          %3941 = vmatpush1.bf16.msra.mxu0 0
          %3942 = vmatprep.subr.bf16.mxu0 0
          %3943 = vmatpush1.bf16.msra.mxu0 0
          %3944 = vmatprep.subr.bf16.mxu0 0
          %3945 = vmatpush1.bf16.msra.mxu0 0
          %3946 = vmatprep.subr.bf16.mxu0 0
          %3947 = vmatpush1.bf16.msra.mxu0 0
          %3948 = vmatprep.subr.bf16.mxu0 0
          %3949 = vmatpush1.bf16.msra.mxu0 0
          %3950 = vmatprep.subr.bf16.mxu0 0
          %3951 = vmatpush1.bf16.msra.mxu0 0
          %3952 = vmatprep.mubr.bf16.mxu0 0
          %3953 = vmatmul.mubr.bf16.gmra.mrb[0].mxu0 %v3918
          %v3954 = vpop.f32.mrb[0].mxu0
          %v3955 = vadd.f32 0.0, %v3954
          %v3956 = vpop.f32.mrb[0].mxu0
          %v3957 = vpop.f32.mrb[0].mxu0
          %v3958 = vpop.f32.mrb[0].mxu0
          %3959 = vdwg.mxu0
          %v3960 = vld [vmem:[%s51] sm:$0xff]
          %v3961 = vld [vmem:[%s51 + $0x8] sm:$0xff]
          %v3962 = vld [vmem:[%s51 + $0x10] sm:$0xff]
          %v3963 = vld [vmem:[%s51 + $0x18] sm:$0xff]
          %v3964 = vld [vmem:[%s53] sm:$0x1]
          %v3966 = vlaneseq
          %v3967 = vshrl.u32 %v3966, 7
          %v3968 = vsub.s32 0, %v3967
          %v3969 = vrot.slane %v3964, %v3968
          %vm3971 = vcmask 261120
          %v3973 = vsel %vm3971, %v3955, 0
          %3975 = vmatprep.subr.mxu0 0.0
          %3976 = vmatpush1.msra.mxu0 %v3960
          %3977 = vmatprep.subr.mxu0 0.0
          %3978 = vmatpush1.msra.mxu0 %v3961
          %3979 = vmatprep.subr.mxu0 0.0
          %3980 = vmatpush1.msra.mxu0 %v3962
          %3981 = vmatprep.subr.mxu0 0.0
          %3982 = vmatpush1.msra.mxu0 %v3963
          %3983 = vmatprep.subr.mxu0 0.0
          %3984 = vmatpush1.msra.mxu0 0.0
          %3985 = vmatprep.subr.mxu0 0.0
          %3986 = vmatpush1.msra.mxu0 0.0
          %3987 = vmatprep.subr.mxu0 0.0
          %3988 = vmatpush1.msra.mxu0 0.0
          %3989 = vmatprep.subr.mxu0 0.0
          %3990 = vmatpush1.msra.mxu0 0.0
          %3991 = vmatprep.subr.mxu0 0.0
          %3992 = vmatpush1.msra.mxu0 0.0
          %3993 = vmatprep.subr.mxu0 0.0
          %3994 = vmatpush1.msra.mxu0 0.0
          %3995 = vmatprep.subr.mxu0 0.0
          %3996 = vmatpush1.msra.mxu0 0.0
          %3997 = vmatprep.subr.mxu0 0.0
          %3998 = vmatpush1.msra.mxu0 0.0
          %3999 = vmatprep.subr.mxu0 0.0
          %4000 = vmatpush1.msra.mxu0 0.0
          %4001 = vmatprep.subr.mxu0 0.0
          %4002 = vmatpush1.msra.mxu0 0.0
          %4003 = vmatprep.subr.mxu0 0.0
          %4004 = vmatpush1.msra.mxu0 0.0
          %4005 = vmatprep.subr.mxu0 0.0
          %4006 = vmatpush1.msra.mxu0 0.0
          %4007 = vmatprep.subr.mxu0 0.0
          %4008 = vmatpush1.msra.mxu0 0.0
          %4009 = vmatprep.subr.mxu0 0.0
          %4010 = vmatpush1.msra.mxu0 0.0
          %4011 = vmatprep.subr.mxu0 0.0
          %4012 = vmatpush1.msra.mxu0 0.0
          %4013 = vmatprep.subr.mxu0 0.0
          %4014 = vmatpush1.msra.mxu0 0.0
          %4015 = vmatprep.subr.mxu0 0.0
          %4016 = vmatpush1.msra.mxu0 0.0
          %4017 = vmatprep.subr.mxu0 0.0
          %4018 = vmatpush1.msra.mxu0 0.0
          %4019 = vmatprep.subr.mxu0 0.0
          %4020 = vmatpush1.msra.mxu0 0.0
          %4021 = vmatprep.subr.mxu0 0.0
          %4022 = vmatpush1.msra.mxu0 0.0
          %4023 = vmatprep.subr.mxu0 0.0
          %4024 = vmatpush1.msra.mxu0 0.0
          %4025 = vmatprep.subr.mxu0 0.0
          %4026 = vmatpush1.msra.mxu0 0.0
          %4027 = vmatprep.subr.mxu0 0.0
          %4028 = vmatpush1.msra.mxu0 0.0
          %4029 = vmatprep.subr.mxu0 0.0
          %4030 = vmatpush1.msra.mxu0 0.0
          %4031 = vmatprep.subr.mxu0 0.0
          %4032 = vmatpush1.msra.mxu0 0.0
          %4033 = vmatprep.subr.mxu0 0.0
          %4034 = vmatpush1.msra.mxu0 0.0
          %4035 = vmatprep.subr.mxu0 0.0
          %4036 = vmatpush1.msra.mxu0 0.0
          %4037 = vmatprep.subr.mxu0 0.0
          %4038 = vmatpush1.msra.mxu0 0.0
          %4039 = vmatprep.mubr.f32.mxu0 0.0
          %4040 = vmatmul.mubr.f32.gmra.mrb[0].mxu0 %v3973
          %v4041 = vpop.f32.mrb[0].mxu0
          %v4042 = vadd.f32 %v3969, %v4041
          %v4043 = vpop.f32.mrb[0].mxu0
          %4044 = vdwg.mxu0
          %v4045 = vmax.f32 %v4042, 0.0
          %v4046 = vld [vmem:[%s55] sm:$0xff]
          %v4047 = vld [vmem:[%s55 + $0x8] sm:$0xff]
          %v4048 = vld [vmem:[%s57] sm:$0x1]
          %v4050 = vlaneseq
          %v4051 = vshrl.u32 %v4050, 7
          %v4052 = vsub.s32 0, %v4051
          %v4053 = vrot.slane %v4048, %v4052
          %v4056 = vsel %vm1790, %v4045, 0
          %4058 = vmatprep.subr.mxu0 0.0
          %4059 = vmatpush1.msra.mxu0 %v4046
          %4060 = vmatprep.subr.mxu0 0.0
          %4061 = vmatpush1.msra.mxu0 %v4047
          %4062 = vmatprep.subr.mxu0 0.0
          %4063 = vmatpush1.msra.mxu0 0.0
          %4064 = vmatprep.subr.mxu0 0.0
          %4065 = vmatpush1.msra.mxu0 0.0
          %4066 = vmatprep.subr.mxu0 0.0
          %4067 = vmatpush1.msra.mxu0 0.0
          %4068 = vmatprep.subr.mxu0 0.0
          %4069 = vmatpush1.msra.mxu0 0.0
          %4070 = vmatprep.subr.mxu0 0.0
          %4071 = vmatpush1.msra.mxu0 0.0
          %4072 = vmatprep.subr.mxu0 0.0
          %4073 = vmatpush1.msra.mxu0 0.0
          %4074 = vmatprep.subr.mxu0 0.0
          %4075 = vmatpush1.msra.mxu0 0.0
          %4076 = vmatprep.subr.mxu0 0.0
          %4077 = vmatpush1.msra.mxu0 0.0
          %4078 = vmatprep.subr.mxu0 0.0
          %4079 = vmatpush1.msra.mxu0 0.0
          %4080 = vmatprep.subr.mxu0 0.0
          %4081 = vmatpush1.msra.mxu0 0.0
          %4082 = vmatprep.subr.mxu0 0.0
          %4083 = vmatpush1.msra.mxu0 0.0
          %4084 = vmatprep.subr.mxu0 0.0
          %4085 = vmatpush1.msra.mxu0 0.0
          %4086 = vmatprep.subr.mxu0 0.0
          %4087 = vmatpush1.msra.mxu0 0.0
          %4088 = vmatprep.subr.mxu0 0.0
          %4089 = vmatpush1.msra.mxu0 0.0
          %4090 = vmatprep.subr.mxu0 0.0
          %4091 = vmatpush1.msra.mxu0 0.0
          %4092 = vmatprep.subr.mxu0 0.0
          %4093 = vmatpush1.msra.mxu0 0.0
          %4094 = vmatprep.subr.mxu0 0.0
          %4095 = vmatpush1.msra.mxu0 0.0
          %4096 = vmatprep.subr.mxu0 0.0
          %4097 = vmatpush1.msra.mxu0 0.0
          %4098 = vmatprep.subr.mxu0 0.0
          %4099 = vmatpush1.msra.mxu0 0.0
          %4100 = vmatprep.subr.mxu0 0.0
          %4101 = vmatpush1.msra.mxu0 0.0
          %4102 = vmatprep.subr.mxu0 0.0
          %4103 = vmatpush1.msra.mxu0 0.0
          %4104 = vmatprep.subr.mxu0 0.0
          %4105 = vmatpush1.msra.mxu0 0.0
          %4106 = vmatprep.subr.mxu0 0.0
          %4107 = vmatpush1.msra.mxu0 0.0
          %4108 = vmatprep.subr.mxu0 0.0
          %4109 = vmatpush1.msra.mxu0 0.0
          %4110 = vmatprep.subr.mxu0 0.0
          %4111 = vmatpush1.msra.mxu0 0.0
          %4112 = vmatprep.subr.mxu0 0.0
          %4113 = vmatpush1.msra.mxu0 0.0
          %4114 = vmatprep.subr.mxu0 0.0
          %4115 = vmatpush1.msra.mxu0 0.0
          %4116 = vmatprep.subr.mxu0 0.0
          %4117 = vmatpush1.msra.mxu0 0.0
          %4118 = vmatprep.subr.mxu0 0.0
          %4119 = vmatpush1.msra.mxu0 0.0
          %4120 = vmatprep.subr.mxu0 0.0
          %4121 = vmatpush1.msra.mxu0 0.0
          %4122 = vmatprep.mubr.f32.mxu0 0.0
          %4123 = vmatmul.mubr.f32.gmra.mrb[0].mxu0 %v4056
          %v4124 = vpop.f32.mrb[0].mxu0
          %v4125 = vadd.f32 %v4053, %v4124
          %v4126 = vpop.f32.mrb[0].mxu0
          %4127 = vdwg.mxu0
          %4128 = vst [vmem:[#allocation4] sm:$0x3] %v4125
        $region144: #{forward.1} parent=135 // pred_fallthru
          _
        // Predicated region
        $region145: #{forward.1} parent=135 // pred_check
          %p4129 = pneg %p795
        $region146: #{forward.1} parent=135 // pred_check_branch
          %4131 = sbr.rel (%p4129) target = $region148
        $region147: #{forward.1} parent=135 // pred_region
          %s4133 = ssub.s32 32, 32
          %4134 = vsyncadd [#allocation5], %s4133
          %s4135 = smul.addr %s75, 32
          %s4136 = scalar_lea.hbm %s59, %s4135
          %s4138 = sshll.u32 [#allocation4], 4
          %s4139 = int_to_ptr.vmem [resolvable:$true] %s4138
          %4141 = dma.vmem_to_hbm [thread:$0]  %s4139, 32, %s4136, [#allocation5]
        $region148: #{forward.1} parent=135 // pred_fallthru
          _
        // Predicated region
        $region149: #{forward.1} parent=135 // pred_check
          %p4142 = pneg %p795
        $region150: #{forward.1} parent=135 // pred_check_branch
          %4144 = sbr.rel (%p4142) target = $region152
        $region151: #{forward.1} parent=135 // pred_region
          %4145 = dma.done [#allocation5], 32
        $region152: #{forward.1} parent=135 // pred_fallthru
          _
      $region136: #{forward.1} parent=5 // pred_fallthru
        _
      %p4146 = scmp.le.s32.totalorder 2, %s66
      // Predicated region
      $region153: #{forward.1} parent=5 // pred_check
        %p4147 = pneg %p4146
      $region154: #{forward.1} parent=5 // pred_check_branch
        %4149 = sbr.rel (%p4147) target = $region156
      $region155: #{forward.1} parent=5 // pred_region
        %s4150 = ssub.s32 %s66, 2
      $region156: #{forward.1} parent=5 // pred_fallthru
        _
    $region6: #{forward.1} parent=1 // loop_footer
      %s70 = sadd.s32 1, %s66
    $region7: #{forward.1} parent=1 // loop_footer_branch
      %65 = sbr.rel target = $region3
    $region8: #{forward.1} parent=1 // loop_exit
      _
    %4151 = vsyncpa [#allocation5], 1
    %s4152 = scalar_lea.sflag [#allocation5], 1
    %4153 = vsyncpa %s4152, 1

</llo_original>
